<compile_context>
chip_gen: v7x
topology: tpu7x:2x2x1
jax: 0.10.0
libtpu: 0.0.40
codegen_flags: <defaults>
</compile_context>

<pallas_src>
import jax
import jax.numpy as jnp
from jax.experimental import pallas as pl

# ----------------------------- configuration --------------------------------
N_RAYS = 128            # rays in the bundle (lane axis of the fused kernel)
N_PTS = 8               # samples per ray
NEAR, FAR = 0.1, 4.0
N_HARM = 4              # harmonic embedding frequencies
EMBED = 3 * 2 * N_HARM  # 24
HIDDEN = 32

_STEP = (FAR - NEAR) / (N_PTS - 1)
Z_VALS = [NEAR + i * _STEP for i in range(N_PTS)]                       # depths
DELTA_VALS = [Z_VALS[i + 1] - Z_VALS[i] for i in range(N_PTS - 1)] + [1e10]


# ----------------------- fused Pallas kernel (single call) -------------------
def nerf_fused_kernel(o25_ref,              # (EMBED+1, N) freq/phase-scaled origins
                      d25_ref,              # (EMBED+1, N) freq-scaled directions
                      w1e_ref,              # (H+1, EMBED+1)  w1^T | b1, + ones-selector row
                      w2e_ref,              # (H+1, H+1)      w2^T | b2, + ones-selector row
                      w3b_ref,              # (4, H+1)        [sigma;rgb] head, bias folded
                      out_ref):             # (4, N)          rows: r, g, b, depth
    o25 = o25_ref[...]
    d25 = d25_ref[...]
    w1e = w1e_ref[...]
    w2e = w2e_ref[...]
    w3b = w3b_ref[...]
    n = o25.shape[1]

    trans = jnp.ones((1, n), jnp.float32)       # exclusive transmittance
    color = jnp.zeros((3, n), jnp.float32)
    depth = jnp.zeros((1, n), jnp.float32)

    # Per depth-sample block (all N rays on the lane axis): sampler + harmonic
    # embedding (VPU fma + EUP sin), tiny MXU MLP, then EA compositing.
    # Static unroll, P = 8 blocks; peak live intermediates ~(33,128) = 5 vregs.
    for p in range(N_PTS):
        # ray points at depth Z_VALS[p], already expanded over (coord, freq,
        # sin/cos-phase); row EMBED has angle pi/2 -> sin == 1 (bias path).
        emb = jnp.sin(o25 + Z_VALS[p] * d25)                              # (25, N)
        h1 = jnp.maximum(
            jnp.dot(w1e, emb, preferred_element_type=jnp.float32), 0.0)   # (33, N)
        h2 = jnp.maximum(
            jnp.dot(w2e, h1, preferred_element_type=jnp.float32), 0.0)    # (33, N)
        raw = jnp.dot(w3b, h2, preferred_element_type=jnp.float32)        # (4, N)
        sigma = jnp.maximum(raw[0:1, :], 0.0)                             # (1, N)
        rgb = jax.nn.sigmoid(raw[1:4, :])                                 # (3, N)

        # emission-absorption front-to-back recurrence (VPU + EUP exp)
        tau = sigma * DELTA_VALS[p]
        att = jnp.exp(-tau)
        w = trans * (1.0 - att)
        color = color + w * rgb
        depth = depth + w * Z_VALS[p]
        trans = trans * att

    out_ref[0:3, :] = color
    out_ref[3:4, :] = depth


# ------------------- one-time parameter packing (outside jit) ----------------
def pack_params(p):
    """Re-layout weights into the kernel's transposed, bias-folded form."""
    # layer 1: (H, EMBED) | bias column, plus a row that regenerates the 1
    w1e = jnp.concatenate([p["w1"].T, p["b1"].T], axis=1)                 # (H, 25)
    ones_row1 = jnp.zeros((1, EMBED + 1), jnp.float32).at[0, EMBED].set(1.0)
    w1e = jnp.concatenate([w1e, ones_row1], axis=0)                       # (33, 25)
    # layer 2
    w2e = jnp.concatenate([p["w2"].T, p["b2"].T], axis=1)                 # (H, 33)
    ones_row2 = jnp.zeros((1, HIDDEN + 1), jnp.float32).at[0, HIDDEN].set(1.0)
    w2e = jnp.concatenate([w2e, ones_row2], axis=0)                       # (33, 33)
    # merged sigma + rgb head
    w3b = jnp.concatenate([p["w3"].T, p["b3"][:, None]], axis=1)          # (4, 33)
    return {"w1e": w1e, "w2e": w2e, "w3b": w3b}


# ----------------------------- forward pass ----------------------------------
def nerf_forward(origins, dirs, kp):
    n = origins.shape[0]
    # Frequency/phase expansion of the rays in the kernel's transposed
    # lane-dense layout.  Feature order matches the reference harmonic
    # embedding: j = coord*2L + {sin:0, cos:1}*L + freq; cos is obtained in
    # the kernel as sin(angle + pi/2).  Row 24 is the bias/ones path.
    freqs = 2.0 ** jnp.arange(N_HARM, dtype=jnp.float32)                  # (L,)
    scale = jnp.tile(jnp.tile(freqs, 2), 3)[:, None]                      # (24, 1)
    phase = jnp.tile(
        jnp.concatenate([jnp.zeros((N_HARM,), jnp.float32),
                         jnp.full((N_HARM,), jnp.pi / 2, jnp.float32)]),
        3)[:, None]                                                       # (24, 1)
    o24 = jnp.repeat(origins.T, 2 * N_HARM, axis=0) * scale + phase       # (24, N)
    d24 = jnp.repeat(dirs.T, 2 * N_HARM, axis=0) * scale                  # (24, N)
    o25 = jnp.concatenate([o24, jnp.full((1, n), jnp.pi / 2, jnp.float32)], axis=0)
    d25 = jnp.concatenate([d24, jnp.zeros((1, n), jnp.float32)], axis=0)

    out = pl.pallas_call(
        nerf_fused_kernel,
        out_shape=jax.ShapeDtypeStruct((4, n), jnp.float32),
    )(o25, d25, kp["w1e"], kp["w2e"], kp["w3b"])

    color = out[0:3, :].T                 # (N, 3)
    depth = out[3:4, :].T                 # (N, 1)
    return color, depth


# ------------------------ pure-JAX reference (check) -------------------------
def harmonic_embed(pts_flat):
    freqs = 2.0 ** jnp.arange(N_HARM, dtype=jnp.float32)
    ang = pts_flat[:, :, None] * freqs[None, None, :]
    emb = jnp.concatenate([jnp.sin(ang), jnp.cos(ang)], axis=-1)
    return emb.reshape(pts_flat.shape[0], -1)


def ref_forward(origins, dirs, p):
    n = origins.shape[0]
    z = jnp.asarray(Z_VALS, jnp.float32)
    depths = jnp.broadcast_to(z, (n, N_PTS))
    deltas = jnp.broadcast_to(jnp.asarray(DELTA_VALS, jnp.float32), (n, N_PTS))
    pts = origins[:, None, :] + depths[..., None] * dirs[:, None, :]
    emb = harmonic_embed(pts.reshape(-1, 3))
    hp = jax.lax.Precision.HIGHEST
    h1 = jax.nn.relu(jnp.dot(emb, p["w1"], precision=hp) + p["b1"])
    h2 = jax.nn.relu(jnp.dot(h1, p["w2"], precision=hp) + p["b2"])
    raw = jnp.dot(h2, p["w3"], precision=hp) + p["b3"]
    sigma = jax.nn.relu(raw[:, 0].reshape(n, N_PTS))
    rgb = jax.nn.sigmoid(raw[:, 1:4].reshape(n, N_PTS, 3))
    tau = sigma * deltas
    excl = jnp.concatenate(
        [jnp.zeros((n, 1), jnp.float32), jnp.cumsum(tau, axis=1)[:, :-1]], axis=1)
    w = jnp.exp(-excl) * (1.0 - jnp.exp(-tau))
    color = jnp.sum(w[..., None] * rgb, axis=1)
    depth = jnp.sum(w * depths, axis=1, keepdims=True)
    return color, depth


# --------------------------------- main --------------------------------------
def init_params(seed=42):
    k = jax.random.split(jax.random.PRNGKey(seed), 6)
    w1 = jax.random.normal(k[0], (EMBED, HIDDEN), jnp.float32) / jnp.sqrt(EMBED)
    b1 = 0.01 * jax.random.normal(k[1], (1, HIDDEN), jnp.float32)
    w2 = jax.random.normal(k[2], (HIDDEN, HIDDEN), jnp.float32) / jnp.sqrt(HIDDEN)
    b2 = 0.01 * jax.random.normal(k[3], (1, HIDDEN), jnp.float32)
    w3 = jax.random.normal(k[4], (HIDDEN, 4), jnp.float32) / jnp.sqrt(HIDDEN)
    b3 = 0.01 * jax.random.normal(k[5], (4,), jnp.float32)
    return {"w1": w1, "b1": b1, "w2": w2, "b2": b2, "w3": w3, "b3": b3}


if __name__ == "__main__":
    key = jax.random.PRNGKey(0)
    ko, kd = jax.random.split(key)
    origins = 0.1 * jax.random.normal(ko, (N_RAYS, 3), jnp.float32)
    dirs = jax.random.normal(kd, (N_RAYS, 3), jnp.float32)
    dirs = dirs / jnp.linalg.norm(dirs, axis=-1, keepdims=True)

    params = init_params()
    packed = pack_params(params)          # one-time kernel-layout packing

    color, depth = jax.jit(nerf_forward)(origins, dirs, packed)
    color = jax.block_until_ready(color)
    depth = jax.block_until_ready(depth)

    ref_color, ref_depth = ref_forward(origins, dirs, params)
    assert color.shape == (N_RAYS, 3) and depth.shape == (N_RAYS, 1)
    assert jnp.allclose(color, ref_color, rtol=1e-2, atol=1e-2)
    assert jnp.allclose(depth, ref_depth, rtol=1e-2, atol=1e-2)

    print("KERNEL_OK")
</pallas_src>

<mosaic_0001>
module attributes {stable_mosaic.version = 11 : i64} {
  func.func @nerf_fused_kernel(%arg0: memref<25x128xf32, #tpu.memory_space<vmem>>, %arg1: memref<25x128xf32, #tpu.memory_space<vmem>>, %arg2: memref<33x25xf32, #tpu.memory_space<vmem>>, %arg3: memref<33x33xf32, #tpu.memory_space<vmem>>, %arg4: memref<4x33xf32, #tpu.memory_space<vmem>>, %arg5: memref<4x128xf32, #tpu.memory_space<vmem>>) attributes {dimension_semantics = [], scalar_prefetch = 0 : i64, scratch_operands = 0 : i64, tpu.core_type = #tpu.core_type<tc>} {
    %c0 = arith.constant 0 : index
    %c0_0 = arith.constant 0 : index
    %0 = vector.load %arg0[%c0, %c0_0] : memref<25x128xf32, #tpu.memory_space<vmem>>, vector<25x128xf32>
    %c0_1 = arith.constant 0 : index
    %c0_2 = arith.constant 0 : index
    %1 = vector.load %arg1[%c0_1, %c0_2] : memref<25x128xf32, #tpu.memory_space<vmem>>, vector<25x128xf32>
    %c0_3 = arith.constant 0 : index
    %c0_4 = arith.constant 0 : index
    %2 = vector.load %arg2[%c0_3, %c0_4] : memref<33x25xf32, #tpu.memory_space<vmem>>, vector<33x25xf32>
    %c0_5 = arith.constant 0 : index
    %c0_6 = arith.constant 0 : index
    %3 = vector.load %arg3[%c0_5, %c0_6] : memref<33x33xf32, #tpu.memory_space<vmem>>, vector<33x33xf32>
    %c0_7 = arith.constant 0 : index
    %c0_8 = arith.constant 0 : index
    %4 = vector.load %arg4[%c0_7, %c0_8] : memref<4x33xf32, #tpu.memory_space<vmem>>, vector<4x33xf32>
    %cst = arith.constant 1.000000e+00 : f32
    %5 = vector.broadcast %cst : f32 to vector<1x128xf32>
    %cst_9 = arith.constant 0.000000e+00 : f32
    %6 = vector.broadcast %cst_9 : f32 to vector<3x128xf32>
    %cst_10 = arith.constant 0.000000e+00 : f32
    %7 = vector.broadcast %cst_10 : f32 to vector<1x128xf32>
    %cst_11 = arith.constant 1.000000e-01 : f32
    %8 = vector.broadcast %cst_11 : f32 to vector<25x128xf32>
    %9 = arith.mulf %8, %1 : vector<25x128xf32>
    %10 = arith.addf %0, %9 : vector<25x128xf32>
    %11 = math.sin %10 : vector<25x128xf32>
    %cst_12 = arith.constant dense<0.000000e+00> : vector<33x128xf32>
    %12 = tpu.matmul %2, %11, %cst_12 {dimension_numbers = #tpu.dot_dimension_numbers<[1], [0], [0], [1], [0, 0, 1, 1], [], []>} : vector<33x25xf32>, vector<25x128xf32>, vector<33x128xf32> -> vector<33x128xf32>
    %cst_13 = arith.constant 0.000000e+00 : f32
    %13 = vector.broadcast %cst_13 : f32 to vector<33x128xf32>
    %14 = arith.maximumf %12, %13 : vector<33x128xf32>
    %cst_14 = arith.constant dense<0.000000e+00> : vector<33x128xf32>
    %15 = tpu.matmul %3, %14, %cst_14 {dimension_numbers = #tpu.dot_dimension_numbers<[1], [0], [0], [1], [0, 0, 1, 1], [], []>} : vector<33x33xf32>, vector<33x128xf32>, vector<33x128xf32> -> vector<33x128xf32>
    %cst_15 = arith.constant 0.000000e+00 : f32
    %16 = vector.broadcast %cst_15 : f32 to vector<33x128xf32>
    %17 = arith.maximumf %15, %16 : vector<33x128xf32>
    %cst_16 = arith.constant dense<0.000000e+00> : vector<4x128xf32>
    %18 = tpu.matmul %4, %17, %cst_16 {dimension_numbers = #tpu.dot_dimension_numbers<[1], [0], [0], [1], [0, 0, 1, 1], [], []>} : vector<4x33xf32>, vector<33x128xf32>, vector<4x128xf32> -> vector<4x128xf32>
    %19 = vector.extract_strided_slice %18 {offsets = [0, 0], sizes = [1, 128], strides = [1, 1]} : vector<4x128xf32> to vector<1x128xf32>
    %cst_17 = arith.constant 0.000000e+00 : f32
    %20 = vector.broadcast %cst_17 : f32 to vector<1x128xf32>
    %21 = arith.maximumf %19, %20 : vector<1x128xf32>
    %22 = vector.extract_strided_slice %18 {offsets = [1, 0], sizes = [3, 128], strides = [1, 1]} : vector<4x128xf32> to vector<3x128xf32>
    %23 = arith.negf %22 : vector<3x128xf32>
    %24 = math.exp %23 : vector<3x128xf32>
    %cst_18 = arith.constant 1.000000e+00 : f32
    %25 = vector.broadcast %cst_18 : f32 to vector<3x128xf32>
    %26 = arith.addf %25, %24 : vector<3x128xf32>
    %27 = arith.divf %25, %26 : vector<3x128xf32>
    %cst_19 = arith.constant 0.557142854 : f32
    %28 = vector.broadcast %cst_19 : f32 to vector<1x128xf32>
    %29 = arith.mulf %21, %28 : vector<1x128xf32>
    %cst_20 = arith.constant 0.000000e+00 : f32
    %30 = vector.broadcast %cst_20 : f32 to vector<1x128xf32>
    %31 = arith.subf %30, %29 : vector<1x128xf32>
    %32 = math.exp %31 : vector<1x128xf32>
    %cst_21 = arith.constant 1.000000e+00 : f32
    %33 = vector.broadcast %cst_21 : f32 to vector<1x128xf32>
    %34 = arith.subf %33, %32 : vector<1x128xf32>
    %35 = arith.mulf %5, %34 : vector<1x128xf32>
    %36 = vector.broadcast %35 : vector<1x128xf32> to vector<3x128xf32>
    %37 = arith.mulf %36, %27 : vector<3x128xf32>
    %38 = arith.addf %6, %37 : vector<3x128xf32>
    %cst_22 = arith.constant 1.000000e-01 : f32
    %39 = vector.broadcast %cst_22 : f32 to vector<1x128xf32>
    %40 = arith.mulf %35, %39 : vector<1x128xf32>
    %41 = arith.addf %7, %40 : vector<1x128xf32>
    %42 = arith.mulf %5, %32 : vector<1x128xf32>
    %cst_23 = arith.constant 0.657142878 : f32
    %43 = vector.broadcast %cst_23 : f32 to vector<25x128xf32>
    %44 = arith.mulf %43, %1 : vector<25x128xf32>
    %45 = arith.addf %0, %44 : vector<25x128xf32>
    %46 = math.sin %45 : vector<25x128xf32>
    %cst_24 = arith.constant dense<0.000000e+00> : vector<33x128xf32>
    %47 = tpu.matmul %2, %46, %cst_24 {dimension_numbers = #tpu.dot_dimension_numbers<[1], [0], [0], [1], [0, 0, 1, 1], [], []>} : vector<33x25xf32>, vector<25x128xf32>, vector<33x128xf32> -> vector<33x128xf32>
    %cst_25 = arith.constant 0.000000e+00 : f32
    %48 = vector.broadcast %cst_25 : f32 to vector<33x128xf32>
    %49 = arith.maximumf %47, %48 : vector<33x128xf32>
    %cst_26 = arith.constant dense<0.000000e+00> : vector<33x128xf32>
    %50 = tpu.matmul %3, %49, %cst_26 {dimension_numbers = #tpu.dot_dimension_numbers<[1], [0], [0], [1], [0, 0, 1, 1], [], []>} : vector<33x33xf32>, vector<33x128xf32>, vector<33x128xf32> -> vector<33x128xf32>
    %cst_27 = arith.constant 0.000000e+00 : f32
    %51 = vector.broadcast %cst_27 : f32 to vector<33x128xf32>
    %52 = arith.maximumf %50, %51 : vector<33x128xf32>
    %cst_28 = arith.constant dense<0.000000e+00> : vector<4x128xf32>
    %53 = tpu.matmul %4, %52, %cst_28 {dimension_numbers = #tpu.dot_dimension_numbers<[1], [0], [0], [1], [0, 0, 1, 1], [], []>} : vector<4x33xf32>, vector<33x128xf32>, vector<4x128xf32> -> vector<4x128xf32>
    %54 = vector.extract_strided_slice %53 {offsets = [0, 0], sizes = [1, 128], strides = [1, 1]} : vector<4x128xf32> to vector<1x128xf32>
    %cst_29 = arith.constant 0.000000e+00 : f32
    %55 = vector.broadcast %cst_29 : f32 to vector<1x128xf32>
    %56 = arith.maximumf %54, %55 : vector<1x128xf32>
    %57 = vector.extract_strided_slice %53 {offsets = [1, 0], sizes = [3, 128], strides = [1, 1]} : vector<4x128xf32> to vector<3x128xf32>
    %58 = arith.negf %57 : vector<3x128xf32>
    %59 = math.exp %58 : vector<3x128xf32>
    %cst_30 = arith.constant 1.000000e+00 : f32
    %60 = vector.broadcast %cst_30 : f32 to vector<3x128xf32>
    %61 = arith.addf %60, %59 : vector<3x128xf32>
    %62 = arith.divf %60, %61 : vector<3x128xf32>
    %cst_31 = arith.constant 0.557142854 : f32
    %63 = vector.broadcast %cst_31 : f32 to vector<1x128xf32>
    %64 = arith.mulf %56, %63 : vector<1x128xf32>
    %cst_32 = arith.constant 0.000000e+00 : f32
    %65 = vector.broadcast %cst_32 : f32 to vector<1x128xf32>
    %66 = arith.subf %65, %64 : vector<1x128xf32>
    %67 = math.exp %66 : vector<1x128xf32>
    %cst_33 = arith.constant 1.000000e+00 : f32
    %68 = vector.broadcast %cst_33 : f32 to vector<1x128xf32>
    %69 = arith.subf %68, %67 : vector<1x128xf32>
    %70 = arith.mulf %42, %69 : vector<1x128xf32>
    %71 = vector.broadcast %70 : vector<1x128xf32> to vector<3x128xf32>
    %72 = arith.mulf %71, %62 : vector<3x128xf32>
    %73 = arith.addf %38, %72 : vector<3x128xf32>
    %cst_34 = arith.constant 0.657142878 : f32
    %74 = vector.broadcast %cst_34 : f32 to vector<1x128xf32>
    %75 = arith.mulf %70, %74 : vector<1x128xf32>
    %76 = arith.addf %41, %75 : vector<1x128xf32>
    %77 = arith.mulf %42, %67 : vector<1x128xf32>
    %cst_35 = arith.constant 1.21428573 : f32
    %78 = vector.broadcast %cst_35 : f32 to vector<25x128xf32>
    %79 = arith.mulf %78, %1 : vector<25x128xf32>
    %80 = arith.addf %0, %79 : vector<25x128xf32>
    %81 = math.sin %80 : vector<25x128xf32>
    %cst_36 = arith.constant dense<0.000000e+00> : vector<33x128xf32>
    %82 = tpu.matmul %2, %81, %cst_36 {dimension_numbers = #tpu.dot_dimension_numbers<[1], [0], [0], [1], [0, 0, 1, 1], [], []>} : vector<33x25xf32>, vector<25x128xf32>, vector<33x128xf32> -> vector<33x128xf32>
    %cst_37 = arith.constant 0.000000e+00 : f32
    %83 = vector.broadcast %cst_37 : f32 to vector<33x128xf32>
    %84 = arith.maximumf %82, %83 : vector<33x128xf32>
    %cst_38 = arith.constant dense<0.000000e+00> : vector<33x128xf32>
    %85 = tpu.matmul %3, %84, %cst_38 {dimension_numbers = #tpu.dot_dimension_numbers<[1], [0], [0], [1], [0, 0, 1, 1], [], []>} : vector<33x33xf32>, vector<33x128xf32>, vector<33x128xf32> -> vector<33x128xf32>
    %cst_39 = arith.constant 0.000000e+00 : f32
    %86 = vector.broadcast %cst_39 : f32 to vector<33x128xf32>
    %87 = arith.maximumf %85, %86 : vector<33x128xf32>
    %cst_40 = arith.constant dense<0.000000e+00> : vector<4x128xf32>
    %88 = tpu.matmul %4, %87, %cst_40 {dimension_numbers = #tpu.dot_dimension_numbers<[1], [0], [0], [1], [0, 0, 1, 1], [], []>} : vector<4x33xf32>, vector<33x128xf32>, vector<4x128xf32> -> vector<4x128xf32>
    %89 = vector.extract_strided_slice %88 {offsets = [0, 0], sizes = [1, 128], strides = [1, 1]} : vector<4x128xf32> to vector<1x128xf32>
    %cst_41 = arith.constant 0.000000e+00 : f32
    %90 = vector.broadcast %cst_41 : f32 to vector<1x128xf32>
    %91 = arith.maximumf %89, %90 : vector<1x128xf32>
    %92 = vector.extract_strided_slice %88 {offsets = [1, 0], sizes = [3, 128], strides = [1, 1]} : vector<4x128xf32> to vector<3x128xf32>
    %93 = arith.negf %92 : vector<3x128xf32>
    %94 = math.exp %93 : vector<3x128xf32>
    %cst_42 = arith.constant 1.000000e+00 : f32
    %95 = vector.broadcast %cst_42 : f32 to vector<3x128xf32>
    %96 = arith.addf %95, %94 : vector<3x128xf32>
    %97 = arith.divf %95, %96 : vector<3x128xf32>
    %cst_43 = arith.constant 0.557142854 : f32
    %98 = vector.broadcast %cst_43 : f32 to vector<1x128xf32>
    %99 = arith.mulf %91, %98 : vector<1x128xf32>
    %cst_44 = arith.constant 0.000000e+00 : f32
    %100 = vector.broadcast %cst_44 : f32 to vector<1x128xf32>
    %101 = arith.subf %100, %99 : vector<1x128xf32>
    %102 = math.exp %101 : vector<1x128xf32>
    %cst_45 = arith.constant 1.000000e+00 : f32
    %103 = vector.broadcast %cst_45 : f32 to vector<1x128xf32>
    %104 = arith.subf %103, %102 : vector<1x128xf32>
    %105 = arith.mulf %77, %104 : vector<1x128xf32>
    %106 = vector.broadcast %105 : vector<1x128xf32> to vector<3x128xf32>
    %107 = arith.mulf %106, %97 : vector<3x128xf32>
    %108 = arith.addf %73, %107 : vector<3x128xf32>
    %cst_46 = arith.constant 1.21428573 : f32
    %109 = vector.broadcast %cst_46 : f32 to vector<1x128xf32>
    %110 = arith.mulf %105, %109 : vector<1x128xf32>
    %111 = arith.addf %76, %110 : vector<1x128xf32>
    %112 = arith.mulf %77, %102 : vector<1x128xf32>
    %cst_47 = arith.constant 1.77142859 : f32
    %113 = vector.broadcast %cst_47 : f32 to vector<25x128xf32>
    %114 = arith.mulf %113, %1 : vector<25x128xf32>
    %115 = arith.addf %0, %114 : vector<25x128xf32>
    %116 = math.sin %115 : vector<25x128xf32>
    %cst_48 = arith.constant dense<0.000000e+00> : vector<33x128xf32>
    %117 = tpu.matmul %2, %116, %cst_48 {dimension_numbers = #tpu.dot_dimension_numbers<[1], [0], [0], [1], [0, 0, 1, 1], [], []>} : vector<33x25xf32>, vector<25x128xf32>, vector<33x128xf32> -> vector<33x128xf32>
    %cst_49 = arith.constant 0.000000e+00 : f32
    %118 = vector.broadcast %cst_49 : f32 to vector<33x128xf32>
    %119 = arith.maximumf %117, %118 : vector<33x128xf32>
    %cst_50 = arith.constant dense<0.000000e+00> : vector<33x128xf32>
    %120 = tpu.matmul %3, %119, %cst_50 {dimension_numbers = #tpu.dot_dimension_numbers<[1], [0], [0], [1], [0, 0, 1, 1], [], []>} : vector<33x33xf32>, vector<33x128xf32>, vector<33x128xf32> -> vector<33x128xf32>
    %cst_51 = arith.constant 0.000000e+00 : f32
    %121 = vector.broadcast %cst_51 : f32 to vector<33x128xf32>
    %122 = arith.maximumf %120, %121 : vector<33x128xf32>
    %cst_52 = arith.constant dense<0.000000e+00> : vector<4x128xf32>
    %123 = tpu.matmul %4, %122, %cst_52 {dimension_numbers = #tpu.dot_dimension_numbers<[1], [0], [0], [1], [0, 0, 1, 1], [], []>} : vector<4x33xf32>, vector<33x128xf32>, vector<4x128xf32> -> vector<4x128xf32>
    %124 = vector.extract_strided_slice %123 {offsets = [0, 0], sizes = [1, 128], strides = [1, 1]} : vector<4x128xf32> to vector<1x128xf32>
    %cst_53 = arith.constant 0.000000e+00 : f32
    %125 = vector.broadcast %cst_53 : f32 to vector<1x128xf32>
    %126 = arith.maximumf %124, %125 : vector<1x128xf32>
    %127 = vector.extract_strided_slice %123 {offsets = [1, 0], sizes = [3, 128], strides = [1, 1]} : vector<4x128xf32> to vector<3x128xf32>
    %128 = arith.negf %127 : vector<3x128xf32>
    %129 = math.exp %128 : vector<3x128xf32>
    %cst_54 = arith.constant 1.000000e+00 : f32
    %130 = vector.broadcast %cst_54 : f32 to vector<3x128xf32>
    %131 = arith.addf %130, %129 : vector<3x128xf32>
    %132 = arith.divf %130, %131 : vector<3x128xf32>
    %cst_55 = arith.constant 0.557142854 : f32
    %133 = vector.broadcast %cst_55 : f32 to vector<1x128xf32>
    %134 = arith.mulf %126, %133 : vector<1x128xf32>
    %cst_56 = arith.constant 0.000000e+00 : f32
    %135 = vector.broadcast %cst_56 : f32 to vector<1x128xf32>
    %136 = arith.subf %135, %134 : vector<1x128xf32>
    %137 = math.exp %136 : vector<1x128xf32>
    %cst_57 = arith.constant 1.000000e+00 : f32
    %138 = vector.broadcast %cst_57 : f32 to vector<1x128xf32>
    %139 = arith.subf %138, %137 : vector<1x128xf32>
    %140 = arith.mulf %112, %139 : vector<1x128xf32>
    %141 = vector.broadcast %140 : vector<1x128xf32> to vector<3x128xf32>
    %142 = arith.mulf %141, %132 : vector<3x128xf32>
    %143 = arith.addf %108, %142 : vector<3x128xf32>
    %cst_58 = arith.constant 1.77142859 : f32
    %144 = vector.broadcast %cst_58 : f32 to vector<1x128xf32>
    %145 = arith.mulf %140, %144 : vector<1x128xf32>
    %146 = arith.addf %111, %145 : vector<1x128xf32>
    %147 = arith.mulf %112, %137 : vector<1x128xf32>
    %cst_59 = arith.constant 2.32857132 : f32
    %148 = vector.broadcast %cst_59 : f32 to vector<25x128xf32>
    %149 = arith.mulf %148, %1 : vector<25x128xf32>
    %150 = arith.addf %0, %149 : vector<25x128xf32>
    %151 = math.sin %150 : vector<25x128xf32>
    %cst_60 = arith.constant dense<0.000000e+00> : vector<33x128xf32>
    %152 = tpu.matmul %2, %151, %cst_60 {dimension_numbers = #tpu.dot_dimension_numbers<[1], [0], [0], [1], [0, 0, 1, 1], [], []>} : vector<33x25xf32>, vector<25x128xf32>, vector<33x128xf32> -> vector<33x128xf32>
    %cst_61 = arith.constant 0.000000e+00 : f32
    %153 = vector.broadcast %cst_61 : f32 to vector<33x128xf32>
    %154 = arith.maximumf %152, %153 : vector<33x128xf32>
    %cst_62 = arith.constant dense<0.000000e+00> : vector<33x128xf32>
    %155 = tpu.matmul %3, %154, %cst_62 {dimension_numbers = #tpu.dot_dimension_numbers<[1], [0], [0], [1], [0, 0, 1, 1], [], []>} : vector<33x33xf32>, vector<33x128xf32>, vector<33x128xf32> -> vector<33x128xf32>
    %cst_63 = arith.constant 0.000000e+00 : f32
    %156 = vector.broadcast %cst_63 : f32 to vector<33x128xf32>
    %157 = arith.maximumf %155, %156 : vector<33x128xf32>
    %cst_64 = arith.constant dense<0.000000e+00> : vector<4x128xf32>
    %158 = tpu.matmul %4, %157, %cst_64 {dimension_numbers = #tpu.dot_dimension_numbers<[1], [0], [0], [1], [0, 0, 1, 1], [], []>} : vector<4x33xf32>, vector<33x128xf32>, vector<4x128xf32> -> vector<4x128xf32>
    %159 = vector.extract_strided_slice %158 {offsets = [0, 0], sizes = [1, 128], strides = [1, 1]} : vector<4x128xf32> to vector<1x128xf32>
    %cst_65 = arith.constant 0.000000e+00 : f32
    %160 = vector.broadcast %cst_65 : f32 to vector<1x128xf32>
    %161 = arith.maximumf %159, %160 : vector<1x128xf32>
    %162 = vector.extract_strided_slice %158 {offsets = [1, 0], sizes = [3, 128], strides = [1, 1]} : vector<4x128xf32> to vector<3x128xf32>
    %163 = arith.negf %162 : vector<3x128xf32>
    %164 = math.exp %163 : vector<3x128xf32>
    %cst_66 = arith.constant 1.000000e+00 : f32
    %165 = vector.broadcast %cst_66 : f32 to vector<3x128xf32>
    %166 = arith.addf %165, %164 : vector<3x128xf32>
    %167 = arith.divf %165, %166 : vector<3x128xf32>
    %cst_67 = arith.constant 0.557142854 : f32
    %168 = vector.broadcast %cst_67 : f32 to vector<1x128xf32>
    %169 = arith.mulf %161, %168 : vector<1x128xf32>
    %cst_68 = arith.constant 0.000000e+00 : f32
    %170 = vector.broadcast %cst_68 : f32 to vector<1x128xf32>
    %171 = arith.subf %170, %169 : vector<1x128xf32>
    %172 = math.exp %171 : vector<1x128xf32>
    %cst_69 = arith.constant 1.000000e+00 : f32
    %173 = vector.broadcast %cst_69 : f32 to vector<1x128xf32>
    %174 = arith.subf %173, %172 : vector<1x128xf32>
    %175 = arith.mulf %147, %174 : vector<1x128xf32>
    %176 = vector.broadcast %175 : vector<1x128xf32> to vector<3x128xf32>
    %177 = arith.mulf %176, %167 : vector<3x128xf32>
    %178 = arith.addf %143, %177 : vector<3x128xf32>
    %cst_70 = arith.constant 2.32857132 : f32
    %179 = vector.broadcast %cst_70 : f32 to vector<1x128xf32>
    %180 = arith.mulf %175, %179 : vector<1x128xf32>
    %181 = arith.addf %146, %180 : vector<1x128xf32>
    %182 = arith.mulf %147, %172 : vector<1x128xf32>
    %cst_71 = arith.constant 2.88571429 : f32
    %183 = vector.broadcast %cst_71 : f32 to vector<25x128xf32>
    %184 = arith.mulf %183, %1 : vector<25x128xf32>
    %185 = arith.addf %0, %184 : vector<25x128xf32>
    %186 = math.sin %185 : vector<25x128xf32>
    %cst_72 = arith.constant dense<0.000000e+00> : vector<33x128xf32>
    %187 = tpu.matmul %2, %186, %cst_72 {dimension_numbers = #tpu.dot_dimension_numbers<[1], [0], [0], [1], [0, 0, 1, 1], [], []>} : vector<33x25xf32>, vector<25x128xf32>, vector<33x128xf32> -> vector<33x128xf32>
    %cst_73 = arith.constant 0.000000e+00 : f32
    %188 = vector.broadcast %cst_73 : f32 to vector<33x128xf32>
    %189 = arith.maximumf %187, %188 : vector<33x128xf32>
    %cst_74 = arith.constant dense<0.000000e+00> : vector<33x128xf32>
    %190 = tpu.matmul %3, %189, %cst_74 {dimension_numbers = #tpu.dot_dimension_numbers<[1], [0], [0], [1], [0, 0, 1, 1], [], []>} : vector<33x33xf32>, vector<33x128xf32>, vector<33x128xf32> -> vector<33x128xf32>
    %cst_75 = arith.constant 0.000000e+00 : f32
    %191 = vector.broadcast %cst_75 : f32 to vector<33x128xf32>
    %192 = arith.maximumf %190, %191 : vector<33x128xf32>
    %cst_76 = arith.constant dense<0.000000e+00> : vector<4x128xf32>
    %193 = tpu.matmul %4, %192, %cst_76 {dimension_numbers = #tpu.dot_dimension_numbers<[1], [0], [0], [1], [0, 0, 1, 1], [], []>} : vector<4x33xf32>, vector<33x128xf32>, vector<4x128xf32> -> vector<4x128xf32>
    %194 = vector.extract_strided_slice %193 {offsets = [0, 0], sizes = [1, 128], strides = [1, 1]} : vector<4x128xf32> to vector<1x128xf32>
    %cst_77 = arith.constant 0.000000e+00 : f32
    %195 = vector.broadcast %cst_77 : f32 to vector<1x128xf32>
    %196 = arith.maximumf %194, %195 : vector<1x128xf32>
    %197 = vector.extract_strided_slice %193 {offsets = [1, 0], sizes = [3, 128], strides = [1, 1]} : vector<4x128xf32> to vector<3x128xf32>
    %198 = arith.negf %197 : vector<3x128xf32>
    %199 = math.exp %198 : vector<3x128xf32>
    %cst_78 = arith.constant 1.000000e+00 : f32
    %200 = vector.broadcast %cst_78 : f32 to vector<3x128xf32>
    %201 = arith.addf %200, %199 : vector<3x128xf32>
    %202 = arith.divf %200, %201 : vector<3x128xf32>
    %cst_79 = arith.constant 0.557142854 : f32
    %203 = vector.broadcast %cst_79 : f32 to vector<1x128xf32>
    %204 = arith.mulf %196, %203 : vector<1x128xf32>
    %cst_80 = arith.constant 0.000000e+00 : f32
    %205 = vector.broadcast %cst_80 : f32 to vector<1x128xf32>
    %206 = arith.subf %205, %204 : vector<1x128xf32>
    %207 = math.exp %206 : vector<1x128xf32>
    %cst_81 = arith.constant 1.000000e+00 : f32
    %208 = vector.broadcast %cst_81 : f32 to vector<1x128xf32>
    %209 = arith.subf %208, %207 : vector<1x128xf32>
    %210 = arith.mulf %182, %209 : vector<1x128xf32>
    %211 = vector.broadcast %210 : vector<1x128xf32> to vector<3x128xf32>
    %212 = arith.mulf %211, %202 : vector<3x128xf32>
    %213 = arith.addf %178, %212 : vector<3x128xf32>
    %cst_82 = arith.constant 2.88571429 : f32
    %214 = vector.broadcast %cst_82 : f32 to vector<1x128xf32>
    %215 = arith.mulf %210, %214 : vector<1x128xf32>
    %216 = arith.addf %181, %215 : vector<1x128xf32>
    %217 = arith.mulf %182, %207 : vector<1x128xf32>
    %cst_83 = arith.constant 3.44285703 : f32
    %218 = vector.broadcast %cst_83 : f32 to vector<25x128xf32>
    %219 = arith.mulf %218, %1 : vector<25x128xf32>
    %220 = arith.addf %0, %219 : vector<25x128xf32>
    %221 = math.sin %220 : vector<25x128xf32>
    %cst_84 = arith.constant dense<0.000000e+00> : vector<33x128xf32>
    %222 = tpu.matmul %2, %221, %cst_84 {dimension_numbers = #tpu.dot_dimension_numbers<[1], [0], [0], [1], [0, 0, 1, 1], [], []>} : vector<33x25xf32>, vector<25x128xf32>, vector<33x128xf32> -> vector<33x128xf32>
    %cst_85 = arith.constant 0.000000e+00 : f32
    %223 = vector.broadcast %cst_85 : f32 to vector<33x128xf32>
    %224 = arith.maximumf %222, %223 : vector<33x128xf32>
    %cst_86 = arith.constant dense<0.000000e+00> : vector<33x128xf32>
    %225 = tpu.matmul %3, %224, %cst_86 {dimension_numbers = #tpu.dot_dimension_numbers<[1], [0], [0], [1], [0, 0, 1, 1], [], []>} : vector<33x33xf32>, vector<33x128xf32>, vector<33x128xf32> -> vector<33x128xf32>
    %cst_87 = arith.constant 0.000000e+00 : f32
    %226 = vector.broadcast %cst_87 : f32 to vector<33x128xf32>
    %227 = arith.maximumf %225, %226 : vector<33x128xf32>
    %cst_88 = arith.constant dense<0.000000e+00> : vector<4x128xf32>
    %228 = tpu.matmul %4, %227, %cst_88 {dimension_numbers = #tpu.dot_dimension_numbers<[1], [0], [0], [1], [0, 0, 1, 1], [], []>} : vector<4x33xf32>, vector<33x128xf32>, vector<4x128xf32> -> vector<4x128xf32>
    %229 = vector.extract_strided_slice %228 {offsets = [0, 0], sizes = [1, 128], strides = [1, 1]} : vector<4x128xf32> to vector<1x128xf32>
    %cst_89 = arith.constant 0.000000e+00 : f32
    %230 = vector.broadcast %cst_89 : f32 to vector<1x128xf32>
    %231 = arith.maximumf %229, %230 : vector<1x128xf32>
    %232 = vector.extract_strided_slice %228 {offsets = [1, 0], sizes = [3, 128], strides = [1, 1]} : vector<4x128xf32> to vector<3x128xf32>
    %233 = arith.negf %232 : vector<3x128xf32>
    %234 = math.exp %233 : vector<3x128xf32>
    %cst_90 = arith.constant 1.000000e+00 : f32
    %235 = vector.broadcast %cst_90 : f32 to vector<3x128xf32>
    %236 = arith.addf %235, %234 : vector<3x128xf32>
    %237 = arith.divf %235, %236 : vector<3x128xf32>
    %cst_91 = arith.constant 0.557142854 : f32
    %238 = vector.broadcast %cst_91 : f32 to vector<1x128xf32>
    %239 = arith.mulf %231, %238 : vector<1x128xf32>
    %cst_92 = arith.constant 0.000000e+00 : f32
    %240 = vector.broadcast %cst_92 : f32 to vector<1x128xf32>
    %241 = arith.subf %240, %239 : vector<1x128xf32>
    %242 = math.exp %241 : vector<1x128xf32>
    %cst_93 = arith.constant 1.000000e+00 : f32
    %243 = vector.broadcast %cst_93 : f32 to vector<1x128xf32>
    %244 = arith.subf %243, %242 : vector<1x128xf32>
    %245 = arith.mulf %217, %244 : vector<1x128xf32>
    %246 = vector.broadcast %245 : vector<1x128xf32> to vector<3x128xf32>
    %247 = arith.mulf %246, %237 : vector<3x128xf32>
    %248 = arith.addf %213, %247 : vector<3x128xf32>
    %cst_94 = arith.constant 3.44285703 : f32
    %249 = vector.broadcast %cst_94 : f32 to vector<1x128xf32>
    %250 = arith.mulf %245, %249 : vector<1x128xf32>
    %251 = arith.addf %216, %250 : vector<1x128xf32>
    %252 = arith.mulf %217, %242 : vector<1x128xf32>
    %cst_95 = arith.constant 4.000000e+00 : f32
    %253 = vector.broadcast %cst_95 : f32 to vector<25x128xf32>
    %254 = arith.mulf %253, %1 : vector<25x128xf32>
    %255 = arith.addf %0, %254 : vector<25x128xf32>
    %256 = math.sin %255 : vector<25x128xf32>
    %cst_96 = arith.constant dense<0.000000e+00> : vector<33x128xf32>
    %257 = tpu.matmul %2, %256, %cst_96 {dimension_numbers = #tpu.dot_dimension_numbers<[1], [0], [0], [1], [0, 0, 1, 1], [], []>} : vector<33x25xf32>, vector<25x128xf32>, vector<33x128xf32> -> vector<33x128xf32>
    %cst_97 = arith.constant 0.000000e+00 : f32
    %258 = vector.broadcast %cst_97 : f32 to vector<33x128xf32>
    %259 = arith.maximumf %257, %258 : vector<33x128xf32>
    %cst_98 = arith.constant dense<0.000000e+00> : vector<33x128xf32>
    %260 = tpu.matmul %3, %259, %cst_98 {dimension_numbers = #tpu.dot_dimension_numbers<[1], [0], [0], [1], [0, 0, 1, 1], [], []>} : vector<33x33xf32>, vector<33x128xf32>, vector<33x128xf32> -> vector<33x128xf32>
    %cst_99 = arith.constant 0.000000e+00 : f32
    %261 = vector.broadcast %cst_99 : f32 to vector<33x128xf32>
    %262 = arith.maximumf %260, %261 : vector<33x128xf32>
    %cst_100 = arith.constant dense<0.000000e+00> : vector<4x128xf32>
    %263 = tpu.matmul %4, %262, %cst_100 {dimension_numbers = #tpu.dot_dimension_numbers<[1], [0], [0], [1], [0, 0, 1, 1], [], []>} : vector<4x33xf32>, vector<33x128xf32>, vector<4x128xf32> -> vector<4x128xf32>
    %264 = vector.extract_strided_slice %263 {offsets = [0, 0], sizes = [1, 128], strides = [1, 1]} : vector<4x128xf32> to vector<1x128xf32>
    %cst_101 = arith.constant 0.000000e+00 : f32
    %265 = vector.broadcast %cst_101 : f32 to vector<1x128xf32>
    %266 = arith.maximumf %264, %265 : vector<1x128xf32>
    %267 = vector.extract_strided_slice %263 {offsets = [1, 0], sizes = [3, 128], strides = [1, 1]} : vector<4x128xf32> to vector<3x128xf32>
    %268 = arith.negf %267 : vector<3x128xf32>
    %269 = math.exp %268 : vector<3x128xf32>
    %cst_102 = arith.constant 1.000000e+00 : f32
    %270 = vector.broadcast %cst_102 : f32 to vector<3x128xf32>
    %271 = arith.addf %270, %269 : vector<3x128xf32>
    %272 = arith.divf %270, %271 : vector<3x128xf32>
    %cst_103 = arith.constant 1.000000e+10 : f32
    %273 = vector.broadcast %cst_103 : f32 to vector<1x128xf32>
    %274 = arith.mulf %266, %273 : vector<1x128xf32>
    %cst_104 = arith.constant 0.000000e+00 : f32
    %275 = vector.broadcast %cst_104 : f32 to vector<1x128xf32>
    %276 = arith.subf %275, %274 : vector<1x128xf32>
    %277 = math.exp %276 : vector<1x128xf32>
    %cst_105 = arith.constant 1.000000e+00 : f32
    %278 = vector.broadcast %cst_105 : f32 to vector<1x128xf32>
    %279 = arith.subf %278, %277 : vector<1x128xf32>
    %280 = arith.mulf %252, %279 : vector<1x128xf32>
    %281 = vector.broadcast %280 : vector<1x128xf32> to vector<3x128xf32>
    %282 = arith.mulf %281, %272 : vector<3x128xf32>
    %283 = arith.addf %248, %282 : vector<3x128xf32>
    %cst_106 = arith.constant 4.000000e+00 : f32
    %284 = vector.broadcast %cst_106 : f32 to vector<1x128xf32>
    %285 = arith.mulf %280, %284 : vector<1x128xf32>
    %286 = arith.addf %251, %285 : vector<1x128xf32>
    %c0_107 = arith.constant 0 : index
    %c0_108 = arith.constant 0 : index
    %287 = vector.load %arg5[%c0_107, %c0_108] : memref<4x128xf32, #tpu.memory_space<vmem>>, vector<3x128xf32>
    tpu.vector_store %arg5[%c0_107, %c0_108], %283 {strides = array<i32>} : memref<4x128xf32, #tpu.memory_space<vmem>>, vector<3x128xf32>,
    %c3 = arith.constant 3 : index
    %c0_109 = arith.constant 0 : index
    %288 = vector.load %arg5[%c3, %c0_109] : memref<4x128xf32, #tpu.memory_space<vmem>>, vector<1x128xf32>
    tpu.vector_store %arg5[%c3, %c0_109], %286 {strides = array<i32>} : memref<4x128xf32, #tpu.memory_space<vmem>>, vector<1x128xf32>,
    return
  }
}

</mosaic_0001>

<llo_original>
// kernel: tile.20
$region0: #{tile.20}
  #allocation0 [shape = 's32[1]{0}', space=sflag, size = 0x4, scoped, tag = 'scoped memory for tile.20']
  %s0 = inlined_call_operand.vmem [shape: f32[8], index: 0, kind: input, shape index: {}]
  %s1 = inlined_call_operand.vmem [shape: f32[3,8], index: 1, kind: output, shape index: {}]
  // Predicated region
  $region2: #{tile.20} parent=0 // pred_check
    _
  $region3: #{tile.20} parent=0 // pred_check_branch
    %3 = sbr.rel (0) target = $region5
  $region4: #{tile.20} parent=0 // pred_region
    _
  $region5: #{tile.20} parent=0 // pred_fallthru
    _
  %v4 = vld [vmem:[%s0] ss:$0 sm:$0xff]
  %5 = vst [vmem:[%s1] sm:$0xf] %v4

// kernel: tile.16
$region0: #{tile.16}
  #allocation0 [shape = 's32[1]{0}', space=sflag, size = 0x4, scoped, tag = 'scoped memory for tile.16']
  %s0 = inlined_call_operand.vmem [shape: f32[4], index: 0, kind: input, shape index: {}]
  %s1 = inlined_call_operand.vmem [shape: f32[2,4], index: 1, kind: output, shape index: {}]
  // Predicated region
  $region2: #{tile.16} parent=0 // pred_check
    _
  $region3: #{tile.16} parent=0 // pred_check_branch
    %3 = sbr.rel (0) target = $region5
  $region4: #{tile.16} parent=0 // pred_region
    _
  $region5: #{tile.16} parent=0 // pred_fallthru
    _
  %v4 = vld [vmem:[%s0] ss:$0 sm:$0xff]
  %5 = vst [vmem:[%s1] sm:$0x3] %v4

// kernel: tile.19
$region0: #{tile.19}
  %s0 = inlined_call_operand.vmem [shape: f32[2,4], index: 0, kind: input, shape index: {}]
  %s1 = inlined_call_operand.vmem [shape: f32[8], index: 1, kind: output, shape index: {}]
  $region1: #{tile.19} parent=0
    #allocation0 [shape = 'u8[4096]{0}', space=vmem, size = 0x1000, scoped, tag = 'scoped mem for output reshape']
    #allocation1 [shape = 'u8[4096]{0}', space=vmem, size = 0x1000, scoped, tag = 'scoped mem for input reshape']
    %s3 = sshllo.u32 0, 2
    %v4 = vld [vmem:[%s0] sm:%s3]
    %5 = vst [vmem:[#allocation1] sm:%s3] %v4
    %v6 = vld [vmem:[#allocation1] sm:$0x1]
    %vm7 = vcmask 31744
    %8 = vst.msk [vmem:[#allocation0] sm:$0x1] %vm7, %v6
    %s9 = scalar_lea.vmem [#allocation1], 1
    %v10 = vld [vmem:[%s9] sm:$0x1]
    %11 = vrot.lane.b32.xlu0 %v10, 4
    %v12 = vpop.permute.xlu0 %11
    %vm13 = vcmask 64544
    %14 = vst.msk [vmem:[#allocation0] sm:$0x1] %vm13, %v12
    %s16 = sshllo.u32 0, 1
    %v18 = vld [vmem:[#allocation0] sm:%s16]
    %s19 = sshllo.u32 0, 1
    %20 = vst [vmem:[%s1] sm:%s19] %v18

// kernel: mul.9
$region0: #{mul.9}
  %s0 = inlined_call_operand.vmem [shape: f32[3,8], index: 0, kind: input, shape index: {}]
  %s1 = inlined_call_operand.vmem [shape: f32[24], index: 1, kind: output, shape index: {}]
  $region1: #{mul.9} parent=0
    #allocation0 [shape = 'u8[4096]{0}', space=vmem, size = 0x1000, scoped, tag = 'scoped mem for output reshape']
    #allocation1 [shape = 'u8[4096]{0}', space=vmem, size = 0x1000, scoped, tag = 'scoped mem for input reshape']
    %s3 = sshllo.u32 0, 4
    %v4 = vld [vmem:[%s0] sm:%s3]
    %5 = vst [vmem:[#allocation1] sm:%s3] %v4
    %v6 = vld [vmem:[#allocation1] sm:$0x1]
    %vm7 = vcmask 64512
    %8 = vst.msk [vmem:[#allocation0] sm:$0x1] %vm7, %v6
    %s9 = scalar_lea.vmem [#allocation1], 2
    %v10 = vld [vmem:[%s9] sm:$0x1]
    %11 = vrot.lane.b32.xlu0 %v10, 16
    %v12 = vpop.permute.xlu0 %11
    %vm13 = vcmask 195712
    %14 = vst.msk [vmem:[#allocation0] sm:$0x1] %vm13, %v12
    %s15 = scalar_lea.vmem [#allocation1], 1
    %v16 = vld [vmem:[%s15] sm:$0x1]
    %17 = vrot.lane.b32.xlu0 %v16, 8
    %v18 = vpop.permute.xlu0 %17
    %vm19 = vcmask 130112
    %20 = vst.msk [vmem:[#allocation0] sm:$0x1] %vm19, %v18
    %s22 = sshllo.u32 0, 1
    %v24 = vld [vmem:[#allocation0] sm:%s22]
    %s25 = sshllo.u32 0, 1
    %26 = vst [vmem:[%s1] sm:%s25] %v24

// kernel: nerf_forward.1
$region0: #{nerf_forward.1}
  #allocation0 [shape = 'u32[]', space=smem, size = 0x4, offset = 0x4, fixed_abs, tag = 'smem constant byte address 0x4 - core index']
  #allocation1 [shape = 'u32[144,128]{1,0:T(1,128)}', space=vmem, size = 0x12000, scoped, tag = 'internal scratch']
  %s0 = inlined_call_operand.vmem [shape: f32[25,128], index: 0, kind: input, shape index: {}]
  %s1 = inlined_call_operand.vmem [shape: f32[25,128], index: 1, kind: input, shape index: {}]
  %s2 = inlined_call_operand.vmem [shape: f32[33,25], index: 2, kind: input, shape index: {}]
  %s3 = inlined_call_operand.vmem [shape: f32[33,33], index: 3, kind: input, shape index: {}]
  %s4 = inlined_call_operand.vmem [shape: f32[4,33], index: 4, kind: input, shape index: {}]
  %s5 = inlined_call_operand.vmem [shape: f32[4,128], index: 5, kind: output, shape index: {}]
  %s6 = sld [smem:[#allocation0]]
  $region30: #{nerf_forward.1} parent=0
    _
  %s8 = ssub.s32 1, %s6
  %s9 = scalar_select 0, %s8, %s6
  // Predicated region
  $region2: #{nerf_forward.1} parent=0 // pred_check
    _
  $region3: #{nerf_forward.1} parent=0 // pred_check_branch
    %11 = sbr.rel (0) target = $region5
  $region4: #{nerf_forward.1} parent=0 // pred_region
    _
  $region5: #{nerf_forward.1} parent=0 // pred_fallthru
    _
  // Predicated region
  $region6: #{nerf_forward.1} parent=0 // pred_check
    _
  $region7: #{nerf_forward.1} parent=0 // pred_check_branch
    %13 = sbr.rel (0) target = $region9
  $region8: #{nerf_forward.1} parent=0 // pred_region
    _
  $region9: #{nerf_forward.1} parent=0 // pred_fallthru
    _
  // Predicated region
  $region10: #{nerf_forward.1} parent=0 // pred_check
    _
  $region11: #{nerf_forward.1} parent=0 // pred_check_branch
    %15 = sbr.rel (0) target = $region13
  $region12: #{nerf_forward.1} parent=0 // pred_region
    _
  $region13: #{nerf_forward.1} parent=0 // pred_fallthru
    _
  // Predicated region
  $region14: #{nerf_forward.1} parent=0 // pred_check
    _
  $region15: #{nerf_forward.1} parent=0 // pred_check_branch
    %17 = sbr.rel (0) target = $region17
  $region16: #{nerf_forward.1} parent=0 // pred_region
    _
  $region17: #{nerf_forward.1} parent=0 // pred_fallthru
    _
  // Predicated region
  $region18: #{nerf_forward.1} parent=0 // pred_check
    _
  $region19: #{nerf_forward.1} parent=0 // pred_check_branch
    %19 = sbr.rel (0) target = $region21
  $region20: #{nerf_forward.1} parent=0 // pred_region
    _
  $region21: #{nerf_forward.1} parent=0 // pred_fallthru
    _
  %v20 = vld [vmem:[%s0] sm:$0xff]
  %v21 = vld [vmem:[%s0 + $0x8] sm:$0xff]
  %v22 = vld [vmem:[%s0 + $0x10] sm:$0xff]
  %v23 = vld [vmem:[%s0 + $0x18] sm:$0x1]
  %v24 = vld [vmem:[%s1] sm:$0xff]
  %v25 = vld [vmem:[%s1 + $0x8] sm:$0xff]
  %v26 = vld [vmem:[%s1 + $0x10] sm:$0xff]
  %v27 = vld [vmem:[%s1 + $0x18] sm:$0x1]
  %v28 = vld [vmem:[%s2] sm:$0xff]
  %v29 = vld [vmem:[%s2 + $0x8] sm:$0xff]
  %v30 = vld [vmem:[%s2 + $0x10] sm:$0xff]
  %v31 = vld [vmem:[%s2 + $0x18] sm:$0xff]
  %v32 = vld [vmem:[%s2 + $0x20] sm:$0x1]
  %v33 = vld [vmem:[%s3] sm:$0xff]
  %v34 = vld [vmem:[%s3 + $0x8] sm:$0xff]
  %v35 = vld [vmem:[%s3 + $0x10] sm:$0xff]
  %v36 = vld [vmem:[%s3 + $0x18] sm:$0xff]
  %v37 = vld [vmem:[%s3 + $0x20] sm:$0x1]
  %v38 = vld [vmem:[%s4] sm:$0xf]
  %v39 = vmul.f32 %v24, 0.1
  %v40 = vmul.f32 %v25, 0.1
  %v41 = vmul.f32 %v26, 0.1
  %v42 = vmul.f32 %v27, 0.1
  %v43 = vadd.f32 %v20, %v39
  %v44 = vadd.f32 %v21, %v40
  %v45 = vadd.f32 %v22, %v41
  %v46 = vadd.f32 %v23, %v42
  %v47 = vand.u32 2147483647, %v43
  %vm48 = vcmp.le.f32.partialorder %v47, 0.7853982
  %vm49 = vcmp.lt.s32.totalorder %v43, 0
  %v50 = vand.u32 %v43, 2139095040
  %v51 = vshrl.u32 %v50, 23
  %v52 = vsub.s32 %v51, 127
  %v53 = vand.u32 2147483647, %v43
  %v54 = vand.u32 %v53, 8388607
  %v55 = vor.u32 %v54, 8388608
  %v56 = vsub.s32 0, %v55
  %v57 = vadd.s32 %v52, 1
  %vm58 = vcmp.gt.s32.totalorder %v57, 0
  %v59 = vsel %vm58, %v57, 0
  %v60 = vshrl.u32 %v59, 5
  %v61 = vand.u32 %v59, 31
  %v62 = vsub.s32 32, %v61
  %v63 = vshrl.u32 683565275, %v62
  %v64 = vshll.u32 683565275, %v61
  %v65 = vshrl.u32 2475754826, %v62
  %v66 = vor.u32 %v64, %v65
  %v67 = vshll.u32 2475754826, %v61
  %v68 = vshrl.u32 2131351028, %v62
  %v69 = vor.u32 %v67, %v68
  %v70 = vshll.u32 2131351028, %v61
  %v71 = vshrl.u32 2102212464, %v62
  %v72 = vor.u32 %v70, %v71
  %v73 = vshll.u32 2102212464, %v61
  %v74 = vshrl.u32 920167782, %v62
  %v75 = vor.u32 %v73, %v74
  %v76 = vshll.u32 920167782, %v61
  %v77 = vshrl.u32 1326507024, %v62
  %v78 = vor.u32 %v76, %v77
  %vm79 = vcmp.lt.s32.totalorder %v60, 1
  %vm80 = vcmp.lt.s32.totalorder %v60, 2
  %vm81 = vcmp.lt.s32.totalorder %v60, 3
  %vm82 = vcmp.lt.s32.totalorder %v60, 4
  %v83 = vsel %vm79, %v63, %v66
  %v84 = vsel %vm82, %v72, 2102212464
  %v85 = vsel %vm81, %v69, %v84
  %v86 = vsel %vm80, %v83, %v85
  %v87 = vsel %vm79, %v66, %v69
  %v88 = vsel %vm82, %v75, 920167782
  %v89 = vsel %vm81, %v72, %v88
  %v90 = vsel %vm80, %v87, %v89
  %v91 = vsel %vm79, %v69, %v72
  %v92 = vsel %vm82, %v78, 1326507024
  %v93 = vsel %vm81, %v75, %v92
  %v94 = vsel %vm80, %v91, %v93
  %v95 = vshll.u32 %v55, 8
  %v96 = vmul.u32.u64.compose %v95, %v94
  %v97 = vextract.low.u32 %v96
  %v98 = vextract.high.u32 %v96
  %v99 = vmul.u32.u64.compose %v95, %v90
  %v100 = vextract.low.u32 %v99
  %v101 = vextract.high.u32 %v99
  %v102 = vmul.u32 %v95, %v86
  %v103 = vadd.s32 %v98, %v100
  %vm104 = vc.u32 %v98, %v100
  %v105 = vadd.s32 %v101, 1
  %v106 = vsel %vm104, %v105, %v101
  %v107 = vadd.s32 %v102, %v106
  %v108 = vadd.s32 %v107, 536870912
  %v109 = vshrl.u32 %v108, 30
  %v110 = vshll.u32 %v109, 30
  %v111 = vsub.s32 %v107, %v110
  %vm112 = vcmp.lt.s32.totalorder %v111, 0
  %v113 = vsub.s32 0, %v111
  %v114 = vsel %vm112, %v113, %v111
  %v115 = vclz %v114
  %v116 = vsub.s32 %v115, 2
  %vm117 = vcmp.gt.s32.totalorder 0, %v116
  %v118 = vsel %vm117, 0, %v116
  %v119 = vsub.s32 32, %v118
  %v120 = vshll.u32 %v111, %v118
  %v121 = vshrl.u32 %v103, %v119
  %v122 = vor.u32 %v120, %v121
  %v123 = vsub.s32 4294967266, %v118
  %v124 = vadd.s32 %v123, 127
  %v125 = vshll.u32 %v124, 23
  %v126 = vor.u32 4788187, %v125
  %v127 = vand.u32 2147483647, %v126
  %v129 = vcvt.s32.f32 %v122
  %v130 = vmul.f32 %v129, %v127
  %v131 = vxor.u32 %v130, 2147483648
  %v132 = vsel %vm49, %v131, %v130
  %v133 = vsub.s32 4, %v109
  %v134 = vsel %vm49, %v133, %v109
  %v135 = vsel %vm48, %v43, %v132
  %v136 = vsel %vm48, 0, %v134
  %v137 = vcosq.f32.pop %v135
  %v138 = vsinq.f32.pop %v135
  %vm139 = vweird.f32 %v43
  %v140 = vadd.s32 %v136, 3
  %v141 = vand.u32 %v140, 3
  %vm142 = vcmp.lt.s32.totalorder %v141, 2
  %vm143 = vcmp.eq.s32.totalorder %v141, 0
  %v144 = vxor.u32 %v138, 2147483648
  %v145 = vsel %vm143, %v137, %v144
  %vm146 = vcmp.eq.s32.totalorder %v141, 2
  %v147 = vxor.u32 %v137, 2147483648
  %v148 = vsel %vm146, %v147, %v138
  %v149 = vsel %vm142, %v145, %v148
  %v150 = vsel %vm139, nan, %v149
  %v151 = vand.u32 2147483647, %v44
  %vm152 = vcmp.le.f32.partialorder %v151, 0.7853982
  %vm153 = vcmp.lt.s32.totalorder %v44, 0
  %v154 = vand.u32 %v44, 2139095040
  %v155 = vshrl.u32 %v154, 23
  %v156 = vsub.s32 %v155, 127
  %v157 = vand.u32 2147483647, %v44
  %v158 = vand.u32 %v157, 8388607
  %v159 = vor.u32 %v158, 8388608
  %v160 = vsub.s32 0, %v159
  %v161 = vadd.s32 %v156, 1
  %vm162 = vcmp.gt.s32.totalorder %v161, 0
  %v163 = vsel %vm162, %v161, 0
  %v164 = vshrl.u32 %v163, 5
  %v165 = vand.u32 %v163, 31
  %v166 = vsub.s32 32, %v165
  %v167 = vshrl.u32 683565275, %v166
  %v168 = vshll.u32 683565275, %v165
  %v169 = vshrl.u32 2475754826, %v166
  %v170 = vor.u32 %v168, %v169
  %v171 = vshll.u32 2475754826, %v165
  %v172 = vshrl.u32 2131351028, %v166
  %v173 = vor.u32 %v171, %v172
  %v174 = vshll.u32 2131351028, %v165
  %v175 = vshrl.u32 2102212464, %v166
  %v176 = vor.u32 %v174, %v175
  %v177 = vshll.u32 2102212464, %v165
  %v178 = vshrl.u32 920167782, %v166
  %v179 = vor.u32 %v177, %v178
  %v180 = vshll.u32 920167782, %v165
  %v181 = vshrl.u32 1326507024, %v166
  %v182 = vor.u32 %v180, %v181
  %vm183 = vcmp.lt.s32.totalorder %v164, 1
  %vm184 = vcmp.lt.s32.totalorder %v164, 2
  %vm185 = vcmp.lt.s32.totalorder %v164, 3
  %vm186 = vcmp.lt.s32.totalorder %v164, 4
  %v187 = vsel %vm183, %v167, %v170
  %v188 = vsel %vm186, %v176, 2102212464
  %v189 = vsel %vm185, %v173, %v188
  %v190 = vsel %vm184, %v187, %v189
  %v191 = vsel %vm183, %v170, %v173
  %v192 = vsel %vm186, %v179, 920167782
  %v193 = vsel %vm185, %v176, %v192
  %v194 = vsel %vm184, %v191, %v193
  %v195 = vsel %vm183, %v173, %v176
  %v196 = vsel %vm186, %v182, 1326507024
  %v197 = vsel %vm185, %v179, %v196
  %v198 = vsel %vm184, %v195, %v197
  %v199 = vshll.u32 %v159, 8
  %v200 = vmul.u32.u64.compose %v199, %v198
  %v201 = vextract.low.u32 %v200
  %v202 = vextract.high.u32 %v200
  %v203 = vmul.u32.u64.compose %v199, %v194
  %v204 = vextract.low.u32 %v203
  %v205 = vextract.high.u32 %v203
  %v206 = vmul.u32 %v199, %v190
  %v207 = vadd.s32 %v202, %v204
  %vm208 = vc.u32 %v202, %v204
  %v209 = vadd.s32 %v205, 1
  %v210 = vsel %vm208, %v209, %v205
  %v211 = vadd.s32 %v206, %v210
  %v212 = vadd.s32 %v211, 536870912
  %v213 = vshrl.u32 %v212, 30
  %v214 = vshll.u32 %v213, 30
  %v215 = vsub.s32 %v211, %v214
  %vm216 = vcmp.lt.s32.totalorder %v215, 0
  %v217 = vsub.s32 0, %v215
  %v218 = vsel %vm216, %v217, %v215
  %v219 = vclz %v218
  %v220 = vsub.s32 %v219, 2
  %vm221 = vcmp.gt.s32.totalorder 0, %v220
  %v222 = vsel %vm221, 0, %v220
  %v223 = vsub.s32 32, %v222
  %v224 = vshll.u32 %v215, %v222
  %v225 = vshrl.u32 %v207, %v223
  %v226 = vor.u32 %v224, %v225
  %v227 = vsub.s32 4294967266, %v222
  %v228 = vadd.s32 %v227, 127
  %v229 = vshll.u32 %v228, 23
  %v230 = vor.u32 4788187, %v229
  %v231 = vand.u32 2147483647, %v230
  %v233 = vcvt.s32.f32 %v226
  %v234 = vmul.f32 %v233, %v231
  %v235 = vxor.u32 %v234, 2147483648
  %v236 = vsel %vm153, %v235, %v234
  %v237 = vsub.s32 4, %v213
  %v238 = vsel %vm153, %v237, %v213
  %v239 = vsel %vm152, %v44, %v236
  %v240 = vsel %vm152, 0, %v238
  %v241 = vcosq.f32.pop %v239
  %v242 = vsinq.f32.pop %v239
  %vm243 = vweird.f32 %v44
  %v244 = vadd.s32 %v240, 3
  %v245 = vand.u32 %v244, 3
  %vm246 = vcmp.lt.s32.totalorder %v245, 2
  %vm247 = vcmp.eq.s32.totalorder %v245, 0
  %v248 = vxor.u32 %v242, 2147483648
  %v249 = vsel %vm247, %v241, %v248
  %vm250 = vcmp.eq.s32.totalorder %v245, 2
  %v251 = vxor.u32 %v241, 2147483648
  %v252 = vsel %vm250, %v251, %v242
  %v253 = vsel %vm246, %v249, %v252
  %v254 = vsel %vm243, nan, %v253
  %v255 = vand.u32 2147483647, %v45
  %vm256 = vcmp.le.f32.partialorder %v255, 0.7853982
  %vm257 = vcmp.lt.s32.totalorder %v45, 0
  %v258 = vand.u32 %v45, 2139095040
  %v259 = vshrl.u32 %v258, 23
  %v260 = vsub.s32 %v259, 127
  %v261 = vand.u32 2147483647, %v45
  %v262 = vand.u32 %v261, 8388607
  %v263 = vor.u32 %v262, 8388608
  %v264 = vsub.s32 0, %v263
  %v265 = vadd.s32 %v260, 1
  %vm266 = vcmp.gt.s32.totalorder %v265, 0
  %v267 = vsel %vm266, %v265, 0
  %v268 = vshrl.u32 %v267, 5
  %v269 = vand.u32 %v267, 31
  %v270 = vsub.s32 32, %v269
  %v271 = vshrl.u32 683565275, %v270
  %v272 = vshll.u32 683565275, %v269
  %v273 = vshrl.u32 2475754826, %v270
  %v274 = vor.u32 %v272, %v273
  %v275 = vshll.u32 2475754826, %v269
  %v276 = vshrl.u32 2131351028, %v270
  %v277 = vor.u32 %v275, %v276
  %v278 = vshll.u32 2131351028, %v269
  %v279 = vshrl.u32 2102212464, %v270
  %v280 = vor.u32 %v278, %v279
  %v281 = vshll.u32 2102212464, %v269
  %v282 = vshrl.u32 920167782, %v270
  %v283 = vor.u32 %v281, %v282
  %v284 = vshll.u32 920167782, %v269
  %v285 = vshrl.u32 1326507024, %v270
  %v286 = vor.u32 %v284, %v285
  %vm287 = vcmp.lt.s32.totalorder %v268, 1
  %vm288 = vcmp.lt.s32.totalorder %v268, 2
  %vm289 = vcmp.lt.s32.totalorder %v268, 3
  %vm290 = vcmp.lt.s32.totalorder %v268, 4
  %v291 = vsel %vm287, %v271, %v274
  %v292 = vsel %vm290, %v280, 2102212464
  %v293 = vsel %vm289, %v277, %v292
  %v294 = vsel %vm288, %v291, %v293
  %v295 = vsel %vm287, %v274, %v277
  %v296 = vsel %vm290, %v283, 920167782
  %v297 = vsel %vm289, %v280, %v296
  %v298 = vsel %vm288, %v295, %v297
  %v299 = vsel %vm287, %v277, %v280
  %v300 = vsel %vm290, %v286, 1326507024
  %v301 = vsel %vm289, %v283, %v300
  %v302 = vsel %vm288, %v299, %v301
  %v303 = vshll.u32 %v263, 8
  %v304 = vmul.u32.u64.compose %v303, %v302
  %v305 = vextract.low.u32 %v304
  %v306 = vextract.high.u32 %v304
  %v307 = vmul.u32.u64.compose %v303, %v298
  %v308 = vextract.low.u32 %v307
  %v309 = vextract.high.u32 %v307
  %v310 = vmul.u32 %v303, %v294
  %v311 = vadd.s32 %v306, %v308
  %vm312 = vc.u32 %v306, %v308
  %v313 = vadd.s32 %v309, 1
  %v314 = vsel %vm312, %v313, %v309
  %v315 = vadd.s32 %v310, %v314
  %v316 = vadd.s32 %v315, 536870912
  %v317 = vshrl.u32 %v316, 30
  %v318 = vshll.u32 %v317, 30
  %v319 = vsub.s32 %v315, %v318
  %vm320 = vcmp.lt.s32.totalorder %v319, 0
  %v321 = vsub.s32 0, %v319
  %v322 = vsel %vm320, %v321, %v319
  %v323 = vclz %v322
  %v324 = vsub.s32 %v323, 2
  %vm325 = vcmp.gt.s32.totalorder 0, %v324
  %v326 = vsel %vm325, 0, %v324
  %v327 = vsub.s32 32, %v326
  %v328 = vshll.u32 %v319, %v326
  %v329 = vshrl.u32 %v311, %v327
  %v330 = vor.u32 %v328, %v329
  %v331 = vsub.s32 4294967266, %v326
  %v332 = vadd.s32 %v331, 127
  %v333 = vshll.u32 %v332, 23
  %v334 = vor.u32 4788187, %v333
  %v335 = vand.u32 2147483647, %v334
  %v337 = vcvt.s32.f32 %v330
  %v338 = vmul.f32 %v337, %v335
  %v339 = vxor.u32 %v338, 2147483648
  %v340 = vsel %vm257, %v339, %v338
  %v341 = vsub.s32 4, %v317
  %v342 = vsel %vm257, %v341, %v317
  %v343 = vsel %vm256, %v45, %v340
  %v344 = vsel %vm256, 0, %v342
  %v345 = vcosq.f32.pop %v343
  %v346 = vsinq.f32.pop %v343
  %vm347 = vweird.f32 %v45
  %v348 = vadd.s32 %v344, 3
  %v349 = vand.u32 %v348, 3
  %vm350 = vcmp.lt.s32.totalorder %v349, 2
  %vm351 = vcmp.eq.s32.totalorder %v349, 0
  %v352 = vxor.u32 %v346, 2147483648
  %v353 = vsel %vm351, %v345, %v352
  %vm354 = vcmp.eq.s32.totalorder %v349, 2
  %v355 = vxor.u32 %v345, 2147483648
  %v356 = vsel %vm354, %v355, %v346
  %v357 = vsel %vm350, %v353, %v356
  %v358 = vsel %vm347, nan, %v357
  %v359 = vand.u32 2147483647, %v46
  %vm360 = vcmp.le.f32.partialorder %v359, 0.7853982
  %vm361 = vcmp.lt.s32.totalorder %v46, 0
  %v362 = vand.u32 %v46, 2139095040
  %v363 = vshrl.u32 %v362, 23
  %v364 = vsub.s32 %v363, 127
  %v365 = vand.u32 2147483647, %v46
  %v366 = vand.u32 %v365, 8388607
  %v367 = vor.u32 %v366, 8388608
  %v368 = vsub.s32 0, %v367
  %v369 = vadd.s32 %v364, 1
  %vm370 = vcmp.gt.s32.totalorder %v369, 0
  %v371 = vsel %vm370, %v369, 0
  %v372 = vshrl.u32 %v371, 5
  %v373 = vand.u32 %v371, 31
  %v374 = vsub.s32 32, %v373
  %v375 = vshrl.u32 683565275, %v374
  %v376 = vshll.u32 683565275, %v373
  %v377 = vshrl.u32 2475754826, %v374
  %v378 = vor.u32 %v376, %v377
  %v379 = vshll.u32 2475754826, %v373
  %v380 = vshrl.u32 2131351028, %v374
  %v381 = vor.u32 %v379, %v380
  %v382 = vshll.u32 2131351028, %v373
  %v383 = vshrl.u32 2102212464, %v374
  %v384 = vor.u32 %v382, %v383
  %v385 = vshll.u32 2102212464, %v373
  %v386 = vshrl.u32 920167782, %v374
  %v387 = vor.u32 %v385, %v386
  %v388 = vshll.u32 920167782, %v373
  %v389 = vshrl.u32 1326507024, %v374
  %v390 = vor.u32 %v388, %v389
  %vm391 = vcmp.lt.s32.totalorder %v372, 1
  %vm392 = vcmp.lt.s32.totalorder %v372, 2
  %vm393 = vcmp.lt.s32.totalorder %v372, 3
  %vm394 = vcmp.lt.s32.totalorder %v372, 4
  %v395 = vsel %vm391, %v375, %v378
  %v396 = vsel %vm394, %v384, 2102212464
  %v397 = vsel %vm393, %v381, %v396
  %v398 = vsel %vm392, %v395, %v397
  %v399 = vsel %vm391, %v378, %v381
  %v400 = vsel %vm394, %v387, 920167782
  %v401 = vsel %vm393, %v384, %v400
  %v402 = vsel %vm392, %v399, %v401
  %v403 = vsel %vm391, %v381, %v384
  %v404 = vsel %vm394, %v390, 1326507024
  %v405 = vsel %vm393, %v387, %v404
  %v406 = vsel %vm392, %v403, %v405
  %v407 = vshll.u32 %v367, 8
  %v408 = vmul.u32.u64.compose %v407, %v406
  %v409 = vextract.low.u32 %v408
  %v410 = vextract.high.u32 %v408
  %v411 = vmul.u32.u64.compose %v407, %v402
  %v412 = vextract.low.u32 %v411
  %v413 = vextract.high.u32 %v411
  %v414 = vmul.u32 %v407, %v398
  %v415 = vadd.s32 %v410, %v412
  %vm416 = vc.u32 %v410, %v412
  %v417 = vadd.s32 %v413, 1
  %v418 = vsel %vm416, %v417, %v413
  %v419 = vadd.s32 %v414, %v418
  %v420 = vadd.s32 %v419, 536870912
  %v421 = vshrl.u32 %v420, 30
  %v422 = vshll.u32 %v421, 30
  %v423 = vsub.s32 %v419, %v422
  %vm424 = vcmp.lt.s32.totalorder %v423, 0
  %v425 = vsub.s32 0, %v423
  %v426 = vsel %vm424, %v425, %v423
  %v427 = vclz %v426
  %v428 = vsub.s32 %v427, 2
  %vm429 = vcmp.gt.s32.totalorder 0, %v428
  %v430 = vsel %vm429, 0, %v428
  %v431 = vsub.s32 32, %v430
  %v432 = vshll.u32 %v423, %v430
  %v433 = vshrl.u32 %v415, %v431
  %v434 = vor.u32 %v432, %v433
  %v435 = vsub.s32 4294967266, %v430
  %v436 = vadd.s32 %v435, 127
  %v437 = vshll.u32 %v436, 23
  %v438 = vor.u32 4788187, %v437
  %v439 = vand.u32 2147483647, %v438
  %v441 = vcvt.s32.f32 %v434
  %v442 = vmul.f32 %v441, %v439
  %v443 = vxor.u32 %v442, 2147483648
  %v444 = vsel %vm361, %v443, %v442
  %v445 = vsub.s32 4, %v421
  %v446 = vsel %vm361, %v445, %v421
  %v447 = vsel %vm360, %v46, %v444
  %v448 = vsel %vm360, 0, %v446
  %v449 = vcosq.f32.pop %v447
  %v450 = vsinq.f32.pop %v447
  %vm451 = vweird.f32 %v46
  %v452 = vadd.s32 %v448, 3
  %v453 = vand.u32 %v452, 3
  %vm454 = vcmp.lt.s32.totalorder %v453, 2
  %vm455 = vcmp.eq.s32.totalorder %v453, 0
  %v456 = vxor.u32 %v450, 2147483648
  %v457 = vsel %vm455, %v449, %v456
  %vm458 = vcmp.eq.s32.totalorder %v453, 2
  %v459 = vxor.u32 %v449, 2147483648
  %v460 = vsel %vm458, %v459, %v450
  %v461 = vsel %vm454, %v457, %v460
  %v462 = vsel %vm451, nan, %v461
  %vm463 = vcmask 203776
  %v465 = vsel %vm463, %v28, 0
  %v468 = vsel %vm463, %v29, 0
  %v471 = vsel %vm463, %v30, 0
  %v474 = vsel %vm463, %v31, 0
  %v477 = vsel %vm463, %v32, 0
  %vm479 = vcmask 1040384
  %v481 = vsel %vm479, %v462, 0
  %483 = vmatprep.subr.mxu0 0.0
  %484 = vmatpush1.msra.mxu0 %v150
  %485 = vmatprep.subr.mxu0 0.0
  %486 = vmatpush1.msra.mxu0 %v254
  %487 = vmatprep.subr.mxu0 0.0
  %488 = vmatpush1.msra.mxu0 %v358
  %489 = vmatprep.subr.mxu0 0.0
  %490 = vmatpush1.msra.mxu0 %v481
  %491 = vmatprep.subr.mxu0 0.0
  %492 = vmatpush1.msra.mxu0 0.0
  %493 = vmatprep.subr.mxu0 0.0
  %494 = vmatpush1.msra.mxu0 0.0
  %495 = vmatprep.subr.mxu0 0.0
  %496 = vmatpush1.msra.mxu0 0.0
  %497 = vmatprep.subr.mxu0 0.0
  %498 = vmatpush1.msra.mxu0 0.0
  %499 = vmatprep.subr.mxu0 0.0
  %500 = vmatpush1.msra.mxu0 0.0
  %501 = vmatprep.subr.mxu0 0.0
  %502 = vmatpush1.msra.mxu0 0.0
  %503 = vmatprep.subr.mxu0 0.0
  %504 = vmatpush1.msra.mxu0 0.0
  %505 = vmatprep.subr.mxu0 0.0
  %506 = vmatpush1.msra.mxu0 0.0
  %507 = vmatprep.subr.mxu0 0.0
  %508 = vmatpush1.msra.mxu0 0.0
  %509 = vmatprep.subr.mxu0 0.0
  %510 = vmatpush1.msra.mxu0 0.0
  %511 = vmatprep.subr.mxu0 0.0
  %512 = vmatpush1.msra.mxu0 0.0
  %513 = vmatprep.subr.mxu0 0.0
  %514 = vmatpush1.msra.mxu0 0.0
  %515 = vmatprep.subr.mxu0 0.0
  %516 = vmatpush1.msra.mxu0 0.0
  %517 = vmatprep.subr.mxu0 0.0
  %518 = vmatpush1.msra.mxu0 0.0
  %519 = vmatprep.subr.mxu0 0.0
  %520 = vmatpush1.msra.mxu0 0.0
  %521 = vmatprep.subr.mxu0 0.0
  %522 = vmatpush1.msra.mxu0 0.0
  %523 = vmatprep.subr.mxu0 0.0
  %524 = vmatpush1.msra.mxu0 0.0
  %525 = vmatprep.subr.mxu0 0.0
  %526 = vmatpush1.msra.mxu0 0.0
  %527 = vmatprep.subr.mxu0 0.0
  %528 = vmatpush1.msra.mxu0 0.0
  %529 = vmatprep.subr.mxu0 0.0
  %530 = vmatpush1.msra.mxu0 0.0
  %531 = vmatprep.subr.mxu0 0.0
  %532 = vmatpush1.msra.mxu0 0.0
  %533 = vmatprep.subr.mxu0 0.0
  %534 = vmatpush1.msra.mxu0 0.0
  %535 = vmatprep.subr.mxu0 0.0
  %536 = vmatpush1.msra.mxu0 0.0
  %537 = vmatprep.subr.mxu0 0.0
  %538 = vmatpush1.msra.mxu0 0.0
  %539 = vmatprep.subr.mxu0 0.0
  %540 = vmatpush1.msra.mxu0 0.0
  %541 = vmatprep.subr.mxu0 0.0
  %542 = vmatpush1.msra.mxu0 0.0
  %543 = vmatprep.subr.mxu0 0.0
  %544 = vmatpush1.msra.mxu0 0.0
  %545 = vmatprep.subr.mxu0 0.0
  %546 = vmatpush1.msra.mxu0 0.0
  %547 = vmatprep.mubr.f32.mxu0 0.0
  %548 = vmatmul.mubr.f32.gmra.mrb[0].mxu0 %v465
  %v549 = vpop.f32.mrb[0].mxu0
  %v550 = vadd.f32 0.0, %v549
  %v551 = vpop.f32.mrb[0].mxu0
  %552 = vmatprep.mubr.f32.mxu0 0.0
  %553 = vmatmul.mubr.f32.gmra.mrb[0].mxu0 %v468
  %v554 = vpop.f32.mrb[0].mxu0
  %v555 = vadd.f32 0.0, %v554
  %v556 = vpop.f32.mrb[0].mxu0
  %557 = vmatprep.mubr.f32.mxu0 0.0
  %558 = vmatmul.mubr.f32.gmra.mrb[0].mxu0 %v471
  %v559 = vpop.f32.mrb[0].mxu0
  %v560 = vadd.f32 0.0, %v559
  %v561 = vpop.f32.mrb[0].mxu0
  %562 = vmatprep.mubr.f32.mxu0 0.0
  %563 = vmatmul.mubr.f32.gmra.mrb[0].mxu0 %v474
  %v564 = vpop.f32.mrb[0].mxu0
  %v565 = vadd.f32 0.0, %v564
  %v566 = vpop.f32.mrb[0].mxu0
  %567 = vmatprep.mubr.f32.mxu0 0.0
  %568 = vmatmul.mubr.f32.gmra.mrb[0].mxu0 %v477
  %v569 = vpop.f32.mrb[0].mxu0
  %v570 = vadd.f32 0.0, %v569
  %v571 = vpop.f32.mrb[0].mxu0
  %572 = vdwg.mxu0
  %v573 = vmax.f32 %v550, 0.0
  %v574 = vmax.f32 %v555, 0.0
  %v575 = vmax.f32 %v560, 0.0
  %v576 = vmax.f32 %v565, 0.0
  %v577 = vmax.f32 %v570, 0.0
  %vm578 = vcmask 269312
  %v580 = vsel %vm578, %v33, 0
  %v583 = vsel %vm578, %v34, 0
  %v586 = vsel %vm578, %v35, 0
  %v589 = vsel %vm578, %v36, 0
  %v592 = vsel %vm578, %v37, 0
  %v595 = vsel %vm479, %v577, 0
  %597 = vmatprep.subr.mxu0 0.0
  %598 = vmatpush1.msra.mxu0 %v573
  %599 = vmatprep.subr.mxu0 0.0
  %600 = vmatpush1.msra.mxu0 %v574
  %601 = vmatprep.subr.mxu0 0.0
  %602 = vmatpush1.msra.mxu0 %v575
  %603 = vmatprep.subr.mxu0 0.0
  %604 = vmatpush1.msra.mxu0 %v576
  %605 = vmatprep.subr.mxu0 0.0
  %606 = vmatpush1.msra.mxu0 %v595
  %607 = vmatprep.subr.mxu0 0.0
  %608 = vmatpush1.msra.mxu0 0.0
  %609 = vmatprep.subr.mxu0 0.0
  %610 = vmatpush1.msra.mxu0 0.0
  %611 = vmatprep.subr.mxu0 0.0
  %612 = vmatpush1.msra.mxu0 0.0
  %613 = vmatprep.subr.mxu0 0.0
  %614 = vmatpush1.msra.mxu0 0.0
  %615 = vmatprep.subr.mxu0 0.0
  %616 = vmatpush1.msra.mxu0 0.0
  %617 = vmatprep.subr.mxu0 0.0
  %618 = vmatpush1.msra.mxu0 0.0
  %619 = vmatprep.subr.mxu0 0.0
  %620 = vmatpush1.msra.mxu0 0.0
  %621 = vmatprep.subr.mxu0 0.0
  %622 = vmatpush1.msra.mxu0 0.0
  %623 = vmatprep.subr.mxu0 0.0
  %624 = vmatpush1.msra.mxu0 0.0
  %625 = vmatprep.subr.mxu0 0.0
  %626 = vmatpush1.msra.mxu0 0.0
  %627 = vmatprep.subr.mxu0 0.0
  %628 = vmatpush1.msra.mxu0 0.0
  %629 = vmatprep.subr.mxu0 0.0
  %630 = vmatpush1.msra.mxu0 0.0
  %631 = vmatprep.subr.mxu0 0.0
  %632 = vmatpush1.msra.mxu0 0.0
  %633 = vmatprep.subr.mxu0 0.0
  %634 = vmatpush1.msra.mxu0 0.0
  %635 = vmatprep.subr.mxu0 0.0
  %636 = vmatpush1.msra.mxu0 0.0
  %637 = vmatprep.subr.mxu0 0.0
  %638 = vmatpush1.msra.mxu0 0.0
  %639 = vmatprep.subr.mxu0 0.0
  %640 = vmatpush1.msra.mxu0 0.0
  %641 = vmatprep.subr.mxu0 0.0
  %642 = vmatpush1.msra.mxu0 0.0
  %643 = vmatprep.subr.mxu0 0.0
  %644 = vmatpush1.msra.mxu0 0.0
  %645 = vmatprep.subr.mxu0 0.0
  %646 = vmatpush1.msra.mxu0 0.0
  %647 = vmatprep.subr.mxu0 0.0
  %648 = vmatpush1.msra.mxu0 0.0
  %649 = vmatprep.subr.mxu0 0.0
  %650 = vmatpush1.msra.mxu0 0.0
  %651 = vmatprep.subr.mxu0 0.0
  %652 = vmatpush1.msra.mxu0 0.0
  %653 = vmatprep.subr.mxu0 0.0
  %654 = vmatpush1.msra.mxu0 0.0
  %655 = vmatprep.subr.mxu0 0.0
  %656 = vmatpush1.msra.mxu0 0.0
  %657 = vmatprep.subr.mxu0 0.0
  %658 = vmatpush1.msra.mxu0 0.0
  %659 = vmatprep.subr.mxu0 0.0
  %660 = vmatpush1.msra.mxu0 0.0
  %661 = vmatprep.mubr.f32.mxu0 0.0
  %662 = vmatmul.mubr.f32.gmra.mrb[0].mxu0 %v580
  %v663 = vpop.f32.mrb[0].mxu0
  %v664 = vadd.f32 0.0, %v663
  %v665 = vpop.f32.mrb[0].mxu0
  %666 = vmatprep.mubr.f32.mxu0 0.0
  %667 = vmatmul.mubr.f32.gmra.mrb[0].mxu0 %v583
  %v668 = vpop.f32.mrb[0].mxu0
  %v669 = vadd.f32 0.0, %v668
  %v670 = vpop.f32.mrb[0].mxu0
  %671 = vmatprep.mubr.f32.mxu0 0.0
  %672 = vmatmul.mubr.f32.gmra.mrb[0].mxu0 %v586
  %v673 = vpop.f32.mrb[0].mxu0
  %v674 = vadd.f32 0.0, %v673
  %v675 = vpop.f32.mrb[0].mxu0
  %676 = vmatprep.mubr.f32.mxu0 0.0
  %677 = vmatmul.mubr.f32.gmra.mrb[0].mxu0 %v589
  %v678 = vpop.f32.mrb[0].mxu0
  %v679 = vadd.f32 0.0, %v678
  %v680 = vpop.f32.mrb[0].mxu0
  %681 = vmatprep.mubr.f32.mxu0 0.0
  %682 = vmatmul.mubr.f32.gmra.mrb[0].mxu0 %v592
  %v683 = vpop.f32.mrb[0].mxu0
  %v684 = vadd.f32 0.0, %v683
  %v685 = vpop.f32.mrb[0].mxu0
  %686 = vdwg.mxu0
  %v687 = vmax.f32 %v664, 0.0
  %v688 = vmax.f32 %v669, 0.0
  %v689 = vmax.f32 %v674, 0.0
  %v690 = vmax.f32 %v679, 0.0
  %v691 = vmax.f32 %v684, 0.0
  %v693 = vsel %vm578, %v38, 0
  %v696 = vsel %vm479, %v691, 0
  %698 = vmatprep.subr.mxu0 0.0
  %699 = vmatpush1.msra.mxu0 %v687
  %700 = vmatprep.subr.mxu0 0.0
  %701 = vmatpush1.msra.mxu0 %v688
  %702 = vmatprep.subr.mxu0 0.0
  %703 = vmatpush1.msra.mxu0 %v689
  %704 = vmatprep.subr.mxu0 0.0
  %705 = vmatpush1.msra.mxu0 %v690
  %706 = vmatprep.subr.mxu0 0.0
  %707 = vmatpush1.msra.mxu0 %v696
  %708 = vmatprep.subr.mxu0 0.0
  %709 = vmatpush1.msra.mxu0 0.0
  %710 = vmatprep.subr.mxu0 0.0
  %711 = vmatpush1.msra.mxu0 0.0
  %712 = vmatprep.subr.mxu0 0.0
  %713 = vmatpush1.msra.mxu0 0.0
  %714 = vmatprep.subr.mxu0 0.0
  %715 = vmatpush1.msra.mxu0 0.0
  %716 = vmatprep.subr.mxu0 0.0
  %717 = vmatpush1.msra.mxu0 0.0
  %718 = vmatprep.subr.mxu0 0.0
  %719 = vmatpush1.msra.mxu0 0.0
  %720 = vmatprep.subr.mxu0 0.0
  %721 = vmatpush1.msra.mxu0 0.0
  %722 = vmatprep.subr.mxu0 0.0
  %723 = vmatpush1.msra.mxu0 0.0
  %724 = vmatprep.subr.mxu0 0.0
  %725 = vmatpush1.msra.mxu0 0.0
  %726 = vmatprep.subr.mxu0 0.0
  %727 = vmatpush1.msra.mxu0 0.0
  %728 = vmatprep.subr.mxu0 0.0
  %729 = vmatpush1.msra.mxu0 0.0
  %730 = vmatprep.subr.mxu0 0.0
  %731 = vmatpush1.msra.mxu0 0.0
  %732 = vmatprep.subr.mxu0 0.0
  %733 = vmatpush1.msra.mxu0 0.0
  %734 = vmatprep.subr.mxu0 0.0
  %735 = vmatpush1.msra.mxu0 0.0
  %736 = vmatprep.subr.mxu0 0.0
  %737 = vmatpush1.msra.mxu0 0.0
  %738 = vmatprep.subr.mxu0 0.0
  %739 = vmatpush1.msra.mxu0 0.0
  %740 = vmatprep.subr.mxu0 0.0
  %741 = vmatpush1.msra.mxu0 0.0
  %742 = vmatprep.subr.mxu0 0.0
  %743 = vmatpush1.msra.mxu0 0.0
  %744 = vmatprep.subr.mxu0 0.0
  %745 = vmatpush1.msra.mxu0 0.0
  %746 = vmatprep.subr.mxu0 0.0
  %747 = vmatpush1.msra.mxu0 0.0
  %748 = vmatprep.subr.mxu0 0.0
  %749 = vmatpush1.msra.mxu0 0.0
  %750 = vmatprep.subr.mxu0 0.0
  %751 = vmatpush1.msra.mxu0 0.0
  %752 = vmatprep.subr.mxu0 0.0
  %753 = vmatpush1.msra.mxu0 0.0
  %754 = vmatprep.subr.mxu0 0.0
  %755 = vmatpush1.msra.mxu0 0.0
  %756 = vmatprep.subr.mxu0 0.0
  %757 = vmatpush1.msra.mxu0 0.0
  %758 = vmatprep.subr.mxu0 0.0
  %759 = vmatpush1.msra.mxu0 0.0
  %760 = vmatprep.subr.mxu0 0.0
  %761 = vmatpush1.msra.mxu0 0.0
  %762 = vmatprep.mubr.f32.mxu0 0.0
  %763 = vmatmul.mubr.f32.gmra.mrb[0].mxu0 %v693
  %v764 = vpop.f32.mrb[0].mxu0
  %v765 = vadd.f32 0.0, %v764
  %v766 = vpop.f32.mrb[0].mxu0
  %767 = vdwg.mxu0
  %v768 = vmax.f32 %v765, 0.0
  %v769 = vxor.u32 %v765, 2147483648
  %v770 = vmul.f32 %v769, 1.442695
  %v771 = vpow.pop %v770
  %v772 = vadd.f32 %v771, 1.0
  %v773 = vrcp.pop %v772
  %v774 = vmul.f32 1.0, %v773
  %v775 = vmul.f32 %v768, 0.55714285
  %v776 = vsub.f32 0.0, %v775
  %v777 = vmul.f32 %v776, 1.442695
  %v778 = vpow.pop %v777
  %v779 = vsub.f32 1.0, %v778
  %v780 = vlaneseq
  %v781 = vshrl.u32 %v780, 7
  %v782 = vsub.s32 0, %v781
  %v783 = vrot.slane %v779, %v782
  %v784 = vmul.f32 %v783, %v774
  %v785 = vadd.f32 %v784, 0.0
  %v786 = vmul.f32 %v779, 0.1
  %v787 = vadd.f32 %v786, 0.0
  %v788 = vmul.f32 %v24, 0.6571429
  %v789 = vmul.f32 %v25, 0.6571429
  %v790 = vmul.f32 %v26, 0.6571429
  %v791 = vmul.f32 %v27, 0.6571429
  %v792 = vadd.f32 %v20, %v788
  %v793 = vadd.f32 %v21, %v789
  %v794 = vadd.f32 %v22, %v790
  %v795 = vadd.f32 %v23, %v791
  %v796 = vand.u32 2147483647, %v792
  %vm797 = vcmp.le.f32.partialorder %v796, 0.7853982
  %vm798 = vcmp.lt.s32.totalorder %v792, 0
  %v799 = vand.u32 %v792, 2139095040
  %v800 = vshrl.u32 %v799, 23
  %v801 = vsub.s32 %v800, 127
  %v802 = vand.u32 2147483647, %v792
  %v803 = vand.u32 %v802, 8388607
  %v804 = vor.u32 %v803, 8388608
  %v805 = vsub.s32 0, %v804
  %v806 = vadd.s32 %v801, 1
  %vm807 = vcmp.gt.s32.totalorder %v806, 0
  %v808 = vsel %vm807, %v806, 0
  %v809 = vshrl.u32 %v808, 5
  %v810 = vand.u32 %v808, 31
  %v811 = vsub.s32 32, %v810
  %v812 = vshrl.u32 683565275, %v811
  %v813 = vshll.u32 683565275, %v810
  %v814 = vshrl.u32 2475754826, %v811
  %v815 = vor.u32 %v813, %v814
  %v816 = vshll.u32 2475754826, %v810
  %v817 = vshrl.u32 2131351028, %v811
  %v818 = vor.u32 %v816, %v817
  %v819 = vshll.u32 2131351028, %v810
  %v820 = vshrl.u32 2102212464, %v811
  %v821 = vor.u32 %v819, %v820
  %v822 = vshll.u32 2102212464, %v810
  %v823 = vshrl.u32 920167782, %v811
  %v824 = vor.u32 %v822, %v823
  %v825 = vshll.u32 920167782, %v810
  %v826 = vshrl.u32 1326507024, %v811
  %v827 = vor.u32 %v825, %v826
  %vm828 = vcmp.lt.s32.totalorder %v809, 1
  %vm829 = vcmp.lt.s32.totalorder %v809, 2
  %vm830 = vcmp.lt.s32.totalorder %v809, 3
  %vm831 = vcmp.lt.s32.totalorder %v809, 4
  %v832 = vsel %vm828, %v812, %v815
  %v833 = vsel %vm831, %v821, 2102212464
  %v834 = vsel %vm830, %v818, %v833
  %v835 = vsel %vm829, %v832, %v834
  %v836 = vsel %vm828, %v815, %v818
  %v837 = vsel %vm831, %v824, 920167782
  %v838 = vsel %vm830, %v821, %v837
  %v839 = vsel %vm829, %v836, %v838
  %v840 = vsel %vm828, %v818, %v821
  %v841 = vsel %vm831, %v827, 1326507024
  %v842 = vsel %vm830, %v824, %v841
  %v843 = vsel %vm829, %v840, %v842
  %v844 = vshll.u32 %v804, 8
  %v845 = vmul.u32.u64.compose %v844, %v843
  %v846 = vextract.low.u32 %v845
  %v847 = vextract.high.u32 %v845
  %v848 = vmul.u32.u64.compose %v844, %v839
  %v849 = vextract.low.u32 %v848
  %v850 = vextract.high.u32 %v848
  %v851 = vmul.u32 %v844, %v835
  %v852 = vadd.s32 %v847, %v849
  %vm853 = vc.u32 %v847, %v849
  %v854 = vadd.s32 %v850, 1
  %v855 = vsel %vm853, %v854, %v850
  %v856 = vadd.s32 %v851, %v855
  %v857 = vadd.s32 %v856, 536870912
  %v858 = vshrl.u32 %v857, 30
  %v859 = vshll.u32 %v858, 30
  %v860 = vsub.s32 %v856, %v859
  %vm861 = vcmp.lt.s32.totalorder %v860, 0
  %v862 = vsub.s32 0, %v860
  %v863 = vsel %vm861, %v862, %v860
  %v864 = vclz %v863
  %v865 = vsub.s32 %v864, 2
  %vm866 = vcmp.gt.s32.totalorder 0, %v865
  %v867 = vsel %vm866, 0, %v865
  %v868 = vsub.s32 32, %v867
  %v869 = vshll.u32 %v860, %v867
  %v870 = vshrl.u32 %v852, %v868
  %v871 = vor.u32 %v869, %v870
  %v872 = vsub.s32 4294967266, %v867
  %v873 = vadd.s32 %v872, 127
  %v874 = vshll.u32 %v873, 23
  %v875 = vor.u32 4788187, %v874
  %v876 = vand.u32 2147483647, %v875
  %v878 = vcvt.s32.f32 %v871
  %v879 = vmul.f32 %v878, %v876
  %v880 = vxor.u32 %v879, 2147483648
  %v881 = vsel %vm798, %v880, %v879
  %v882 = vsub.s32 4, %v858
  %v883 = vsel %vm798, %v882, %v858
  %v884 = vsel %vm797, %v792, %v881
  %v885 = vsel %vm797, 0, %v883
  %v886 = vcosq.f32.pop %v884
  %v887 = vsinq.f32.pop %v884
  %vm888 = vweird.f32 %v792
  %v889 = vadd.s32 %v885, 3
  %v890 = vand.u32 %v889, 3
  %vm891 = vcmp.lt.s32.totalorder %v890, 2
  %vm892 = vcmp.eq.s32.totalorder %v890, 0
  %v893 = vxor.u32 %v887, 2147483648
  %v894 = vsel %vm892, %v886, %v893
  %vm895 = vcmp.eq.s32.totalorder %v890, 2
  %v896 = vxor.u32 %v886, 2147483648
  %v897 = vsel %vm895, %v896, %v887
  %v898 = vsel %vm891, %v894, %v897
  %v899 = vsel %vm888, nan, %v898
  %v900 = vand.u32 2147483647, %v793
  %vm901 = vcmp.le.f32.partialorder %v900, 0.7853982
  %vm902 = vcmp.lt.s32.totalorder %v793, 0
  %v903 = vand.u32 %v793, 2139095040
  %v904 = vshrl.u32 %v903, 23
  %v905 = vsub.s32 %v904, 127
  %v906 = vand.u32 2147483647, %v793
  %v907 = vand.u32 %v906, 8388607
  %v908 = vor.u32 %v907, 8388608
  %v909 = vsub.s32 0, %v908
  %v910 = vadd.s32 %v905, 1
  %vm911 = vcmp.gt.s32.totalorder %v910, 0
  %v912 = vsel %vm911, %v910, 0
  %v913 = vshrl.u32 %v912, 5
  %v914 = vand.u32 %v912, 31
  %v915 = vsub.s32 32, %v914
  %v916 = vshrl.u32 683565275, %v915
  %v917 = vshll.u32 683565275, %v914
  %v918 = vshrl.u32 2475754826, %v915
  %v919 = vor.u32 %v917, %v918
  %v920 = vshll.u32 2475754826, %v914
  %v921 = vshrl.u32 2131351028, %v915
  %v922 = vor.u32 %v920, %v921
  %v923 = vshll.u32 2131351028, %v914
  %v924 = vshrl.u32 2102212464, %v915
  %v925 = vor.u32 %v923, %v924
  %v926 = vshll.u32 2102212464, %v914
  %v927 = vshrl.u32 920167782, %v915
  %v928 = vor.u32 %v926, %v927
  %v929 = vshll.u32 920167782, %v914
  %v930 = vshrl.u32 1326507024, %v915
  %v931 = vor.u32 %v929, %v930
  %vm932 = vcmp.lt.s32.totalorder %v913, 1
  %vm933 = vcmp.lt.s32.totalorder %v913, 2
  %vm934 = vcmp.lt.s32.totalorder %v913, 3
  %vm935 = vcmp.lt.s32.totalorder %v913, 4
  %v936 = vsel %vm932, %v916, %v919
  %v937 = vsel %vm935, %v925, 2102212464
  %v938 = vsel %vm934, %v922, %v937
  %v939 = vsel %vm933, %v936, %v938
  %v940 = vsel %vm932, %v919, %v922
  %v941 = vsel %vm935, %v928, 920167782
  %v942 = vsel %vm934, %v925, %v941
  %v943 = vsel %vm933, %v940, %v942
  %v944 = vsel %vm932, %v922, %v925
  %v945 = vsel %vm935, %v931, 1326507024
  %v946 = vsel %vm934, %v928, %v945
  %v947 = vsel %vm933, %v944, %v946
  %v948 = vshll.u32 %v908, 8
  %v949 = vmul.u32.u64.compose %v948, %v947
  %v950 = vextract.low.u32 %v949
  %v951 = vextract.high.u32 %v949
  %v952 = vmul.u32.u64.compose %v948, %v943
  %v953 = vextract.low.u32 %v952
  %v954 = vextract.high.u32 %v952
  %v955 = vmul.u32 %v948, %v939
  %v956 = vadd.s32 %v951, %v953
  %vm957 = vc.u32 %v951, %v953
  %v958 = vadd.s32 %v954, 1
  %v959 = vsel %vm957, %v958, %v954
  %v960 = vadd.s32 %v955, %v959
  %v961 = vadd.s32 %v960, 536870912
  %v962 = vshrl.u32 %v961, 30
  %v963 = vshll.u32 %v962, 30
  %v964 = vsub.s32 %v960, %v963
  %vm965 = vcmp.lt.s32.totalorder %v964, 0
  %v966 = vsub.s32 0, %v964
  %v967 = vsel %vm965, %v966, %v964
  %v968 = vclz %v967
  %v969 = vsub.s32 %v968, 2
  %vm970 = vcmp.gt.s32.totalorder 0, %v969
  %v971 = vsel %vm970, 0, %v969
  %v972 = vsub.s32 32, %v971
  %v973 = vshll.u32 %v964, %v971
  %v974 = vshrl.u32 %v956, %v972
  %v975 = vor.u32 %v973, %v974
  %v976 = vsub.s32 4294967266, %v971
  %v977 = vadd.s32 %v976, 127
  %v978 = vshll.u32 %v977, 23
  %v979 = vor.u32 4788187, %v978
  %v980 = vand.u32 2147483647, %v979
  %v982 = vcvt.s32.f32 %v975
  %v983 = vmul.f32 %v982, %v980
  %v984 = vxor.u32 %v983, 2147483648
  %v985 = vsel %vm902, %v984, %v983
  %v986 = vsub.s32 4, %v962
  %v987 = vsel %vm902, %v986, %v962
  %v988 = vsel %vm901, %v793, %v985
  %v989 = vsel %vm901, 0, %v987
  %v990 = vcosq.f32.pop %v988
  %v991 = vsinq.f32.pop %v988
  %vm992 = vweird.f32 %v793
  %v993 = vadd.s32 %v989, 3
  %v994 = vand.u32 %v993, 3
  %vm995 = vcmp.lt.s32.totalorder %v994, 2
  %vm996 = vcmp.eq.s32.totalorder %v994, 0
  %v997 = vxor.u32 %v991, 2147483648
  %v998 = vsel %vm996, %v990, %v997
  %vm999 = vcmp.eq.s32.totalorder %v994, 2
  %v1000 = vxor.u32 %v990, 2147483648
  %v1001 = vsel %vm999, %v1000, %v991
  %v1002 = vsel %vm995, %v998, %v1001
  %v1003 = vsel %vm992, nan, %v1002
  %v1004 = vand.u32 2147483647, %v794
  %vm1005 = vcmp.le.f32.partialorder %v1004, 0.7853982
  %vm1006 = vcmp.lt.s32.totalorder %v794, 0
  %v1007 = vand.u32 %v794, 2139095040
  %v1008 = vshrl.u32 %v1007, 23
  %v1009 = vsub.s32 %v1008, 127
  %v1010 = vand.u32 2147483647, %v794
  %v1011 = vand.u32 %v1010, 8388607
  %v1012 = vor.u32 %v1011, 8388608
  %v1013 = vsub.s32 0, %v1012
  %v1014 = vadd.s32 %v1009, 1
  %vm1015 = vcmp.gt.s32.totalorder %v1014, 0
  %v1016 = vsel %vm1015, %v1014, 0
  %v1017 = vshrl.u32 %v1016, 5
  %v1018 = vand.u32 %v1016, 31
  %v1019 = vsub.s32 32, %v1018
  %v1020 = vshrl.u32 683565275, %v1019
  %v1021 = vshll.u32 683565275, %v1018
  %v1022 = vshrl.u32 2475754826, %v1019
  %v1023 = vor.u32 %v1021, %v1022
  %v1024 = vshll.u32 2475754826, %v1018
  %v1025 = vshrl.u32 2131351028, %v1019
  %v1026 = vor.u32 %v1024, %v1025
  %v1027 = vshll.u32 2131351028, %v1018
  %v1028 = vshrl.u32 2102212464, %v1019
  %v1029 = vor.u32 %v1027, %v1028
  %v1030 = vshll.u32 2102212464, %v1018
  %v1031 = vshrl.u32 920167782, %v1019
  %v1032 = vor.u32 %v1030, %v1031
  %v1033 = vshll.u32 920167782, %v1018
  %v1034 = vshrl.u32 1326507024, %v1019
  %v1035 = vor.u32 %v1033, %v1034
  %vm1036 = vcmp.lt.s32.totalorder %v1017, 1
  %vm1037 = vcmp.lt.s32.totalorder %v1017, 2
  %vm1038 = vcmp.lt.s32.totalorder %v1017, 3
  %vm1039 = vcmp.lt.s32.totalorder %v1017, 4
  %v1040 = vsel %vm1036, %v1020, %v1023
  %v1041 = vsel %vm1039, %v1029, 2102212464
  %v1042 = vsel %vm1038, %v1026, %v1041
  %v1043 = vsel %vm1037, %v1040, %v1042
  %v1044 = vsel %vm1036, %v1023, %v1026
  %v1045 = vsel %vm1039, %v1032, 920167782
  %v1046 = vsel %vm1038, %v1029, %v1045
  %v1047 = vsel %vm1037, %v1044, %v1046
  %v1048 = vsel %vm1036, %v1026, %v1029
  %v1049 = vsel %vm1039, %v1035, 1326507024
  %v1050 = vsel %vm1038, %v1032, %v1049
  %v1051 = vsel %vm1037, %v1048, %v1050
  %v1052 = vshll.u32 %v1012, 8
  %v1053 = vmul.u32.u64.compose %v1052, %v1051
  %v1054 = vextract.low.u32 %v1053
  %v1055 = vextract.high.u32 %v1053
  %v1056 = vmul.u32.u64.compose %v1052, %v1047
  %v1057 = vextract.low.u32 %v1056
  %v1058 = vextract.high.u32 %v1056
  %v1059 = vmul.u32 %v1052, %v1043
  %v1060 = vadd.s32 %v1055, %v1057
  %vm1061 = vc.u32 %v1055, %v1057
  %v1062 = vadd.s32 %v1058, 1
  %v1063 = vsel %vm1061, %v1062, %v1058
  %v1064 = vadd.s32 %v1059, %v1063
  %v1065 = vadd.s32 %v1064, 536870912
  %v1066 = vshrl.u32 %v1065, 30
  %v1067 = vshll.u32 %v1066, 30
  %v1068 = vsub.s32 %v1064, %v1067
  %vm1069 = vcmp.lt.s32.totalorder %v1068, 0
  %v1070 = vsub.s32 0, %v1068
  %v1071 = vsel %vm1069, %v1070, %v1068
  %v1072 = vclz %v1071
  %v1073 = vsub.s32 %v1072, 2
  %vm1074 = vcmp.gt.s32.totalorder 0, %v1073
  %v1075 = vsel %vm1074, 0, %v1073
  %v1076 = vsub.s32 32, %v1075
  %v1077 = vshll.u32 %v1068, %v1075
  %v1078 = vshrl.u32 %v1060, %v1076
  %v1079 = vor.u32 %v1077, %v1078
  %v1080 = vsub.s32 4294967266, %v1075
  %v1081 = vadd.s32 %v1080, 127
  %v1082 = vshll.u32 %v1081, 23
  %v1083 = vor.u32 4788187, %v1082
  %v1084 = vand.u32 2147483647, %v1083
  %v1086 = vcvt.s32.f32 %v1079
  %v1087 = vmul.f32 %v1086, %v1084
  %v1088 = vxor.u32 %v1087, 2147483648
  %v1089 = vsel %vm1006, %v1088, %v1087
  %v1090 = vsub.s32 4, %v1066
  %v1091 = vsel %vm1006, %v1090, %v1066
  %v1092 = vsel %vm1005, %v794, %v1089
  %v1093 = vsel %vm1005, 0, %v1091
  %v1094 = vcosq.f32.pop %v1092
  %v1095 = vsinq.f32.pop %v1092
  %vm1096 = vweird.f32 %v794
  %v1097 = vadd.s32 %v1093, 3
  %v1098 = vand.u32 %v1097, 3
  %vm1099 = vcmp.lt.s32.totalorder %v1098, 2
  %vm1100 = vcmp.eq.s32.totalorder %v1098, 0
  %v1101 = vxor.u32 %v1095, 2147483648
  %v1102 = vsel %vm1100, %v1094, %v1101
  %vm1103 = vcmp.eq.s32.totalorder %v1098, 2
  %v1104 = vxor.u32 %v1094, 2147483648
  %v1105 = vsel %vm1103, %v1104, %v1095
  %v1106 = vsel %vm1099, %v1102, %v1105
  %v1107 = vsel %vm1096, nan, %v1106
  %v1108 = vand.u32 2147483647, %v795
  %vm1109 = vcmp.le.f32.partialorder %v1108, 0.7853982
  %vm1110 = vcmp.lt.s32.totalorder %v795, 0
  %v1111 = vand.u32 %v795, 2139095040
  %v1112 = vshrl.u32 %v1111, 23
  %v1113 = vsub.s32 %v1112, 127
  %v1114 = vand.u32 2147483647, %v795
  %v1115 = vand.u32 %v1114, 8388607
  %v1116 = vor.u32 %v1115, 8388608
  %v1117 = vsub.s32 0, %v1116
  %v1118 = vadd.s32 %v1113, 1
  %vm1119 = vcmp.gt.s32.totalorder %v1118, 0
  %v1120 = vsel %vm1119, %v1118, 0
  %v1121 = vshrl.u32 %v1120, 5
  %v1122 = vand.u32 %v1120, 31
  %v1123 = vsub.s32 32, %v1122
  %v1124 = vshrl.u32 683565275, %v1123
  %v1125 = vshll.u32 683565275, %v1122
  %v1126 = vshrl.u32 2475754826, %v1123
  %v1127 = vor.u32 %v1125, %v1126
  %v1128 = vshll.u32 2475754826, %v1122
  %v1129 = vshrl.u32 2131351028, %v1123
  %v1130 = vor.u32 %v1128, %v1129
  %v1131 = vshll.u32 2131351028, %v1122
  %v1132 = vshrl.u32 2102212464, %v1123
  %v1133 = vor.u32 %v1131, %v1132
  %v1134 = vshll.u32 2102212464, %v1122
  %v1135 = vshrl.u32 920167782, %v1123
  %v1136 = vor.u32 %v1134, %v1135
  %v1137 = vshll.u32 920167782, %v1122
  %v1138 = vshrl.u32 1326507024, %v1123
  %v1139 = vor.u32 %v1137, %v1138
  %vm1140 = vcmp.lt.s32.totalorder %v1121, 1
  %vm1141 = vcmp.lt.s32.totalorder %v1121, 2
  %vm1142 = vcmp.lt.s32.totalorder %v1121, 3
  %vm1143 = vcmp.lt.s32.totalorder %v1121, 4
  %v1144 = vsel %vm1140, %v1124, %v1127
  %v1145 = vsel %vm1143, %v1133, 2102212464
  %v1146 = vsel %vm1142, %v1130, %v1145
  %v1147 = vsel %vm1141, %v1144, %v1146
  %v1148 = vsel %vm1140, %v1127, %v1130
  %v1149 = vsel %vm1143, %v1136, 920167782
  %v1150 = vsel %vm1142, %v1133, %v1149
  %v1151 = vsel %vm1141, %v1148, %v1150
  %v1152 = vsel %vm1140, %v1130, %v1133
  %v1153 = vsel %vm1143, %v1139, 1326507024
  %v1154 = vsel %vm1142, %v1136, %v1153
  %v1155 = vsel %vm1141, %v1152, %v1154
  %v1156 = vshll.u32 %v1116, 8
  %v1157 = vmul.u32.u64.compose %v1156, %v1155
  %v1158 = vextract.low.u32 %v1157
  %v1159 = vextract.high.u32 %v1157
  %v1160 = vmul.u32.u64.compose %v1156, %v1151
  %v1161 = vextract.low.u32 %v1160
  %v1162 = vextract.high.u32 %v1160
  %v1163 = vmul.u32 %v1156, %v1147
  %v1164 = vadd.s32 %v1159, %v1161
  %vm1165 = vc.u32 %v1159, %v1161
  %v1166 = vadd.s32 %v1162, 1
  %v1167 = vsel %vm1165, %v1166, %v1162
  %v1168 = vadd.s32 %v1163, %v1167
  %v1169 = vadd.s32 %v1168, 536870912
  %v1170 = vshrl.u32 %v1169, 30
  %v1171 = vshll.u32 %v1170, 30
  %v1172 = vsub.s32 %v1168, %v1171
  %vm1173 = vcmp.lt.s32.totalorder %v1172, 0
  %v1174 = vsub.s32 0, %v1172
  %v1175 = vsel %vm1173, %v1174, %v1172
  %v1176 = vclz %v1175
  %v1177 = vsub.s32 %v1176, 2
  %vm1178 = vcmp.gt.s32.totalorder 0, %v1177
  %v1179 = vsel %vm1178, 0, %v1177
  %v1180 = vsub.s32 32, %v1179
  %v1181 = vshll.u32 %v1172, %v1179
  %v1182 = vshrl.u32 %v1164, %v1180
  %v1183 = vor.u32 %v1181, %v1182
  %v1184 = vsub.s32 4294967266, %v1179
  %v1185 = vadd.s32 %v1184, 127
  %v1186 = vshll.u32 %v1185, 23
  %v1187 = vor.u32 4788187, %v1186
  %v1188 = vand.u32 2147483647, %v1187
  %v1190 = vcvt.s32.f32 %v1183
  %v1191 = vmul.f32 %v1190, %v1188
  %v1192 = vxor.u32 %v1191, 2147483648
  %v1193 = vsel %vm1110, %v1192, %v1191
  %v1194 = vsub.s32 4, %v1170
  %v1195 = vsel %vm1110, %v1194, %v1170
  %v1196 = vsel %vm1109, %v795, %v1193
  %v1197 = vsel %vm1109, 0, %v1195
  %v1198 = vcosq.f32.pop %v1196
  %v1199 = vsinq.f32.pop %v1196
  %vm1200 = vweird.f32 %v795
  %v1201 = vadd.s32 %v1197, 3
  %v1202 = vand.u32 %v1201, 3
  %vm1203 = vcmp.lt.s32.totalorder %v1202, 2
  %vm1204 = vcmp.eq.s32.totalorder %v1202, 0
  %v1205 = vxor.u32 %v1199, 2147483648
  %v1206 = vsel %vm1204, %v1198, %v1205
  %vm1207 = vcmp.eq.s32.totalorder %v1202, 2
  %v1208 = vxor.u32 %v1198, 2147483648
  %v1209 = vsel %vm1207, %v1208, %v1199
  %v1210 = vsel %vm1203, %v1206, %v1209
  %v1211 = vsel %vm1200, nan, %v1210
  %v1213 = vsel %vm479, %v1211, 0
  %1215 = vmatprep.subr.mxu0 0.0
  %1216 = vmatpush1.msra.mxu0 %v899
  %1217 = vmatprep.subr.mxu0 0.0
  %1218 = vmatpush1.msra.mxu0 %v1003
  %1219 = vmatprep.subr.mxu0 0.0
  %1220 = vmatpush1.msra.mxu0 %v1107
  %1221 = vmatprep.subr.mxu0 0.0
  %1222 = vmatpush1.msra.mxu0 %v1213
  %1223 = vmatprep.subr.mxu0 0.0
  %1224 = vmatpush1.msra.mxu0 0.0
  %1225 = vmatprep.subr.mxu0 0.0
  %1226 = vmatpush1.msra.mxu0 0.0
  %1227 = vmatprep.subr.mxu0 0.0
  %1228 = vmatpush1.msra.mxu0 0.0
  %1229 = vmatprep.subr.mxu0 0.0
  %1230 = vmatpush1.msra.mxu0 0.0
  %1231 = vmatprep.subr.mxu0 0.0
  %1232 = vmatpush1.msra.mxu0 0.0
  %1233 = vmatprep.subr.mxu0 0.0
  %1234 = vmatpush1.msra.mxu0 0.0
  %1235 = vmatprep.subr.mxu0 0.0
  %1236 = vmatpush1.msra.mxu0 0.0
  %1237 = vmatprep.subr.mxu0 0.0
  %1238 = vmatpush1.msra.mxu0 0.0
  %1239 = vmatprep.subr.mxu0 0.0
  %1240 = vmatpush1.msra.mxu0 0.0
  %1241 = vmatprep.subr.mxu0 0.0
  %1242 = vmatpush1.msra.mxu0 0.0
  %1243 = vmatprep.subr.mxu0 0.0
  %1244 = vmatpush1.msra.mxu0 0.0
  %1245 = vmatprep.subr.mxu0 0.0
  %1246 = vmatpush1.msra.mxu0 0.0
  %1247 = vmatprep.subr.mxu0 0.0
  %1248 = vmatpush1.msra.mxu0 0.0
  %1249 = vmatprep.subr.mxu0 0.0
  %1250 = vmatpush1.msra.mxu0 0.0
  %1251 = vmatprep.subr.mxu0 0.0
  %1252 = vmatpush1.msra.mxu0 0.0
  %1253 = vmatprep.subr.mxu0 0.0
  %1254 = vmatpush1.msra.mxu0 0.0
  %1255 = vmatprep.subr.mxu0 0.0
  %1256 = vmatpush1.msra.mxu0 0.0
  %1257 = vmatprep.subr.mxu0 0.0
  %1258 = vmatpush1.msra.mxu0 0.0
  %1259 = vmatprep.subr.mxu0 0.0
  %1260 = vmatpush1.msra.mxu0 0.0
  %1261 = vmatprep.subr.mxu0 0.0
  %1262 = vmatpush1.msra.mxu0 0.0
  %1263 = vmatprep.subr.mxu0 0.0
  %1264 = vmatpush1.msra.mxu0 0.0
  %1265 = vmatprep.subr.mxu0 0.0
  %1266 = vmatpush1.msra.mxu0 0.0
  %1267 = vmatprep.subr.mxu0 0.0
  %1268 = vmatpush1.msra.mxu0 0.0
  %1269 = vmatprep.subr.mxu0 0.0
  %1270 = vmatpush1.msra.mxu0 0.0
  %1271 = vmatprep.subr.mxu0 0.0
  %1272 = vmatpush1.msra.mxu0 0.0
  %1273 = vmatprep.subr.mxu0 0.0
  %1274 = vmatpush1.msra.mxu0 0.0
  %1275 = vmatprep.subr.mxu0 0.0
  %1276 = vmatpush1.msra.mxu0 0.0
  %1277 = vmatprep.subr.mxu0 0.0
  %1278 = vmatpush1.msra.mxu0 0.0
  %1279 = vmatprep.mubr.f32.mxu0 0.0
  %1280 = vmatmul.mubr.f32.gmra.mrb[0].mxu0 %v465
  %v1281 = vpop.f32.mrb[0].mxu0
  %v1282 = vadd.f32 0.0, %v1281
  %v1283 = vpop.f32.mrb[0].mxu0
  %1284 = vmatprep.mubr.f32.mxu0 0.0
  %1285 = vmatmul.mubr.f32.gmra.mrb[0].mxu0 %v468
  %v1286 = vpop.f32.mrb[0].mxu0
  %v1287 = vadd.f32 0.0, %v1286
  %v1288 = vpop.f32.mrb[0].mxu0
  %1289 = vmatprep.mubr.f32.mxu0 0.0
  %1290 = vmatmul.mubr.f32.gmra.mrb[0].mxu0 %v471
  %v1291 = vpop.f32.mrb[0].mxu0
  %v1292 = vadd.f32 0.0, %v1291
  %v1293 = vpop.f32.mrb[0].mxu0
  %1294 = vmatprep.mubr.f32.mxu0 0.0
  %1295 = vmatmul.mubr.f32.gmra.mrb[0].mxu0 %v474
  %v1296 = vpop.f32.mrb[0].mxu0
  %v1297 = vadd.f32 0.0, %v1296
  %v1298 = vpop.f32.mrb[0].mxu0
  %1299 = vmatprep.mubr.f32.mxu0 0.0
  %1300 = vmatmul.mubr.f32.gmra.mrb[0].mxu0 %v477
  %v1301 = vpop.f32.mrb[0].mxu0
  %v1302 = vadd.f32 0.0, %v1301
  %v1303 = vpop.f32.mrb[0].mxu0
  %1304 = vdwg.mxu0
  %v1305 = vmax.f32 %v1282, 0.0
  %v1306 = vmax.f32 %v1287, 0.0
  %v1307 = vmax.f32 %v1292, 0.0
  %v1308 = vmax.f32 %v1297, 0.0
  %v1309 = vmax.f32 %v1302, 0.0
  %v1311 = vsel %vm479, %v1309, 0
  %1313 = vmatprep.subr.mxu0 0.0
  %1314 = vmatpush1.msra.mxu0 %v1305
  %1315 = vmatprep.subr.mxu0 0.0
  %1316 = vmatpush1.msra.mxu0 %v1306
  %1317 = vmatprep.subr.mxu0 0.0
  %1318 = vmatpush1.msra.mxu0 %v1307
  %1319 = vmatprep.subr.mxu0 0.0
  %1320 = vmatpush1.msra.mxu0 %v1308
  %1321 = vmatprep.subr.mxu0 0.0
  %1322 = vmatpush1.msra.mxu0 %v1311
  %1323 = vmatprep.subr.mxu0 0.0
  %1324 = vmatpush1.msra.mxu0 0.0
  %1325 = vmatprep.subr.mxu0 0.0
  %1326 = vmatpush1.msra.mxu0 0.0
  %1327 = vmatprep.subr.mxu0 0.0
  %1328 = vmatpush1.msra.mxu0 0.0
  %1329 = vmatprep.subr.mxu0 0.0
  %1330 = vmatpush1.msra.mxu0 0.0
  %1331 = vmatprep.subr.mxu0 0.0
  %1332 = vmatpush1.msra.mxu0 0.0
  %1333 = vmatprep.subr.mxu0 0.0
  %1334 = vmatpush1.msra.mxu0 0.0
  %1335 = vmatprep.subr.mxu0 0.0
  %1336 = vmatpush1.msra.mxu0 0.0
  %1337 = vmatprep.subr.mxu0 0.0
  %1338 = vmatpush1.msra.mxu0 0.0
  %1339 = vmatprep.subr.mxu0 0.0
  %1340 = vmatpush1.msra.mxu0 0.0
  %1341 = vmatprep.subr.mxu0 0.0
  %1342 = vmatpush1.msra.mxu0 0.0
  %1343 = vmatprep.subr.mxu0 0.0
  %1344 = vmatpush1.msra.mxu0 0.0
  %1345 = vmatprep.subr.mxu0 0.0
  %1346 = vmatpush1.msra.mxu0 0.0
  %1347 = vmatprep.subr.mxu0 0.0
  %1348 = vmatpush1.msra.mxu0 0.0
  %1349 = vmatprep.subr.mxu0 0.0
  %1350 = vmatpush1.msra.mxu0 0.0
  %1351 = vmatprep.subr.mxu0 0.0
  %1352 = vmatpush1.msra.mxu0 0.0
  %1353 = vmatprep.subr.mxu0 0.0
  %1354 = vmatpush1.msra.mxu0 0.0
  %1355 = vmatprep.subr.mxu0 0.0
  %1356 = vmatpush1.msra.mxu0 0.0
  %1357 = vmatprep.subr.mxu0 0.0
  %1358 = vmatpush1.msra.mxu0 0.0
  %1359 = vmatprep.subr.mxu0 0.0
  %1360 = vmatpush1.msra.mxu0 0.0
  %1361 = vmatprep.subr.mxu0 0.0
  %1362 = vmatpush1.msra.mxu0 0.0
  %1363 = vmatprep.subr.mxu0 0.0
  %1364 = vmatpush1.msra.mxu0 0.0
  %1365 = vmatprep.subr.mxu0 0.0
  %1366 = vmatpush1.msra.mxu0 0.0
  %1367 = vmatprep.subr.mxu0 0.0
  %1368 = vmatpush1.msra.mxu0 0.0
  %1369 = vmatprep.subr.mxu0 0.0
  %1370 = vmatpush1.msra.mxu0 0.0
  %1371 = vmatprep.subr.mxu0 0.0
  %1372 = vmatpush1.msra.mxu0 0.0
  %1373 = vmatprep.subr.mxu0 0.0
  %1374 = vmatpush1.msra.mxu0 0.0
  %1375 = vmatprep.subr.mxu0 0.0
  %1376 = vmatpush1.msra.mxu0 0.0
  %1377 = vmatprep.mubr.f32.mxu0 0.0
  %1378 = vmatmul.mubr.f32.gmra.mrb[0].mxu0 %v580
  %v1379 = vpop.f32.mrb[0].mxu0
  %v1380 = vadd.f32 0.0, %v1379
  %v1381 = vpop.f32.mrb[0].mxu0
  %1382 = vmatprep.mubr.f32.mxu0 0.0
  %1383 = vmatmul.mubr.f32.gmra.mrb[0].mxu0 %v583
  %v1384 = vpop.f32.mrb[0].mxu0
  %v1385 = vadd.f32 0.0, %v1384
  %v1386 = vpop.f32.mrb[0].mxu0
  %1387 = vmatprep.mubr.f32.mxu0 0.0
  %1388 = vmatmul.mubr.f32.gmra.mrb[0].mxu0 %v586
  %v1389 = vpop.f32.mrb[0].mxu0
  %v1390 = vadd.f32 0.0, %v1389
  %v1391 = vpop.f32.mrb[0].mxu0
  %1392 = vmatprep.mubr.f32.mxu0 0.0
  %1393 = vmatmul.mubr.f32.gmra.mrb[0].mxu0 %v589
  %v1394 = vpop.f32.mrb[0].mxu0
  %v1395 = vadd.f32 0.0, %v1394
  %v1396 = vpop.f32.mrb[0].mxu0
  %1397 = vmatprep.mubr.f32.mxu0 0.0
  %1398 = vmatmul.mubr.f32.gmra.mrb[0].mxu0 %v592
  %v1399 = vpop.f32.mrb[0].mxu0
  %v1400 = vadd.f32 0.0, %v1399
  %v1401 = vpop.f32.mrb[0].mxu0
  %1402 = vdwg.mxu0
  %v1403 = vmax.f32 %v1380, 0.0
  %v1404 = vmax.f32 %v1385, 0.0
  %v1405 = vmax.f32 %v1390, 0.0
  %v1406 = vmax.f32 %v1395, 0.0
  %v1407 = vmax.f32 %v1400, 0.0
  %v1409 = vsel %vm479, %v1407, 0
  %1411 = vmatprep.subr.mxu0 0.0
  %1412 = vmatpush1.msra.mxu0 %v1403
  %1413 = vmatprep.subr.mxu0 0.0
  %1414 = vmatpush1.msra.mxu0 %v1404
  %1415 = vmatprep.subr.mxu0 0.0
  %1416 = vmatpush1.msra.mxu0 %v1405
  %1417 = vmatprep.subr.mxu0 0.0
  %1418 = vmatpush1.msra.mxu0 %v1406
  %1419 = vmatprep.subr.mxu0 0.0
  %1420 = vmatpush1.msra.mxu0 %v1409
  %1421 = vmatprep.subr.mxu0 0.0
  %1422 = vmatpush1.msra.mxu0 0.0
  %1423 = vmatprep.subr.mxu0 0.0
  %1424 = vmatpush1.msra.mxu0 0.0
  %1425 = vmatprep.subr.mxu0 0.0
  %1426 = vmatpush1.msra.mxu0 0.0
  %1427 = vmatprep.subr.mxu0 0.0
  %1428 = vmatpush1.msra.mxu0 0.0
  %1429 = vmatprep.subr.mxu0 0.0
  %1430 = vmatpush1.msra.mxu0 0.0
  %1431 = vmatprep.subr.mxu0 0.0
  %1432 = vmatpush1.msra.mxu0 0.0
  %1433 = vmatprep.subr.mxu0 0.0
  %1434 = vmatpush1.msra.mxu0 0.0
  %1435 = vmatprep.subr.mxu0 0.0
  %1436 = vmatpush1.msra.mxu0 0.0
  %1437 = vmatprep.subr.mxu0 0.0
  %1438 = vmatpush1.msra.mxu0 0.0
  %1439 = vmatprep.subr.mxu0 0.0
  %1440 = vmatpush1.msra.mxu0 0.0
  %1441 = vmatprep.subr.mxu0 0.0
  %1442 = vmatpush1.msra.mxu0 0.0
  %1443 = vmatprep.subr.mxu0 0.0
  %1444 = vmatpush1.msra.mxu0 0.0
  %1445 = vmatprep.subr.mxu0 0.0
  %1446 = vmatpush1.msra.mxu0 0.0
  %1447 = vmatprep.subr.mxu0 0.0
  %1448 = vmatpush1.msra.mxu0 0.0
  %1449 = vmatprep.subr.mxu0 0.0
  %1450 = vmatpush1.msra.mxu0 0.0
  %1451 = vmatprep.subr.mxu0 0.0
  %1452 = vmatpush1.msra.mxu0 0.0
  %1453 = vmatprep.subr.mxu0 0.0
  %1454 = vmatpush1.msra.mxu0 0.0
  %1455 = vmatprep.subr.mxu0 0.0
  %1456 = vmatpush1.msra.mxu0 0.0
  %1457 = vmatprep.subr.mxu0 0.0
  %1458 = vmatpush1.msra.mxu0 0.0
  %1459 = vmatprep.subr.mxu0 0.0
  %1460 = vmatpush1.msra.mxu0 0.0
  %1461 = vmatprep.subr.mxu0 0.0
  %1462 = vmatpush1.msra.mxu0 0.0
  %1463 = vmatprep.subr.mxu0 0.0
  %1464 = vmatpush1.msra.mxu0 0.0
  %1465 = vmatprep.subr.mxu0 0.0
  %1466 = vmatpush1.msra.mxu0 0.0
  %1467 = vmatprep.subr.mxu0 0.0
  %1468 = vmatpush1.msra.mxu0 0.0
  %1469 = vmatprep.subr.mxu0 0.0
  %1470 = vmatpush1.msra.mxu0 0.0
  %1471 = vmatprep.subr.mxu0 0.0
  %1472 = vmatpush1.msra.mxu0 0.0
  %1473 = vmatprep.subr.mxu0 0.0
  %1474 = vmatpush1.msra.mxu0 0.0
  %1475 = vmatprep.mubr.f32.mxu0 0.0
  %1476 = vmatmul.mubr.f32.gmra.mrb[0].mxu0 %v693
  %v1477 = vpop.f32.mrb[0].mxu0
  %v1478 = vadd.f32 0.0, %v1477
  %v1479 = vpop.f32.mrb[0].mxu0
  %1480 = vdwg.mxu0
  %v1481 = vmax.f32 %v1478, 0.0
  %v1482 = vxor.u32 %v1478, 2147483648
  %v1483 = vmul.f32 %v1482, 1.442695
  %v1484 = vpow.pop %v1483
  %v1485 = vadd.f32 %v1484, 1.0
  %v1486 = vrcp.pop %v1485
  %v1487 = vmul.f32 1.0, %v1486
  %v1488 = vmul.f32 %v1481, 0.55714285
  %v1489 = vsub.f32 0.0, %v1488
  %v1490 = vmul.f32 %v1489, 1.442695
  %v1491 = vpow.pop %v1490
  %v1492 = vsub.f32 1.0, %v1491
  %v1493 = vmul.f32 %v778, %v1492
  %v1494 = vlaneseq
  %v1495 = vshrl.u32 %v1494, 7
  %v1496 = vsub.s32 0, %v1495
  %v1497 = vrot.slane %v1493, %v1496
  %v1498 = vmul.f32 %v1497, %v1487
  %v1499 = vadd.f32 %v785, %v1498
  %v1500 = vmul.f32 %v1493, 0.6571429
  %v1501 = vadd.f32 %v787, %v1500
  %v1502 = vmul.f32 %v778, %v1491
  %v1503 = vmul.f32 %v24, 1.2142857
  %v1504 = vmul.f32 %v25, 1.2142857
  %v1505 = vmul.f32 %v26, 1.2142857
  %v1506 = vmul.f32 %v27, 1.2142857
  %v1507 = vadd.f32 %v20, %v1503
  %v1508 = vadd.f32 %v21, %v1504
  %v1509 = vadd.f32 %v22, %v1505
  %v1510 = vadd.f32 %v23, %v1506
  %v1511 = vand.u32 2147483647, %v1507
  %vm1512 = vcmp.le.f32.partialorder %v1511, 0.7853982
  %vm1513 = vcmp.lt.s32.totalorder %v1507, 0
  %v1514 = vand.u32 %v1507, 2139095040
  %v1515 = vshrl.u32 %v1514, 23
  %v1516 = vsub.s32 %v1515, 127
  %v1517 = vand.u32 2147483647, %v1507
  %v1518 = vand.u32 %v1517, 8388607
  %v1519 = vor.u32 %v1518, 8388608
  %v1520 = vsub.s32 0, %v1519
  %v1521 = vadd.s32 %v1516, 1
  %vm1522 = vcmp.gt.s32.totalorder %v1521, 0
  %v1523 = vsel %vm1522, %v1521, 0
  %v1524 = vshrl.u32 %v1523, 5
  %v1525 = vand.u32 %v1523, 31
  %v1526 = vsub.s32 32, %v1525
  %v1527 = vshrl.u32 683565275, %v1526
  %v1528 = vshll.u32 683565275, %v1525
  %v1529 = vshrl.u32 2475754826, %v1526
  %v1530 = vor.u32 %v1528, %v1529
  %v1531 = vshll.u32 2475754826, %v1525
  %v1532 = vshrl.u32 2131351028, %v1526
  %v1533 = vor.u32 %v1531, %v1532
  %v1534 = vshll.u32 2131351028, %v1525
  %v1535 = vshrl.u32 2102212464, %v1526
  %v1536 = vor.u32 %v1534, %v1535
  %v1537 = vshll.u32 2102212464, %v1525
  %v1538 = vshrl.u32 920167782, %v1526
  %v1539 = vor.u32 %v1537, %v1538
  %v1540 = vshll.u32 920167782, %v1525
  %v1541 = vshrl.u32 1326507024, %v1526
  %v1542 = vor.u32 %v1540, %v1541
  %vm1543 = vcmp.lt.s32.totalorder %v1524, 1
  %vm1544 = vcmp.lt.s32.totalorder %v1524, 2
  %vm1545 = vcmp.lt.s32.totalorder %v1524, 3
  %vm1546 = vcmp.lt.s32.totalorder %v1524, 4
  %v1547 = vsel %vm1543, %v1527, %v1530
  %v1548 = vsel %vm1546, %v1536, 2102212464
  %v1549 = vsel %vm1545, %v1533, %v1548
  %v1550 = vsel %vm1544, %v1547, %v1549
  %v1551 = vsel %vm1543, %v1530, %v1533
  %v1552 = vsel %vm1546, %v1539, 920167782
  %v1553 = vsel %vm1545, %v1536, %v1552
  %v1554 = vsel %vm1544, %v1551, %v1553
  %v1555 = vsel %vm1543, %v1533, %v1536
  %v1556 = vsel %vm1546, %v1542, 1326507024
  %v1557 = vsel %vm1545, %v1539, %v1556
  %v1558 = vsel %vm1544, %v1555, %v1557
  %v1559 = vshll.u32 %v1519, 8
  %v1560 = vmul.u32.u64.compose %v1559, %v1558
  %v1561 = vextract.low.u32 %v1560
  %v1562 = vextract.high.u32 %v1560
  %v1563 = vmul.u32.u64.compose %v1559, %v1554
  %v1564 = vextract.low.u32 %v1563
  %v1565 = vextract.high.u32 %v1563
  %v1566 = vmul.u32 %v1559, %v1550
  %v1567 = vadd.s32 %v1562, %v1564
  %vm1568 = vc.u32 %v1562, %v1564
  %v1569 = vadd.s32 %v1565, 1
  %v1570 = vsel %vm1568, %v1569, %v1565
  %v1571 = vadd.s32 %v1566, %v1570
  %v1572 = vadd.s32 %v1571, 536870912
  %v1573 = vshrl.u32 %v1572, 30
  %v1574 = vshll.u32 %v1573, 30
  %v1575 = vsub.s32 %v1571, %v1574
  %vm1576 = vcmp.lt.s32.totalorder %v1575, 0
  %v1577 = vsub.s32 0, %v1575
  %v1578 = vsel %vm1576, %v1577, %v1575
  %v1579 = vclz %v1578
  %v1580 = vsub.s32 %v1579, 2
  %vm1581 = vcmp.gt.s32.totalorder 0, %v1580
  %v1582 = vsel %vm1581, 0, %v1580
  %v1583 = vsub.s32 32, %v1582
  %v1584 = vshll.u32 %v1575, %v1582
  %v1585 = vshrl.u32 %v1567, %v1583
  %v1586 = vor.u32 %v1584, %v1585
  %v1587 = vsub.s32 4294967266, %v1582
  %v1588 = vadd.s32 %v1587, 127
  %v1589 = vshll.u32 %v1588, 23
  %v1590 = vor.u32 4788187, %v1589
  %v1591 = vand.u32 2147483647, %v1590
  %v1593 = vcvt.s32.f32 %v1586
  %v1594 = vmul.f32 %v1593, %v1591
  %v1595 = vxor.u32 %v1594, 2147483648
  %v1596 = vsel %vm1513, %v1595, %v1594
  %v1597 = vsub.s32 4, %v1573
  %v1598 = vsel %vm1513, %v1597, %v1573
  %v1599 = vsel %vm1512, %v1507, %v1596
  %v1600 = vsel %vm1512, 0, %v1598
  %v1601 = vcosq.f32.pop %v1599
  %v1602 = vsinq.f32.pop %v1599
  %vm1603 = vweird.f32 %v1507
  %v1604 = vadd.s32 %v1600, 3
  %v1605 = vand.u32 %v1604, 3
  %vm1606 = vcmp.lt.s32.totalorder %v1605, 2
  %vm1607 = vcmp.eq.s32.totalorder %v1605, 0
  %v1608 = vxor.u32 %v1602, 2147483648
  %v1609 = vsel %vm1607, %v1601, %v1608
  %vm1610 = vcmp.eq.s32.totalorder %v1605, 2
  %v1611 = vxor.u32 %v1601, 2147483648
  %v1612 = vsel %vm1610, %v1611, %v1602
  %v1613 = vsel %vm1606, %v1609, %v1612
  %v1614 = vsel %vm1603, nan, %v1613
  %v1615 = vand.u32 2147483647, %v1508
  %vm1616 = vcmp.le.f32.partialorder %v1615, 0.7853982
  %vm1617 = vcmp.lt.s32.totalorder %v1508, 0
  %v1618 = vand.u32 %v1508, 2139095040
  %v1619 = vshrl.u32 %v1618, 23
  %v1620 = vsub.s32 %v1619, 127
  %v1621 = vand.u32 2147483647, %v1508
  %v1622 = vand.u32 %v1621, 8388607
  %v1623 = vor.u32 %v1622, 8388608
  %v1624 = vsub.s32 0, %v1623
  %v1625 = vadd.s32 %v1620, 1
  %vm1626 = vcmp.gt.s32.totalorder %v1625, 0
  %v1627 = vsel %vm1626, %v1625, 0
  %v1628 = vshrl.u32 %v1627, 5
  %v1629 = vand.u32 %v1627, 31
  %v1630 = vsub.s32 32, %v1629
  %v1631 = vshrl.u32 683565275, %v1630
  %v1632 = vshll.u32 683565275, %v1629
  %v1633 = vshrl.u32 2475754826, %v1630
  %v1634 = vor.u32 %v1632, %v1633
  %v1635 = vshll.u32 2475754826, %v1629
  %v1636 = vshrl.u32 2131351028, %v1630
  %v1637 = vor.u32 %v1635, %v1636
  %v1638 = vshll.u32 2131351028, %v1629
  %v1639 = vshrl.u32 2102212464, %v1630
  %v1640 = vor.u32 %v1638, %v1639
  %v1641 = vshll.u32 2102212464, %v1629
  %v1642 = vshrl.u32 920167782, %v1630
  %v1643 = vor.u32 %v1641, %v1642
  %v1644 = vshll.u32 920167782, %v1629
  %v1645 = vshrl.u32 1326507024, %v1630
  %v1646 = vor.u32 %v1644, %v1645
  %vm1647 = vcmp.lt.s32.totalorder %v1628, 1
  %vm1648 = vcmp.lt.s32.totalorder %v1628, 2
  %vm1649 = vcmp.lt.s32.totalorder %v1628, 3
  %vm1650 = vcmp.lt.s32.totalorder %v1628, 4
  %v1651 = vsel %vm1647, %v1631, %v1634
  %v1652 = vsel %vm1650, %v1640, 2102212464
  %v1653 = vsel %vm1649, %v1637, %v1652
  %v1654 = vsel %vm1648, %v1651, %v1653
  %v1655 = vsel %vm1647, %v1634, %v1637
  %v1656 = vsel %vm1650, %v1643, 920167782
  %v1657 = vsel %vm1649, %v1640, %v1656
  %v1658 = vsel %vm1648, %v1655, %v1657
  %v1659 = vsel %vm1647, %v1637, %v1640
  %v1660 = vsel %vm1650, %v1646, 1326507024
  %v1661 = vsel %vm1649, %v1643, %v1660
  %v1662 = vsel %vm1648, %v1659, %v1661
  %v1663 = vshll.u32 %v1623, 8
  %v1664 = vmul.u32.u64.compose %v1663, %v1662
  %v1665 = vextract.low.u32 %v1664
  %v1666 = vextract.high.u32 %v1664
  %v1667 = vmul.u32.u64.compose %v1663, %v1658
  %v1668 = vextract.low.u32 %v1667
  %v1669 = vextract.high.u32 %v1667
  %v1670 = vmul.u32 %v1663, %v1654
  %v1671 = vadd.s32 %v1666, %v1668
  %vm1672 = vc.u32 %v1666, %v1668
  %v1673 = vadd.s32 %v1669, 1
  %v1674 = vsel %vm1672, %v1673, %v1669
  %v1675 = vadd.s32 %v1670, %v1674
  %v1676 = vadd.s32 %v1675, 536870912
  %v1677 = vshrl.u32 %v1676, 30
  %v1678 = vshll.u32 %v1677, 30
  %v1679 = vsub.s32 %v1675, %v1678
  %vm1680 = vcmp.lt.s32.totalorder %v1679, 0
  %v1681 = vsub.s32 0, %v1679
  %v1682 = vsel %vm1680, %v1681, %v1679
  %v1683 = vclz %v1682
  %v1684 = vsub.s32 %v1683, 2
  %vm1685 = vcmp.gt.s32.totalorder 0, %v1684
  %v1686 = vsel %vm1685, 0, %v1684
  %v1687 = vsub.s32 32, %v1686
  %v1688 = vshll.u32 %v1679, %v1686
  %v1689 = vshrl.u32 %v1671, %v1687
  %v1690 = vor.u32 %v1688, %v1689
  %v1691 = vsub.s32 4294967266, %v1686
  %v1692 = vadd.s32 %v1691, 127
  %v1693 = vshll.u32 %v1692, 23
  %v1694 = vor.u32 4788187, %v1693
  %v1695 = vand.u32 2147483647, %v1694
  %v1697 = vcvt.s32.f32 %v1690
  %v1698 = vmul.f32 %v1697, %v1695
  %v1699 = vxor.u32 %v1698, 2147483648
  %v1700 = vsel %vm1617, %v1699, %v1698
  %v1701 = vsub.s32 4, %v1677
  %v1702 = vsel %vm1617, %v1701, %v1677
  %v1703 = vsel %vm1616, %v1508, %v1700
  %v1704 = vsel %vm1616, 0, %v1702
  %v1705 = vcosq.f32.pop %v1703
  %v1706 = vsinq.f32.pop %v1703
  %vm1707 = vweird.f32 %v1508
  %v1708 = vadd.s32 %v1704, 3
  %v1709 = vand.u32 %v1708, 3
  %vm1710 = vcmp.lt.s32.totalorder %v1709, 2
  %vm1711 = vcmp.eq.s32.totalorder %v1709, 0
  %v1712 = vxor.u32 %v1706, 2147483648
  %v1713 = vsel %vm1711, %v1705, %v1712
  %vm1714 = vcmp.eq.s32.totalorder %v1709, 2
  %v1715 = vxor.u32 %v1705, 2147483648
  %v1716 = vsel %vm1714, %v1715, %v1706
  %v1717 = vsel %vm1710, %v1713, %v1716
  %v1718 = vsel %vm1707, nan, %v1717
  %v1719 = vand.u32 2147483647, %v1509
  %vm1720 = vcmp.le.f32.partialorder %v1719, 0.7853982
  %vm1721 = vcmp.lt.s32.totalorder %v1509, 0
  %v1722 = vand.u32 %v1509, 2139095040
  %v1723 = vshrl.u32 %v1722, 23
  %v1724 = vsub.s32 %v1723, 127
  %v1725 = vand.u32 2147483647, %v1509
  %v1726 = vand.u32 %v1725, 8388607
  %v1727 = vor.u32 %v1726, 8388608
  %v1728 = vsub.s32 0, %v1727
  %v1729 = vadd.s32 %v1724, 1
  %vm1730 = vcmp.gt.s32.totalorder %v1729, 0
  %v1731 = vsel %vm1730, %v1729, 0
  %v1732 = vshrl.u32 %v1731, 5
  %v1733 = vand.u32 %v1731, 31
  %v1734 = vsub.s32 32, %v1733
  %v1735 = vshrl.u32 683565275, %v1734
  %v1736 = vshll.u32 683565275, %v1733
  %v1737 = vshrl.u32 2475754826, %v1734
  %v1738 = vor.u32 %v1736, %v1737
  %v1739 = vshll.u32 2475754826, %v1733
  %v1740 = vshrl.u32 2131351028, %v1734
  %v1741 = vor.u32 %v1739, %v1740
  %v1742 = vshll.u32 2131351028, %v1733
  %v1743 = vshrl.u32 2102212464, %v1734
  %v1744 = vor.u32 %v1742, %v1743
  %v1745 = vshll.u32 2102212464, %v1733
  %v1746 = vshrl.u32 920167782, %v1734
  %v1747 = vor.u32 %v1745, %v1746
  %v1748 = vshll.u32 920167782, %v1733
  %v1749 = vshrl.u32 1326507024, %v1734
  %v1750 = vor.u32 %v1748, %v1749
  %vm1751 = vcmp.lt.s32.totalorder %v1732, 1
  %vm1752 = vcmp.lt.s32.totalorder %v1732, 2
  %vm1753 = vcmp.lt.s32.totalorder %v1732, 3
  %vm1754 = vcmp.lt.s32.totalorder %v1732, 4
  %v1755 = vsel %vm1751, %v1735, %v1738
  %v1756 = vsel %vm1754, %v1744, 2102212464
  %v1757 = vsel %vm1753, %v1741, %v1756
  %v1758 = vsel %vm1752, %v1755, %v1757
  %v1759 = vsel %vm1751, %v1738, %v1741
  %v1760 = vsel %vm1754, %v1747, 920167782
  %v1761 = vsel %vm1753, %v1744, %v1760
  %v1762 = vsel %vm1752, %v1759, %v1761
  %v1763 = vsel %vm1751, %v1741, %v1744
  %v1764 = vsel %vm1754, %v1750, 1326507024
  %v1765 = vsel %vm1753, %v1747, %v1764
  %v1766 = vsel %vm1752, %v1763, %v1765
  %v1767 = vshll.u32 %v1727, 8
  %v1768 = vmul.u32.u64.compose %v1767, %v1766
  %v1769 = vextract.low.u32 %v1768
  %v1770 = vextract.high.u32 %v1768
  %v1771 = vmul.u32.u64.compose %v1767, %v1762
  %v1772 = vextract.low.u32 %v1771
  %v1773 = vextract.high.u32 %v1771
  %v1774 = vmul.u32 %v1767, %v1758
  %v1775 = vadd.s32 %v1770, %v1772
  %vm1776 = vc.u32 %v1770, %v1772
  %v1777 = vadd.s32 %v1773, 1
  %v1778 = vsel %vm1776, %v1777, %v1773
  %v1779 = vadd.s32 %v1774, %v1778
  %v1780 = vadd.s32 %v1779, 536870912
  %v1781 = vshrl.u32 %v1780, 30
  %v1782 = vshll.u32 %v1781, 30
  %v1783 = vsub.s32 %v1779, %v1782
  %vm1784 = vcmp.lt.s32.totalorder %v1783, 0
  %v1785 = vsub.s32 0, %v1783
  %v1786 = vsel %vm1784, %v1785, %v1783
  %v1787 = vclz %v1786
  %v1788 = vsub.s32 %v1787, 2
  %vm1789 = vcmp.gt.s32.totalorder 0, %v1788
  %v1790 = vsel %vm1789, 0, %v1788
  %v1791 = vsub.s32 32, %v1790
  %v1792 = vshll.u32 %v1783, %v1790
  %v1793 = vshrl.u32 %v1775, %v1791
  %v1794 = vor.u32 %v1792, %v1793
  %v1795 = vsub.s32 4294967266, %v1790
  %v1796 = vadd.s32 %v1795, 127
  %v1797 = vshll.u32 %v1796, 23
  %v1798 = vor.u32 4788187, %v1797
  %v1799 = vand.u32 2147483647, %v1798
  %v1801 = vcvt.s32.f32 %v1794
  %v1802 = vmul.f32 %v1801, %v1799
  %v1803 = vxor.u32 %v1802, 2147483648
  %v1804 = vsel %vm1721, %v1803, %v1802
  %v1805 = vsub.s32 4, %v1781
  %v1806 = vsel %vm1721, %v1805, %v1781
  %v1807 = vsel %vm1720, %v1509, %v1804
  %v1808 = vsel %vm1720, 0, %v1806
  %v1809 = vcosq.f32.pop %v1807
  %v1810 = vsinq.f32.pop %v1807
  %vm1811 = vweird.f32 %v1509
  %v1812 = vadd.s32 %v1808, 3
  %v1813 = vand.u32 %v1812, 3
  %vm1814 = vcmp.lt.s32.totalorder %v1813, 2
  %vm1815 = vcmp.eq.s32.totalorder %v1813, 0
  %v1816 = vxor.u32 %v1810, 2147483648
  %v1817 = vsel %vm1815, %v1809, %v1816
  %vm1818 = vcmp.eq.s32.totalorder %v1813, 2
  %v1819 = vxor.u32 %v1809, 2147483648
  %v1820 = vsel %vm1818, %v1819, %v1810
  %v1821 = vsel %vm1814, %v1817, %v1820
  %v1822 = vsel %vm1811, nan, %v1821
  %v1823 = vand.u32 2147483647, %v1510
  %vm1824 = vcmp.le.f32.partialorder %v1823, 0.7853982
  %vm1825 = vcmp.lt.s32.totalorder %v1510, 0
  %v1826 = vand.u32 %v1510, 2139095040
  %v1827 = vshrl.u32 %v1826, 23
  %v1828 = vsub.s32 %v1827, 127
  %v1829 = vand.u32 2147483647, %v1510
  %v1830 = vand.u32 %v1829, 8388607
  %v1831 = vor.u32 %v1830, 8388608
  %v1832 = vsub.s32 0, %v1831
  %v1833 = vadd.s32 %v1828, 1
  %vm1834 = vcmp.gt.s32.totalorder %v1833, 0
  %v1835 = vsel %vm1834, %v1833, 0
  %v1836 = vshrl.u32 %v1835, 5
  %v1837 = vand.u32 %v1835, 31
  %v1838 = vsub.s32 32, %v1837
  %v1839 = vshrl.u32 683565275, %v1838
  %v1840 = vshll.u32 683565275, %v1837
  %v1841 = vshrl.u32 2475754826, %v1838
  %v1842 = vor.u32 %v1840, %v1841
  %v1843 = vshll.u32 2475754826, %v1837
  %v1844 = vshrl.u32 2131351028, %v1838
  %v1845 = vor.u32 %v1843, %v1844
  %v1846 = vshll.u32 2131351028, %v1837
  %v1847 = vshrl.u32 2102212464, %v1838
  %v1848 = vor.u32 %v1846, %v1847
  %v1849 = vshll.u32 2102212464, %v1837
  %v1850 = vshrl.u32 920167782, %v1838
  %v1851 = vor.u32 %v1849, %v1850
  %v1852 = vshll.u32 920167782, %v1837
  %v1853 = vshrl.u32 1326507024, %v1838
  %v1854 = vor.u32 %v1852, %v1853
  %vm1855 = vcmp.lt.s32.totalorder %v1836, 1
  %vm1856 = vcmp.lt.s32.totalorder %v1836, 2
  %vm1857 = vcmp.lt.s32.totalorder %v1836, 3
  %vm1858 = vcmp.lt.s32.totalorder %v1836, 4
  %v1859 = vsel %vm1855, %v1839, %v1842
  %v1860 = vsel %vm1858, %v1848, 2102212464
  %v1861 = vsel %vm1857, %v1845, %v1860
  %v1862 = vsel %vm1856, %v1859, %v1861
  %v1863 = vsel %vm1855, %v1842, %v1845
  %v1864 = vsel %vm1858, %v1851, 920167782
  %v1865 = vsel %vm1857, %v1848, %v1864
  %v1866 = vsel %vm1856, %v1863, %v1865
  %v1867 = vsel %vm1855, %v1845, %v1848
  %v1868 = vsel %vm1858, %v1854, 1326507024
  %v1869 = vsel %vm1857, %v1851, %v1868
  %v1870 = vsel %vm1856, %v1867, %v1869
  %v1871 = vshll.u32 %v1831, 8
  %v1872 = vmul.u32.u64.compose %v1871, %v1870
  %v1873 = vextract.low.u32 %v1872
  %v1874 = vextract.high.u32 %v1872
  %v1875 = vmul.u32.u64.compose %v1871, %v1866
  %v1876 = vextract.low.u32 %v1875
  %v1877 = vextract.high.u32 %v1875
  %v1878 = vmul.u32 %v1871, %v1862
  %v1879 = vadd.s32 %v1874, %v1876
  %vm1880 = vc.u32 %v1874, %v1876
  %v1881 = vadd.s32 %v1877, 1
  %v1882 = vsel %vm1880, %v1881, %v1877
  %v1883 = vadd.s32 %v1878, %v1882
  %v1884 = vadd.s32 %v1883, 536870912
  %v1885 = vshrl.u32 %v1884, 30
  %v1886 = vshll.u32 %v1885, 30
  %v1887 = vsub.s32 %v1883, %v1886
  %vm1888 = vcmp.lt.s32.totalorder %v1887, 0
  %v1889 = vsub.s32 0, %v1887
  %v1890 = vsel %vm1888, %v1889, %v1887
  %v1891 = vclz %v1890
  %v1892 = vsub.s32 %v1891, 2
  %vm1893 = vcmp.gt.s32.totalorder 0, %v1892
  %v1894 = vsel %vm1893, 0, %v1892
  %v1895 = vsub.s32 32, %v1894
  %v1896 = vshll.u32 %v1887, %v1894
  %v1897 = vshrl.u32 %v1879, %v1895
  %v1898 = vor.u32 %v1896, %v1897
  %v1899 = vsub.s32 4294967266, %v1894
  %v1900 = vadd.s32 %v1899, 127
  %v1901 = vshll.u32 %v1900, 23
  %v1902 = vor.u32 4788187, %v1901
  %v1903 = vand.u32 2147483647, %v1902
  %v1905 = vcvt.s32.f32 %v1898
  %v1906 = vmul.f32 %v1905, %v1903
  %v1907 = vxor.u32 %v1906, 2147483648
  %v1908 = vsel %vm1825, %v1907, %v1906
  %v1909 = vsub.s32 4, %v1885
  %v1910 = vsel %vm1825, %v1909, %v1885
  %v1911 = vsel %vm1824, %v1510, %v1908
  %v1912 = vsel %vm1824, 0, %v1910
  %v1913 = vcosq.f32.pop %v1911
  %v1914 = vsinq.f32.pop %v1911
  %vm1915 = vweird.f32 %v1510
  %v1916 = vadd.s32 %v1912, 3
  %v1917 = vand.u32 %v1916, 3
  %vm1918 = vcmp.lt.s32.totalorder %v1917, 2
  %vm1919 = vcmp.eq.s32.totalorder %v1917, 0
  %v1920 = vxor.u32 %v1914, 2147483648
  %v1921 = vsel %vm1919, %v1913, %v1920
  %vm1922 = vcmp.eq.s32.totalorder %v1917, 2
  %v1923 = vxor.u32 %v1913, 2147483648
  %v1924 = vsel %vm1922, %v1923, %v1914
  %v1925 = vsel %vm1918, %v1921, %v1924
  %v1926 = vsel %vm1915, nan, %v1925
  %v1928 = vsel %vm479, %v1926, 0
  %1930 = vmatprep.subr.mxu0 0.0
  %1931 = vmatpush1.msra.mxu0 %v1614
  %1932 = vmatprep.subr.mxu0 0.0
  %1933 = vmatpush1.msra.mxu0 %v1718
  %1934 = vmatprep.subr.mxu0 0.0
  %1935 = vmatpush1.msra.mxu0 %v1822
  %1936 = vmatprep.subr.mxu0 0.0
  %1937 = vmatpush1.msra.mxu0 %v1928
  %1938 = vmatprep.subr.mxu0 0.0
  %1939 = vmatpush1.msra.mxu0 0.0
  %1940 = vmatprep.subr.mxu0 0.0
  %1941 = vmatpush1.msra.mxu0 0.0
  %1942 = vmatprep.subr.mxu0 0.0
  %1943 = vmatpush1.msra.mxu0 0.0
  %1944 = vmatprep.subr.mxu0 0.0
  %1945 = vmatpush1.msra.mxu0 0.0
  %1946 = vmatprep.subr.mxu0 0.0
  %1947 = vmatpush1.msra.mxu0 0.0
  %1948 = vmatprep.subr.mxu0 0.0
  %1949 = vmatpush1.msra.mxu0 0.0
  %1950 = vmatprep.subr.mxu0 0.0
  %1951 = vmatpush1.msra.mxu0 0.0
  %1952 = vmatprep.subr.mxu0 0.0
  %1953 = vmatpush1.msra.mxu0 0.0
  %1954 = vmatprep.subr.mxu0 0.0
  %1955 = vmatpush1.msra.mxu0 0.0
  %1956 = vmatprep.subr.mxu0 0.0
  %1957 = vmatpush1.msra.mxu0 0.0
  %1958 = vmatprep.subr.mxu0 0.0
  %1959 = vmatpush1.msra.mxu0 0.0
  %1960 = vmatprep.subr.mxu0 0.0
  %1961 = vmatpush1.msra.mxu0 0.0
  %1962 = vmatprep.subr.mxu0 0.0
  %1963 = vmatpush1.msra.mxu0 0.0
  %1964 = vmatprep.subr.mxu0 0.0
  %1965 = vmatpush1.msra.mxu0 0.0
  %1966 = vmatprep.subr.mxu0 0.0
  %1967 = vmatpush1.msra.mxu0 0.0
  %1968 = vmatprep.subr.mxu0 0.0
  %1969 = vmatpush1.msra.mxu0 0.0
  %1970 = vmatprep.subr.mxu0 0.0
  %1971 = vmatpush1.msra.mxu0 0.0
  %1972 = vmatprep.subr.mxu0 0.0
  %1973 = vmatpush1.msra.mxu0 0.0
  %1974 = vmatprep.subr.mxu0 0.0
  %1975 = vmatpush1.msra.mxu0 0.0
  %1976 = vmatprep.subr.mxu0 0.0
  %1977 = vmatpush1.msra.mxu0 0.0
  %1978 = vmatprep.subr.mxu0 0.0
  %1979 = vmatpush1.msra.mxu0 0.0
  %1980 = vmatprep.subr.mxu0 0.0
  %1981 = vmatpush1.msra.mxu0 0.0
  %1982 = vmatprep.subr.mxu0 0.0
  %1983 = vmatpush1.msra.mxu0 0.0
  %1984 = vmatprep.subr.mxu0 0.0
  %1985 = vmatpush1.msra.mxu0 0.0
  %1986 = vmatprep.subr.mxu0 0.0
  %1987 = vmatpush1.msra.mxu0 0.0
  %1988 = vmatprep.subr.mxu0 0.0
  %1989 = vmatpush1.msra.mxu0 0.0
  %1990 = vmatprep.subr.mxu0 0.0
  %1991 = vmatpush1.msra.mxu0 0.0
  %1992 = vmatprep.subr.mxu0 0.0
  %1993 = vmatpush1.msra.mxu0 0.0
  %1994 = vmatprep.mubr.f32.mxu0 0.0
  %1995 = vmatmul.mubr.f32.gmra.mrb[0].mxu0 %v465
  %v1996 = vpop.f32.mrb[0].mxu0
  %v1997 = vadd.f32 0.0, %v1996
  %v1998 = vpop.f32.mrb[0].mxu0
  %1999 = vmatprep.mubr.f32.mxu0 0.0
  %2000 = vmatmul.mubr.f32.gmra.mrb[0].mxu0 %v468
  %v2001 = vpop.f32.mrb[0].mxu0
  %v2002 = vadd.f32 0.0, %v2001
  %v2003 = vpop.f32.mrb[0].mxu0
  %2004 = vmatprep.mubr.f32.mxu0 0.0
  %2005 = vmatmul.mubr.f32.gmra.mrb[0].mxu0 %v471
  %v2006 = vpop.f32.mrb[0].mxu0
  %v2007 = vadd.f32 0.0, %v2006
  %v2008 = vpop.f32.mrb[0].mxu0
  %2009 = vmatprep.mubr.f32.mxu0 0.0
  %2010 = vmatmul.mubr.f32.gmra.mrb[0].mxu0 %v474
  %v2011 = vpop.f32.mrb[0].mxu0
  %v2012 = vadd.f32 0.0, %v2011
  %v2013 = vpop.f32.mrb[0].mxu0
  %2014 = vmatprep.mubr.f32.mxu0 0.0
  %2015 = vmatmul.mubr.f32.gmra.mrb[0].mxu0 %v477
  %v2016 = vpop.f32.mrb[0].mxu0
  %v2017 = vadd.f32 0.0, %v2016
  %v2018 = vpop.f32.mrb[0].mxu0
  %2019 = vdwg.mxu0
  %v2020 = vmax.f32 %v1997, 0.0
  %v2021 = vmax.f32 %v2002, 0.0
  %v2022 = vmax.f32 %v2007, 0.0
  %v2023 = vmax.f32 %v2012, 0.0
  %v2024 = vmax.f32 %v2017, 0.0
  %v2026 = vsel %vm479, %v2024, 0
  %2028 = vmatprep.subr.mxu0 0.0
  %2029 = vmatpush1.msra.mxu0 %v2020
  %2030 = vmatprep.subr.mxu0 0.0
  %2031 = vmatpush1.msra.mxu0 %v2021
  %2032 = vmatprep.subr.mxu0 0.0
  %2033 = vmatpush1.msra.mxu0 %v2022
  %2034 = vmatprep.subr.mxu0 0.0
  %2035 = vmatpush1.msra.mxu0 %v2023
  %2036 = vmatprep.subr.mxu0 0.0
  %2037 = vmatpush1.msra.mxu0 %v2026
  %2038 = vmatprep.subr.mxu0 0.0
  %2039 = vmatpush1.msra.mxu0 0.0
  %2040 = vmatprep.subr.mxu0 0.0
  %2041 = vmatpush1.msra.mxu0 0.0
  %2042 = vmatprep.subr.mxu0 0.0
  %2043 = vmatpush1.msra.mxu0 0.0
  %2044 = vmatprep.subr.mxu0 0.0
  %2045 = vmatpush1.msra.mxu0 0.0
  %2046 = vmatprep.subr.mxu0 0.0
  %2047 = vmatpush1.msra.mxu0 0.0
  %2048 = vmatprep.subr.mxu0 0.0
  %2049 = vmatpush1.msra.mxu0 0.0
  %2050 = vmatprep.subr.mxu0 0.0
  %2051 = vmatpush1.msra.mxu0 0.0
  %2052 = vmatprep.subr.mxu0 0.0
  %2053 = vmatpush1.msra.mxu0 0.0
  %2054 = vmatprep.subr.mxu0 0.0
  %2055 = vmatpush1.msra.mxu0 0.0
  %2056 = vmatprep.subr.mxu0 0.0
  %2057 = vmatpush1.msra.mxu0 0.0
  %2058 = vmatprep.subr.mxu0 0.0
  %2059 = vmatpush1.msra.mxu0 0.0
  %2060 = vmatprep.subr.mxu0 0.0
  %2061 = vmatpush1.msra.mxu0 0.0
  %2062 = vmatprep.subr.mxu0 0.0
  %2063 = vmatpush1.msra.mxu0 0.0
  %2064 = vmatprep.subr.mxu0 0.0
  %2065 = vmatpush1.msra.mxu0 0.0
  %2066 = vmatprep.subr.mxu0 0.0
  %2067 = vmatpush1.msra.mxu0 0.0
  %2068 = vmatprep.subr.mxu0 0.0
  %2069 = vmatpush1.msra.mxu0 0.0
  %2070 = vmatprep.subr.mxu0 0.0
  %2071 = vmatpush1.msra.mxu0 0.0
  %2072 = vmatprep.subr.mxu0 0.0
  %2073 = vmatpush1.msra.mxu0 0.0
  %2074 = vmatprep.subr.mxu0 0.0
  %2075 = vmatpush1.msra.mxu0 0.0
  %2076 = vmatprep.subr.mxu0 0.0
  %2077 = vmatpush1.msra.mxu0 0.0
  %2078 = vmatprep.subr.mxu0 0.0
  %2079 = vmatpush1.msra.mxu0 0.0
  %2080 = vmatprep.subr.mxu0 0.0
  %2081 = vmatpush1.msra.mxu0 0.0
  %2082 = vmatprep.subr.mxu0 0.0
  %2083 = vmatpush1.msra.mxu0 0.0
  %2084 = vmatprep.subr.mxu0 0.0
  %2085 = vmatpush1.msra.mxu0 0.0
  %2086 = vmatprep.subr.mxu0 0.0
  %2087 = vmatpush1.msra.mxu0 0.0
  %2088 = vmatprep.subr.mxu0 0.0
  %2089 = vmatpush1.msra.mxu0 0.0
  %2090 = vmatprep.subr.mxu0 0.0
  %2091 = vmatpush1.msra.mxu0 0.0
  %2092 = vmatprep.mubr.f32.mxu0 0.0
  %2093 = vmatmul.mubr.f32.gmra.mrb[0].mxu0 %v580
  %v2094 = vpop.f32.mrb[0].mxu0
  %v2095 = vadd.f32 0.0, %v2094
  %v2096 = vpop.f32.mrb[0].mxu0
  %2097 = vmatprep.mubr.f32.mxu0 0.0
  %2098 = vmatmul.mubr.f32.gmra.mrb[0].mxu0 %v583
  %v2099 = vpop.f32.mrb[0].mxu0
  %v2100 = vadd.f32 0.0, %v2099
  %v2101 = vpop.f32.mrb[0].mxu0
  %2102 = vmatprep.mubr.f32.mxu0 0.0
  %2103 = vmatmul.mubr.f32.gmra.mrb[0].mxu0 %v586
  %v2104 = vpop.f32.mrb[0].mxu0
  %v2105 = vadd.f32 0.0, %v2104
  %v2106 = vpop.f32.mrb[0].mxu0
  %2107 = vmatprep.mubr.f32.mxu0 0.0
  %2108 = vmatmul.mubr.f32.gmra.mrb[0].mxu0 %v589
  %v2109 = vpop.f32.mrb[0].mxu0
  %v2110 = vadd.f32 0.0, %v2109
  %v2111 = vpop.f32.mrb[0].mxu0
  %2112 = vmatprep.mubr.f32.mxu0 0.0
  %2113 = vmatmul.mubr.f32.gmra.mrb[0].mxu0 %v592
  %v2114 = vpop.f32.mrb[0].mxu0
  %v2115 = vadd.f32 0.0, %v2114
  %v2116 = vpop.f32.mrb[0].mxu0
  %2117 = vdwg.mxu0
  %v2118 = vmax.f32 %v2095, 0.0
  %v2119 = vmax.f32 %v2100, 0.0
  %v2120 = vmax.f32 %v2105, 0.0
  %v2121 = vmax.f32 %v2110, 0.0
  %v2122 = vmax.f32 %v2115, 0.0
  %v2124 = vsel %vm479, %v2122, 0
  %2126 = vmatprep.subr.mxu0 0.0
  %2127 = vmatpush1.msra.mxu0 %v2118
  %2128 = vmatprep.subr.mxu0 0.0
  %2129 = vmatpush1.msra.mxu0 %v2119
  %2130 = vmatprep.subr.mxu0 0.0
  %2131 = vmatpush1.msra.mxu0 %v2120
  %2132 = vmatprep.subr.mxu0 0.0
  %2133 = vmatpush1.msra.mxu0 %v2121
  %2134 = vmatprep.subr.mxu0 0.0
  %2135 = vmatpush1.msra.mxu0 %v2124
  %2136 = vmatprep.subr.mxu0 0.0
  %2137 = vmatpush1.msra.mxu0 0.0
  %2138 = vmatprep.subr.mxu0 0.0
  %2139 = vmatpush1.msra.mxu0 0.0
  %2140 = vmatprep.subr.mxu0 0.0
  %2141 = vmatpush1.msra.mxu0 0.0
  %2142 = vmatprep.subr.mxu0 0.0
  %2143 = vmatpush1.msra.mxu0 0.0
  %2144 = vmatprep.subr.mxu0 0.0
  %2145 = vmatpush1.msra.mxu0 0.0
  %2146 = vmatprep.subr.mxu0 0.0
  %2147 = vmatpush1.msra.mxu0 0.0
  %2148 = vmatprep.subr.mxu0 0.0
  %2149 = vmatpush1.msra.mxu0 0.0
  %2150 = vmatprep.subr.mxu0 0.0
  %2151 = vmatpush1.msra.mxu0 0.0
  %2152 = vmatprep.subr.mxu0 0.0
  %2153 = vmatpush1.msra.mxu0 0.0
  %2154 = vmatprep.subr.mxu0 0.0
  %2155 = vmatpush1.msra.mxu0 0.0
  %2156 = vmatprep.subr.mxu0 0.0
  %2157 = vmatpush1.msra.mxu0 0.0
  %2158 = vmatprep.subr.mxu0 0.0
  %2159 = vmatpush1.msra.mxu0 0.0
  %2160 = vmatprep.subr.mxu0 0.0
  %2161 = vmatpush1.msra.mxu0 0.0
  %2162 = vmatprep.subr.mxu0 0.0
  %2163 = vmatpush1.msra.mxu0 0.0
  %2164 = vmatprep.subr.mxu0 0.0
  %2165 = vmatpush1.msra.mxu0 0.0
  %2166 = vmatprep.subr.mxu0 0.0
  %2167 = vmatpush1.msra.mxu0 0.0
  %2168 = vmatprep.subr.mxu0 0.0
  %2169 = vmatpush1.msra.mxu0 0.0
  %2170 = vmatprep.subr.mxu0 0.0
  %2171 = vmatpush1.msra.mxu0 0.0
  %2172 = vmatprep.subr.mxu0 0.0
  %2173 = vmatpush1.msra.mxu0 0.0
  %2174 = vmatprep.subr.mxu0 0.0
  %2175 = vmatpush1.msra.mxu0 0.0
  %2176 = vmatprep.subr.mxu0 0.0
  %2177 = vmatpush1.msra.mxu0 0.0
  %2178 = vmatprep.subr.mxu0 0.0
  %2179 = vmatpush1.msra.mxu0 0.0
  %2180 = vmatprep.subr.mxu0 0.0
  %2181 = vmatpush1.msra.mxu0 0.0
  %2182 = vmatprep.subr.mxu0 0.0
  %2183 = vmatpush1.msra.mxu0 0.0
  %2184 = vmatprep.subr.mxu0 0.0
  %2185 = vmatpush1.msra.mxu0 0.0
  %2186 = vmatprep.subr.mxu0 0.0
  %2187 = vmatpush1.msra.mxu0 0.0
  %2188 = vmatprep.subr.mxu0 0.0
  %2189 = vmatpush1.msra.mxu0 0.0
  %2190 = vmatprep.mubr.f32.mxu0 0.0
  %2191 = vmatmul.mubr.f32.gmra.mrb[0].mxu0 %v693
  %v2192 = vpop.f32.mrb[0].mxu0
  %v2193 = vadd.f32 0.0, %v2192
  %v2194 = vpop.f32.mrb[0].mxu0
  %2195 = vdwg.mxu0
  %v2196 = vmax.f32 %v2193, 0.0
  %v2197 = vxor.u32 %v2193, 2147483648
  %v2198 = vmul.f32 %v2197, 1.442695
  %v2199 = vpow.pop %v2198
  %v2200 = vadd.f32 %v2199, 1.0
  %v2201 = vrcp.pop %v2200
  %v2202 = vmul.f32 1.0, %v2201
  %v2203 = vmul.f32 %v2196, 0.55714285
  %v2204 = vsub.f32 0.0, %v2203
  %v2205 = vmul.f32 %v2204, 1.442695
  %v2206 = vpow.pop %v2205
  %v2207 = vsub.f32 1.0, %v2206
  %v2208 = vmul.f32 %v1502, %v2207
  %v2209 = vlaneseq
  %v2210 = vshrl.u32 %v2209, 7
  %v2211 = vsub.s32 0, %v2210
  %v2212 = vrot.slane %v2208, %v2211
  %v2213 = vmul.f32 %v2212, %v2202
  %v2214 = vadd.f32 %v1499, %v2213
  %v2215 = vmul.f32 %v2208, 1.2142857
  %v2216 = vadd.f32 %v1501, %v2215
  %v2217 = vmul.f32 %v1502, %v2206
  %v2218 = vmul.f32 %v24, 1.7714286
  %v2219 = vmul.f32 %v25, 1.7714286
  %v2220 = vmul.f32 %v26, 1.7714286
  %v2221 = vmul.f32 %v27, 1.7714286
  %v2222 = vadd.f32 %v20, %v2218
  %v2223 = vadd.f32 %v21, %v2219
  %v2224 = vadd.f32 %v22, %v2220
  %v2225 = vadd.f32 %v23, %v2221
  %v2226 = vand.u32 2147483647, %v2222
  %vm2227 = vcmp.le.f32.partialorder %v2226, 0.7853982
  %vm2228 = vcmp.lt.s32.totalorder %v2222, 0
  %v2229 = vand.u32 %v2222, 2139095040
  %v2230 = vshrl.u32 %v2229, 23
  %v2231 = vsub.s32 %v2230, 127
  %v2232 = vand.u32 2147483647, %v2222
  %v2233 = vand.u32 %v2232, 8388607
  %v2234 = vor.u32 %v2233, 8388608
  %v2235 = vsub.s32 0, %v2234
  %v2236 = vadd.s32 %v2231, 1
  %vm2237 = vcmp.gt.s32.totalorder %v2236, 0
  %v2238 = vsel %vm2237, %v2236, 0
  %v2239 = vshrl.u32 %v2238, 5
  %v2240 = vand.u32 %v2238, 31
  %v2241 = vsub.s32 32, %v2240
  %v2242 = vshrl.u32 683565275, %v2241
  %v2243 = vshll.u32 683565275, %v2240
  %v2244 = vshrl.u32 2475754826, %v2241
  %v2245 = vor.u32 %v2243, %v2244
  %v2246 = vshll.u32 2475754826, %v2240
  %v2247 = vshrl.u32 2131351028, %v2241
  %v2248 = vor.u32 %v2246, %v2247
  %v2249 = vshll.u32 2131351028, %v2240
  %v2250 = vshrl.u32 2102212464, %v2241
  %v2251 = vor.u32 %v2249, %v2250
  %v2252 = vshll.u32 2102212464, %v2240
  %v2253 = vshrl.u32 920167782, %v2241
  %v2254 = vor.u32 %v2252, %v2253
  %v2255 = vshll.u32 920167782, %v2240
  %v2256 = vshrl.u32 1326507024, %v2241
  %v2257 = vor.u32 %v2255, %v2256
  %vm2258 = vcmp.lt.s32.totalorder %v2239, 1
  %vm2259 = vcmp.lt.s32.totalorder %v2239, 2
  %vm2260 = vcmp.lt.s32.totalorder %v2239, 3
  %vm2261 = vcmp.lt.s32.totalorder %v2239, 4
  %v2262 = vsel %vm2258, %v2242, %v2245
  %v2263 = vsel %vm2261, %v2251, 2102212464
  %v2264 = vsel %vm2260, %v2248, %v2263
  %v2265 = vsel %vm2259, %v2262, %v2264
  %v2266 = vsel %vm2258, %v2245, %v2248
  %v2267 = vsel %vm2261, %v2254, 920167782
  %v2268 = vsel %vm2260, %v2251, %v2267
  %v2269 = vsel %vm2259, %v2266, %v2268
  %v2270 = vsel %vm2258, %v2248, %v2251
  %v2271 = vsel %vm2261, %v2257, 1326507024
  %v2272 = vsel %vm2260, %v2254, %v2271
  %v2273 = vsel %vm2259, %v2270, %v2272
  %v2274 = vshll.u32 %v2234, 8
  %v2275 = vmul.u32.u64.compose %v2274, %v2273
  %v2276 = vextract.low.u32 %v2275
  %v2277 = vextract.high.u32 %v2275
  %v2278 = vmul.u32.u64.compose %v2274, %v2269
  %v2279 = vextract.low.u32 %v2278
  %v2280 = vextract.high.u32 %v2278
  %v2281 = vmul.u32 %v2274, %v2265
  %v2282 = vadd.s32 %v2277, %v2279
  %vm2283 = vc.u32 %v2277, %v2279
  %v2284 = vadd.s32 %v2280, 1
  %v2285 = vsel %vm2283, %v2284, %v2280
  %v2286 = vadd.s32 %v2281, %v2285
  %v2287 = vadd.s32 %v2286, 536870912
  %v2288 = vshrl.u32 %v2287, 30
  %v2289 = vshll.u32 %v2288, 30
  %v2290 = vsub.s32 %v2286, %v2289
  %vm2291 = vcmp.lt.s32.totalorder %v2290, 0
  %v2292 = vsub.s32 0, %v2290
  %v2293 = vsel %vm2291, %v2292, %v2290
  %v2294 = vclz %v2293
  %v2295 = vsub.s32 %v2294, 2
  %vm2296 = vcmp.gt.s32.totalorder 0, %v2295
  %v2297 = vsel %vm2296, 0, %v2295
  %v2298 = vsub.s32 32, %v2297
  %v2299 = vshll.u32 %v2290, %v2297
  %v2300 = vshrl.u32 %v2282, %v2298
  %v2301 = vor.u32 %v2299, %v2300
  %v2302 = vsub.s32 4294967266, %v2297
  %v2303 = vadd.s32 %v2302, 127
  %v2304 = vshll.u32 %v2303, 23
  %v2305 = vor.u32 4788187, %v2304
  %v2306 = vand.u32 2147483647, %v2305
  %v2308 = vcvt.s32.f32 %v2301
  %v2309 = vmul.f32 %v2308, %v2306
  %v2310 = vxor.u32 %v2309, 2147483648
  %v2311 = vsel %vm2228, %v2310, %v2309
  %v2312 = vsub.s32 4, %v2288
  %v2313 = vsel %vm2228, %v2312, %v2288
  %v2314 = vsel %vm2227, %v2222, %v2311
  %v2315 = vsel %vm2227, 0, %v2313
  %v2316 = vcosq.f32.pop %v2314
  %v2317 = vsinq.f32.pop %v2314
  %vm2318 = vweird.f32 %v2222
  %v2319 = vadd.s32 %v2315, 3
  %v2320 = vand.u32 %v2319, 3
  %vm2321 = vcmp.lt.s32.totalorder %v2320, 2
  %vm2322 = vcmp.eq.s32.totalorder %v2320, 0
  %v2323 = vxor.u32 %v2317, 2147483648
  %v2324 = vsel %vm2322, %v2316, %v2323
  %vm2325 = vcmp.eq.s32.totalorder %v2320, 2
  %v2326 = vxor.u32 %v2316, 2147483648
  %v2327 = vsel %vm2325, %v2326, %v2317
  %v2328 = vsel %vm2321, %v2324, %v2327
  %v2329 = vsel %vm2318, nan, %v2328
  %v2330 = vand.u32 2147483647, %v2223
  %vm2331 = vcmp.le.f32.partialorder %v2330, 0.7853982
  %vm2332 = vcmp.lt.s32.totalorder %v2223, 0
  %v2333 = vand.u32 %v2223, 2139095040
  %v2334 = vshrl.u32 %v2333, 23
  %v2335 = vsub.s32 %v2334, 127
  %v2336 = vand.u32 2147483647, %v2223
  %v2337 = vand.u32 %v2336, 8388607
  %v2338 = vor.u32 %v2337, 8388608
  %v2339 = vsub.s32 0, %v2338
  %v2340 = vadd.s32 %v2335, 1
  %vm2341 = vcmp.gt.s32.totalorder %v2340, 0
  %v2342 = vsel %vm2341, %v2340, 0
  %v2343 = vshrl.u32 %v2342, 5
  %v2344 = vand.u32 %v2342, 31
  %v2345 = vsub.s32 32, %v2344
  %v2346 = vshrl.u32 683565275, %v2345
  %v2347 = vshll.u32 683565275, %v2344
  %v2348 = vshrl.u32 2475754826, %v2345
  %v2349 = vor.u32 %v2347, %v2348
  %v2350 = vshll.u32 2475754826, %v2344
  %v2351 = vshrl.u32 2131351028, %v2345
  %v2352 = vor.u32 %v2350, %v2351
  %v2353 = vshll.u32 2131351028, %v2344
  %v2354 = vshrl.u32 2102212464, %v2345
  %v2355 = vor.u32 %v2353, %v2354
  %v2356 = vshll.u32 2102212464, %v2344
  %v2357 = vshrl.u32 920167782, %v2345
  %v2358 = vor.u32 %v2356, %v2357
  %v2359 = vshll.u32 920167782, %v2344
  %v2360 = vshrl.u32 1326507024, %v2345
  %v2361 = vor.u32 %v2359, %v2360
  %vm2362 = vcmp.lt.s32.totalorder %v2343, 1
  %vm2363 = vcmp.lt.s32.totalorder %v2343, 2
  %vm2364 = vcmp.lt.s32.totalorder %v2343, 3
  %vm2365 = vcmp.lt.s32.totalorder %v2343, 4
  %v2366 = vsel %vm2362, %v2346, %v2349
  %v2367 = vsel %vm2365, %v2355, 2102212464
  %v2368 = vsel %vm2364, %v2352, %v2367
  %v2369 = vsel %vm2363, %v2366, %v2368
  %v2370 = vsel %vm2362, %v2349, %v2352
  %v2371 = vsel %vm2365, %v2358, 920167782
  %v2372 = vsel %vm2364, %v2355, %v2371
  %v2373 = vsel %vm2363, %v2370, %v2372
  %v2374 = vsel %vm2362, %v2352, %v2355
  %v2375 = vsel %vm2365, %v2361, 1326507024
  %v2376 = vsel %vm2364, %v2358, %v2375
  %v2377 = vsel %vm2363, %v2374, %v2376
  %v2378 = vshll.u32 %v2338, 8
  %v2379 = vmul.u32.u64.compose %v2378, %v2377
  %v2380 = vextract.low.u32 %v2379
  %v2381 = vextract.high.u32 %v2379
  %v2382 = vmul.u32.u64.compose %v2378, %v2373
  %v2383 = vextract.low.u32 %v2382
  %v2384 = vextract.high.u32 %v2382
  %v2385 = vmul.u32 %v2378, %v2369
  %v2386 = vadd.s32 %v2381, %v2383
  %vm2387 = vc.u32 %v2381, %v2383
  %v2388 = vadd.s32 %v2384, 1
  %v2389 = vsel %vm2387, %v2388, %v2384
  %v2390 = vadd.s32 %v2385, %v2389
  %v2391 = vadd.s32 %v2390, 536870912
  %v2392 = vshrl.u32 %v2391, 30
  %v2393 = vshll.u32 %v2392, 30
  %v2394 = vsub.s32 %v2390, %v2393
  %vm2395 = vcmp.lt.s32.totalorder %v2394, 0
  %v2396 = vsub.s32 0, %v2394
  %v2397 = vsel %vm2395, %v2396, %v2394
  %v2398 = vclz %v2397
  %v2399 = vsub.s32 %v2398, 2
  %vm2400 = vcmp.gt.s32.totalorder 0, %v2399
  %v2401 = vsel %vm2400, 0, %v2399
  %v2402 = vsub.s32 32, %v2401
  %v2403 = vshll.u32 %v2394, %v2401
  %v2404 = vshrl.u32 %v2386, %v2402
  %v2405 = vor.u32 %v2403, %v2404
  %v2406 = vsub.s32 4294967266, %v2401
  %v2407 = vadd.s32 %v2406, 127
  %v2408 = vshll.u32 %v2407, 23
  %v2409 = vor.u32 4788187, %v2408
  %v2410 = vand.u32 2147483647, %v2409
  %v2412 = vcvt.s32.f32 %v2405
  %v2413 = vmul.f32 %v2412, %v2410
  %v2414 = vxor.u32 %v2413, 2147483648
  %v2415 = vsel %vm2332, %v2414, %v2413
  %v2416 = vsub.s32 4, %v2392
  %v2417 = vsel %vm2332, %v2416, %v2392
  %v2418 = vsel %vm2331, %v2223, %v2415
  %v2419 = vsel %vm2331, 0, %v2417
  %v2420 = vcosq.f32.pop %v2418
  %v2421 = vsinq.f32.pop %v2418
  %vm2422 = vweird.f32 %v2223
  %v2423 = vadd.s32 %v2419, 3
  %v2424 = vand.u32 %v2423, 3
  %vm2425 = vcmp.lt.s32.totalorder %v2424, 2
  %vm2426 = vcmp.eq.s32.totalorder %v2424, 0
  %v2427 = vxor.u32 %v2421, 2147483648
  %v2428 = vsel %vm2426, %v2420, %v2427
  %vm2429 = vcmp.eq.s32.totalorder %v2424, 2
  %v2430 = vxor.u32 %v2420, 2147483648
  %v2431 = vsel %vm2429, %v2430, %v2421
  %v2432 = vsel %vm2425, %v2428, %v2431
  %v2433 = vsel %vm2422, nan, %v2432
  %v2434 = vand.u32 2147483647, %v2224
  %vm2435 = vcmp.le.f32.partialorder %v2434, 0.7853982
  %vm2436 = vcmp.lt.s32.totalorder %v2224, 0
  %v2437 = vand.u32 %v2224, 2139095040
  %v2438 = vshrl.u32 %v2437, 23
  %v2439 = vsub.s32 %v2438, 127
  %v2440 = vand.u32 2147483647, %v2224
  %v2441 = vand.u32 %v2440, 8388607
  %v2442 = vor.u32 %v2441, 8388608
  %v2443 = vsub.s32 0, %v2442
  %v2444 = vadd.s32 %v2439, 1
  %vm2445 = vcmp.gt.s32.totalorder %v2444, 0
  %v2446 = vsel %vm2445, %v2444, 0
  %v2447 = vshrl.u32 %v2446, 5
  %v2448 = vand.u32 %v2446, 31
  %v2449 = vsub.s32 32, %v2448
  %v2450 = vshrl.u32 683565275, %v2449
  %v2451 = vshll.u32 683565275, %v2448
  %v2452 = vshrl.u32 2475754826, %v2449
  %v2453 = vor.u32 %v2451, %v2452
  %v2454 = vshll.u32 2475754826, %v2448
  %v2455 = vshrl.u32 2131351028, %v2449
  %v2456 = vor.u32 %v2454, %v2455
  %v2457 = vshll.u32 2131351028, %v2448
  %v2458 = vshrl.u32 2102212464, %v2449
  %v2459 = vor.u32 %v2457, %v2458
  %v2460 = vshll.u32 2102212464, %v2448
  %v2461 = vshrl.u32 920167782, %v2449
  %v2462 = vor.u32 %v2460, %v2461
  %v2463 = vshll.u32 920167782, %v2448
  %v2464 = vshrl.u32 1326507024, %v2449
  %v2465 = vor.u32 %v2463, %v2464
  %vm2466 = vcmp.lt.s32.totalorder %v2447, 1
  %vm2467 = vcmp.lt.s32.totalorder %v2447, 2
  %vm2468 = vcmp.lt.s32.totalorder %v2447, 3
  %vm2469 = vcmp.lt.s32.totalorder %v2447, 4
  %v2470 = vsel %vm2466, %v2450, %v2453
  %v2471 = vsel %vm2469, %v2459, 2102212464
  %v2472 = vsel %vm2468, %v2456, %v2471
  %v2473 = vsel %vm2467, %v2470, %v2472
  %v2474 = vsel %vm2466, %v2453, %v2456
  %v2475 = vsel %vm2469, %v2462, 920167782
  %v2476 = vsel %vm2468, %v2459, %v2475
  %v2477 = vsel %vm2467, %v2474, %v2476
  %v2478 = vsel %vm2466, %v2456, %v2459
  %v2479 = vsel %vm2469, %v2465, 1326507024
  %v2480 = vsel %vm2468, %v2462, %v2479
  %v2481 = vsel %vm2467, %v2478, %v2480
  %v2482 = vshll.u32 %v2442, 8
  %v2483 = vmul.u32.u64.compose %v2482, %v2481
  %v2484 = vextract.low.u32 %v2483
  %v2485 = vextract.high.u32 %v2483
  %v2486 = vmul.u32.u64.compose %v2482, %v2477
  %v2487 = vextract.low.u32 %v2486
  %v2488 = vextract.high.u32 %v2486
  %v2489 = vmul.u32 %v2482, %v2473
  %v2490 = vadd.s32 %v2485, %v2487
  %vm2491 = vc.u32 %v2485, %v2487
  %v2492 = vadd.s32 %v2488, 1
  %v2493 = vsel %vm2491, %v2492, %v2488
  %v2494 = vadd.s32 %v2489, %v2493
  %v2495 = vadd.s32 %v2494, 536870912
  %v2496 = vshrl.u32 %v2495, 30
  %v2497 = vshll.u32 %v2496, 30
  %v2498 = vsub.s32 %v2494, %v2497
  %vm2499 = vcmp.lt.s32.totalorder %v2498, 0
  %v2500 = vsub.s32 0, %v2498
  %v2501 = vsel %vm2499, %v2500, %v2498
  %v2502 = vclz %v2501
  %v2503 = vsub.s32 %v2502, 2
  %vm2504 = vcmp.gt.s32.totalorder 0, %v2503
  %v2505 = vsel %vm2504, 0, %v2503
  %v2506 = vsub.s32 32, %v2505
  %v2507 = vshll.u32 %v2498, %v2505
  %v2508 = vshrl.u32 %v2490, %v2506
  %v2509 = vor.u32 %v2507, %v2508
  %v2510 = vsub.s32 4294967266, %v2505
  %v2511 = vadd.s32 %v2510, 127
  %v2512 = vshll.u32 %v2511, 23
  %v2513 = vor.u32 4788187, %v2512
  %v2514 = vand.u32 2147483647, %v2513
  %v2516 = vcvt.s32.f32 %v2509
  %v2517 = vmul.f32 %v2516, %v2514
  %v2518 = vxor.u32 %v2517, 2147483648
  %v2519 = vsel %vm2436, %v2518, %v2517
  %v2520 = vsub.s32 4, %v2496
  %v2521 = vsel %vm2436, %v2520, %v2496
  %v2522 = vsel %vm2435, %v2224, %v2519
  %v2523 = vsel %vm2435, 0, %v2521
  %v2524 = vcosq.f32.pop %v2522
  %v2525 = vsinq.f32.pop %v2522
  %vm2526 = vweird.f32 %v2224
  %v2527 = vadd.s32 %v2523, 3
  %v2528 = vand.u32 %v2527, 3
  %vm2529 = vcmp.lt.s32.totalorder %v2528, 2
  %vm2530 = vcmp.eq.s32.totalorder %v2528, 0
  %v2531 = vxor.u32 %v2525, 2147483648
  %v2532 = vsel %vm2530, %v2524, %v2531
  %vm2533 = vcmp.eq.s32.totalorder %v2528, 2
  %v2534 = vxor.u32 %v2524, 2147483648
  %v2535 = vsel %vm2533, %v2534, %v2525
  %v2536 = vsel %vm2529, %v2532, %v2535
  %v2537 = vsel %vm2526, nan, %v2536
  %v2538 = vand.u32 2147483647, %v2225
  %vm2539 = vcmp.le.f32.partialorder %v2538, 0.7853982
  %vm2540 = vcmp.lt.s32.totalorder %v2225, 0
  %v2541 = vand.u32 %v2225, 2139095040
  %v2542 = vshrl.u32 %v2541, 23
  %v2543 = vsub.s32 %v2542, 127
  %v2544 = vand.u32 2147483647, %v2225
  %v2545 = vand.u32 %v2544, 8388607
  %v2546 = vor.u32 %v2545, 8388608
  %v2547 = vsub.s32 0, %v2546
  %v2548 = vadd.s32 %v2543, 1
  %vm2549 = vcmp.gt.s32.totalorder %v2548, 0
  %v2550 = vsel %vm2549, %v2548, 0
  %v2551 = vshrl.u32 %v2550, 5
  %v2552 = vand.u32 %v2550, 31
  %v2553 = vsub.s32 32, %v2552
  %v2554 = vshrl.u32 683565275, %v2553
  %v2555 = vshll.u32 683565275, %v2552
  %v2556 = vshrl.u32 2475754826, %v2553
  %v2557 = vor.u32 %v2555, %v2556
  %v2558 = vshll.u32 2475754826, %v2552
  %v2559 = vshrl.u32 2131351028, %v2553
  %v2560 = vor.u32 %v2558, %v2559
  %v2561 = vshll.u32 2131351028, %v2552
  %v2562 = vshrl.u32 2102212464, %v2553
  %v2563 = vor.u32 %v2561, %v2562
  %v2564 = vshll.u32 2102212464, %v2552
  %v2565 = vshrl.u32 920167782, %v2553
  %v2566 = vor.u32 %v2564, %v2565
  %v2567 = vshll.u32 920167782, %v2552
  %v2568 = vshrl.u32 1326507024, %v2553
  %v2569 = vor.u32 %v2567, %v2568
  %vm2570 = vcmp.lt.s32.totalorder %v2551, 1
  %vm2571 = vcmp.lt.s32.totalorder %v2551, 2
  %vm2572 = vcmp.lt.s32.totalorder %v2551, 3
  %vm2573 = vcmp.lt.s32.totalorder %v2551, 4
  %v2574 = vsel %vm2570, %v2554, %v2557
  %v2575 = vsel %vm2573, %v2563, 2102212464
  %v2576 = vsel %vm2572, %v2560, %v2575
  %v2577 = vsel %vm2571, %v2574, %v2576
  %v2578 = vsel %vm2570, %v2557, %v2560
  %v2579 = vsel %vm2573, %v2566, 920167782
  %v2580 = vsel %vm2572, %v2563, %v2579
  %v2581 = vsel %vm2571, %v2578, %v2580
  %v2582 = vsel %vm2570, %v2560, %v2563
  %v2583 = vsel %vm2573, %v2569, 1326507024
  %v2584 = vsel %vm2572, %v2566, %v2583
  %v2585 = vsel %vm2571, %v2582, %v2584
  %v2586 = vshll.u32 %v2546, 8
  %v2587 = vmul.u32.u64.compose %v2586, %v2585
  %v2588 = vextract.low.u32 %v2587
  %v2589 = vextract.high.u32 %v2587
  %v2590 = vmul.u32.u64.compose %v2586, %v2581
  %v2591 = vextract.low.u32 %v2590
  %v2592 = vextract.high.u32 %v2590
  %v2593 = vmul.u32 %v2586, %v2577
  %v2594 = vadd.s32 %v2589, %v2591
  %vm2595 = vc.u32 %v2589, %v2591
  %v2596 = vadd.s32 %v2592, 1
  %v2597 = vsel %vm2595, %v2596, %v2592
  %v2598 = vadd.s32 %v2593, %v2597
  %v2599 = vadd.s32 %v2598, 536870912
  %v2600 = vshrl.u32 %v2599, 30
  %v2601 = vshll.u32 %v2600, 30
  %v2602 = vsub.s32 %v2598, %v2601
  %vm2603 = vcmp.lt.s32.totalorder %v2602, 0
  %v2604 = vsub.s32 0, %v2602
  %v2605 = vsel %vm2603, %v2604, %v2602
  %v2606 = vclz %v2605
  %v2607 = vsub.s32 %v2606, 2
  %vm2608 = vcmp.gt.s32.totalorder 0, %v2607
  %v2609 = vsel %vm2608, 0, %v2607
  %v2610 = vsub.s32 32, %v2609
  %v2611 = vshll.u32 %v2602, %v2609
  %v2612 = vshrl.u32 %v2594, %v2610
  %v2613 = vor.u32 %v2611, %v2612
  %v2614 = vsub.s32 4294967266, %v2609
  %v2615 = vadd.s32 %v2614, 127
  %v2616 = vshll.u32 %v2615, 23
  %v2617 = vor.u32 4788187, %v2616
  %v2618 = vand.u32 2147483647, %v2617
  %v2620 = vcvt.s32.f32 %v2613
  %v2621 = vmul.f32 %v2620, %v2618
  %v2622 = vxor.u32 %v2621, 2147483648
  %v2623 = vsel %vm2540, %v2622, %v2621
  %v2624 = vsub.s32 4, %v2600
  %v2625 = vsel %vm2540, %v2624, %v2600
  %v2626 = vsel %vm2539, %v2225, %v2623
  %v2627 = vsel %vm2539, 0, %v2625
  %v2628 = vcosq.f32.pop %v2626
  %v2629 = vsinq.f32.pop %v2626
  %vm2630 = vweird.f32 %v2225
  %v2631 = vadd.s32 %v2627, 3
  %v2632 = vand.u32 %v2631, 3
  %vm2633 = vcmp.lt.s32.totalorder %v2632, 2
  %vm2634 = vcmp.eq.s32.totalorder %v2632, 0
  %v2635 = vxor.u32 %v2629, 2147483648
  %v2636 = vsel %vm2634, %v2628, %v2635
  %vm2637 = vcmp.eq.s32.totalorder %v2632, 2
  %v2638 = vxor.u32 %v2628, 2147483648
  %v2639 = vsel %vm2637, %v2638, %v2629
  %v2640 = vsel %vm2633, %v2636, %v2639
  %v2641 = vsel %vm2630, nan, %v2640
  %v2643 = vsel %vm479, %v2641, 0
  %2645 = vmatprep.subr.mxu0 0.0
  %2646 = vmatpush1.msra.mxu0 %v2329
  %2647 = vmatprep.subr.mxu0 0.0
  %2648 = vmatpush1.msra.mxu0 %v2433
  %2649 = vmatprep.subr.mxu0 0.0
  %2650 = vmatpush1.msra.mxu0 %v2537
  %2651 = vmatprep.subr.mxu0 0.0
  %2652 = vmatpush1.msra.mxu0 %v2643
  %2653 = vmatprep.subr.mxu0 0.0
  %2654 = vmatpush1.msra.mxu0 0.0
  %2655 = vmatprep.subr.mxu0 0.0
  %2656 = vmatpush1.msra.mxu0 0.0
  %2657 = vmatprep.subr.mxu0 0.0
  %2658 = vmatpush1.msra.mxu0 0.0
  %2659 = vmatprep.subr.mxu0 0.0
  %2660 = vmatpush1.msra.mxu0 0.0
  %2661 = vmatprep.subr.mxu0 0.0
  %2662 = vmatpush1.msra.mxu0 0.0
  %2663 = vmatprep.subr.mxu0 0.0
  %2664 = vmatpush1.msra.mxu0 0.0
  %2665 = vmatprep.subr.mxu0 0.0
  %2666 = vmatpush1.msra.mxu0 0.0
  %2667 = vmatprep.subr.mxu0 0.0
  %2668 = vmatpush1.msra.mxu0 0.0
  %2669 = vmatprep.subr.mxu0 0.0
  %2670 = vmatpush1.msra.mxu0 0.0
  %2671 = vmatprep.subr.mxu0 0.0
  %2672 = vmatpush1.msra.mxu0 0.0
  %2673 = vmatprep.subr.mxu0 0.0
  %2674 = vmatpush1.msra.mxu0 0.0
  %2675 = vmatprep.subr.mxu0 0.0
  %2676 = vmatpush1.msra.mxu0 0.0
  %2677 = vmatprep.subr.mxu0 0.0
  %2678 = vmatpush1.msra.mxu0 0.0
  %2679 = vmatprep.subr.mxu0 0.0
  %2680 = vmatpush1.msra.mxu0 0.0
  %2681 = vmatprep.subr.mxu0 0.0
  %2682 = vmatpush1.msra.mxu0 0.0
  %2683 = vmatprep.subr.mxu0 0.0
  %2684 = vmatpush1.msra.mxu0 0.0
  %2685 = vmatprep.subr.mxu0 0.0
  %2686 = vmatpush1.msra.mxu0 0.0
  %2687 = vmatprep.subr.mxu0 0.0
  %2688 = vmatpush1.msra.mxu0 0.0
  %2689 = vmatprep.subr.mxu0 0.0
  %2690 = vmatpush1.msra.mxu0 0.0
  %2691 = vmatprep.subr.mxu0 0.0
  %2692 = vmatpush1.msra.mxu0 0.0
  %2693 = vmatprep.subr.mxu0 0.0
  %2694 = vmatpush1.msra.mxu0 0.0
  %2695 = vmatprep.subr.mxu0 0.0
  %2696 = vmatpush1.msra.mxu0 0.0
  %2697 = vmatprep.subr.mxu0 0.0
  %2698 = vmatpush1.msra.mxu0 0.0
  %2699 = vmatprep.subr.mxu0 0.0
  %2700 = vmatpush1.msra.mxu0 0.0
  %2701 = vmatprep.subr.mxu0 0.0
  %2702 = vmatpush1.msra.mxu0 0.0
  %2703 = vmatprep.subr.mxu0 0.0
  %2704 = vmatpush1.msra.mxu0 0.0
  %2705 = vmatprep.subr.mxu0 0.0
  %2706 = vmatpush1.msra.mxu0 0.0
  %2707 = vmatprep.subr.mxu0 0.0
  %2708 = vmatpush1.msra.mxu0 0.0
  %2709 = vmatprep.mubr.f32.mxu0 0.0
  %2710 = vmatmul.mubr.f32.gmra.mrb[0].mxu0 %v465
  %v2711 = vpop.f32.mrb[0].mxu0
  %v2712 = vadd.f32 0.0, %v2711
  %v2713 = vpop.f32.mrb[0].mxu0
  %2714 = vmatprep.mubr.f32.mxu0 0.0
  %2715 = vmatmul.mubr.f32.gmra.mrb[0].mxu0 %v468
  %v2716 = vpop.f32.mrb[0].mxu0
  %v2717 = vadd.f32 0.0, %v2716
  %v2718 = vpop.f32.mrb[0].mxu0
  %2719 = vmatprep.mubr.f32.mxu0 0.0
  %2720 = vmatmul.mubr.f32.gmra.mrb[0].mxu0 %v471
  %v2721 = vpop.f32.mrb[0].mxu0
  %v2722 = vadd.f32 0.0, %v2721
  %v2723 = vpop.f32.mrb[0].mxu0
  %2724 = vmatprep.mubr.f32.mxu0 0.0
  %2725 = vmatmul.mubr.f32.gmra.mrb[0].mxu0 %v474
  %v2726 = vpop.f32.mrb[0].mxu0
  %v2727 = vadd.f32 0.0, %v2726
  %v2728 = vpop.f32.mrb[0].mxu0
  %2729 = vmatprep.mubr.f32.mxu0 0.0
  %2730 = vmatmul.mubr.f32.gmra.mrb[0].mxu0 %v477
  %v2731 = vpop.f32.mrb[0].mxu0
  %v2732 = vadd.f32 0.0, %v2731
  %v2733 = vpop.f32.mrb[0].mxu0
  %2734 = vdwg.mxu0
  %v2735 = vmax.f32 %v2712, 0.0
  %v2736 = vmax.f32 %v2717, 0.0
  %v2737 = vmax.f32 %v2722, 0.0
  %v2738 = vmax.f32 %v2727, 0.0
  %v2739 = vmax.f32 %v2732, 0.0
  %v2741 = vsel %vm479, %v2739, 0
  %2743 = vmatprep.subr.mxu0 0.0
  %2744 = vmatpush1.msra.mxu0 %v2735
  %2745 = vmatprep.subr.mxu0 0.0
  %2746 = vmatpush1.msra.mxu0 %v2736
  %2747 = vmatprep.subr.mxu0 0.0
  %2748 = vmatpush1.msra.mxu0 %v2737
  %2749 = vmatprep.subr.mxu0 0.0
  %2750 = vmatpush1.msra.mxu0 %v2738
  %2751 = vmatprep.subr.mxu0 0.0
  %2752 = vmatpush1.msra.mxu0 %v2741
  %2753 = vmatprep.subr.mxu0 0.0
  %2754 = vmatpush1.msra.mxu0 0.0
  %2755 = vmatprep.subr.mxu0 0.0
  %2756 = vmatpush1.msra.mxu0 0.0
  %2757 = vmatprep.subr.mxu0 0.0
  %2758 = vmatpush1.msra.mxu0 0.0
  %2759 = vmatprep.subr.mxu0 0.0
  %2760 = vmatpush1.msra.mxu0 0.0
  %2761 = vmatprep.subr.mxu0 0.0
  %2762 = vmatpush1.msra.mxu0 0.0
  %2763 = vmatprep.subr.mxu0 0.0
  %2764 = vmatpush1.msra.mxu0 0.0
  %2765 = vmatprep.subr.mxu0 0.0
  %2766 = vmatpush1.msra.mxu0 0.0
  %2767 = vmatprep.subr.mxu0 0.0
  %2768 = vmatpush1.msra.mxu0 0.0
  %2769 = vmatprep.subr.mxu0 0.0
  %2770 = vmatpush1.msra.mxu0 0.0
  %2771 = vmatprep.subr.mxu0 0.0
  %2772 = vmatpush1.msra.mxu0 0.0
  %2773 = vmatprep.subr.mxu0 0.0
  %2774 = vmatpush1.msra.mxu0 0.0
  %2775 = vmatprep.subr.mxu0 0.0
  %2776 = vmatpush1.msra.mxu0 0.0
  %2777 = vmatprep.subr.mxu0 0.0
  %2778 = vmatpush1.msra.mxu0 0.0
  %2779 = vmatprep.subr.mxu0 0.0
  %2780 = vmatpush1.msra.mxu0 0.0
  %2781 = vmatprep.subr.mxu0 0.0
  %2782 = vmatpush1.msra.mxu0 0.0
  %2783 = vmatprep.subr.mxu0 0.0
  %2784 = vmatpush1.msra.mxu0 0.0
  %2785 = vmatprep.subr.mxu0 0.0
  %2786 = vmatpush1.msra.mxu0 0.0
  %2787 = vmatprep.subr.mxu0 0.0
  %2788 = vmatpush1.msra.mxu0 0.0
  %2789 = vmatprep.subr.mxu0 0.0
  %2790 = vmatpush1.msra.mxu0 0.0
  %2791 = vmatprep.subr.mxu0 0.0
  %2792 = vmatpush1.msra.mxu0 0.0
  %2793 = vmatprep.subr.mxu0 0.0
  %2794 = vmatpush1.msra.mxu0 0.0
  %2795 = vmatprep.subr.mxu0 0.0
  %2796 = vmatpush1.msra.mxu0 0.0
  %2797 = vmatprep.subr.mxu0 0.0
  %2798 = vmatpush1.msra.mxu0 0.0
  %2799 = vmatprep.subr.mxu0 0.0
  %2800 = vmatpush1.msra.mxu0 0.0
  %2801 = vmatprep.subr.mxu0 0.0
  %2802 = vmatpush1.msra.mxu0 0.0
  %2803 = vmatprep.subr.mxu0 0.0
  %2804 = vmatpush1.msra.mxu0 0.0
  %2805 = vmatprep.subr.mxu0 0.0
  %2806 = vmatpush1.msra.mxu0 0.0
  %2807 = vmatprep.mubr.f32.mxu0 0.0
  %2808 = vmatmul.mubr.f32.gmra.mrb[0].mxu0 %v580
  %v2809 = vpop.f32.mrb[0].mxu0
  %v2810 = vadd.f32 0.0, %v2809
  %v2811 = vpop.f32.mrb[0].mxu0
  %2812 = vmatprep.mubr.f32.mxu0 0.0
  %2813 = vmatmul.mubr.f32.gmra.mrb[0].mxu0 %v583
  %v2814 = vpop.f32.mrb[0].mxu0
  %v2815 = vadd.f32 0.0, %v2814
  %v2816 = vpop.f32.mrb[0].mxu0
  %2817 = vmatprep.mubr.f32.mxu0 0.0
  %2818 = vmatmul.mubr.f32.gmra.mrb[0].mxu0 %v586
  %v2819 = vpop.f32.mrb[0].mxu0
  %v2820 = vadd.f32 0.0, %v2819
  %v2821 = vpop.f32.mrb[0].mxu0
  %2822 = vmatprep.mubr.f32.mxu0 0.0
  %2823 = vmatmul.mubr.f32.gmra.mrb[0].mxu0 %v589
  %v2824 = vpop.f32.mrb[0].mxu0
  %v2825 = vadd.f32 0.0, %v2824
  %v2826 = vpop.f32.mrb[0].mxu0
  %2827 = vmatprep.mubr.f32.mxu0 0.0
  %2828 = vmatmul.mubr.f32.gmra.mrb[0].mxu0 %v592
  %v2829 = vpop.f32.mrb[0].mxu0
  %v2830 = vadd.f32 0.0, %v2829
  %v2831 = vpop.f32.mrb[0].mxu0
  %2832 = vdwg.mxu0
  %v2833 = vmax.f32 %v2810, 0.0
  %v2834 = vmax.f32 %v2815, 0.0
  %v2835 = vmax.f32 %v2820, 0.0
  %v2836 = vmax.f32 %v2825, 0.0
  %v2837 = vmax.f32 %v2830, 0.0
  %v2839 = vsel %vm479, %v2837, 0
  %2841 = vmatprep.subr.mxu0 0.0
  %2842 = vmatpush1.msra.mxu0 %v2833
  %2843 = vmatprep.subr.mxu0 0.0
  %2844 = vmatpush1.msra.mxu0 %v2834
  %2845 = vmatprep.subr.mxu0 0.0
  %2846 = vmatpush1.msra.mxu0 %v2835
  %2847 = vmatprep.subr.mxu0 0.0
  %2848 = vmatpush1.msra.mxu0 %v2836
  %2849 = vmatprep.subr.mxu0 0.0
  %2850 = vmatpush1.msra.mxu0 %v2839
  %2851 = vmatprep.subr.mxu0 0.0
  %2852 = vmatpush1.msra.mxu0 0.0
  %2853 = vmatprep.subr.mxu0 0.0
  %2854 = vmatpush1.msra.mxu0 0.0
  %2855 = vmatprep.subr.mxu0 0.0
  %2856 = vmatpush1.msra.mxu0 0.0
  %2857 = vmatprep.subr.mxu0 0.0
  %2858 = vmatpush1.msra.mxu0 0.0
  %2859 = vmatprep.subr.mxu0 0.0
  %2860 = vmatpush1.msra.mxu0 0.0
  %2861 = vmatprep.subr.mxu0 0.0
  %2862 = vmatpush1.msra.mxu0 0.0
  %2863 = vmatprep.subr.mxu0 0.0
  %2864 = vmatpush1.msra.mxu0 0.0
  %2865 = vmatprep.subr.mxu0 0.0
  %2866 = vmatpush1.msra.mxu0 0.0
  %2867 = vmatprep.subr.mxu0 0.0
  %2868 = vmatpush1.msra.mxu0 0.0
  %2869 = vmatprep.subr.mxu0 0.0
  %2870 = vmatpush1.msra.mxu0 0.0
  %2871 = vmatprep.subr.mxu0 0.0
  %2872 = vmatpush1.msra.mxu0 0.0
  %2873 = vmatprep.subr.mxu0 0.0
  %2874 = vmatpush1.msra.mxu0 0.0
  %2875 = vmatprep.subr.mxu0 0.0
  %2876 = vmatpush1.msra.mxu0 0.0
  %2877 = vmatprep.subr.mxu0 0.0
  %2878 = vmatpush1.msra.mxu0 0.0
  %2879 = vmatprep.subr.mxu0 0.0
  %2880 = vmatpush1.msra.mxu0 0.0
  %2881 = vmatprep.subr.mxu0 0.0
  %2882 = vmatpush1.msra.mxu0 0.0
  %2883 = vmatprep.subr.mxu0 0.0
  %2884 = vmatpush1.msra.mxu0 0.0
  %2885 = vmatprep.subr.mxu0 0.0
  %2886 = vmatpush1.msra.mxu0 0.0
  %2887 = vmatprep.subr.mxu0 0.0
  %2888 = vmatpush1.msra.mxu0 0.0
  %2889 = vmatprep.subr.mxu0 0.0
  %2890 = vmatpush1.msra.mxu0 0.0
  %2891 = vmatprep.subr.mxu0 0.0
  %2892 = vmatpush1.msra.mxu0 0.0
  %2893 = vmatprep.subr.mxu0 0.0
  %2894 = vmatpush1.msra.mxu0 0.0
  %2895 = vmatprep.subr.mxu0 0.0
  %2896 = vmatpush1.msra.mxu0 0.0
  %2897 = vmatprep.subr.mxu0 0.0
  %2898 = vmatpush1.msra.mxu0 0.0
  %2899 = vmatprep.subr.mxu0 0.0
  %2900 = vmatpush1.msra.mxu0 0.0
  %2901 = vmatprep.subr.mxu0 0.0
  %2902 = vmatpush1.msra.mxu0 0.0
  %2903 = vmatprep.subr.mxu0 0.0
  %2904 = vmatpush1.msra.mxu0 0.0
  %2905 = vmatprep.mubr.f32.mxu0 0.0
  %2906 = vmatmul.mubr.f32.gmra.mrb[0].mxu0 %v693
  %v2907 = vpop.f32.mrb[0].mxu0
  %v2908 = vadd.f32 0.0, %v2907
  %v2909 = vpop.f32.mrb[0].mxu0
  %2910 = vdwg.mxu0
  %v2911 = vmax.f32 %v2908, 0.0
  %v2912 = vxor.u32 %v2908, 2147483648
  %v2913 = vmul.f32 %v2912, 1.442695
  %v2914 = vpow.pop %v2913
  %v2915 = vadd.f32 %v2914, 1.0
  %v2916 = vrcp.pop %v2915
  %v2917 = vmul.f32 1.0, %v2916
  %v2918 = vmul.f32 %v2911, 0.55714285
  %v2919 = vsub.f32 0.0, %v2918
  %v2920 = vmul.f32 %v2919, 1.442695
  %v2921 = vpow.pop %v2920
  %v2922 = vsub.f32 1.0, %v2921
  %v2923 = vmul.f32 %v2217, %v2922
  %v2924 = vlaneseq
  %v2925 = vshrl.u32 %v2924, 7
  %v2926 = vsub.s32 0, %v2925
  %v2927 = vrot.slane %v2923, %v2926
  %v2928 = vmul.f32 %v2927, %v2917
  %v2929 = vadd.f32 %v2214, %v2928
  %v2930 = vmul.f32 %v2923, 1.7714286
  %v2931 = vadd.f32 %v2216, %v2930
  %v2932 = vmul.f32 %v2217, %v2921
  %v2933 = vmul.f32 %v24, 2.3285713
  %v2934 = vmul.f32 %v25, 2.3285713
  %v2935 = vmul.f32 %v26, 2.3285713
  %v2936 = vmul.f32 %v27, 2.3285713
  %v2937 = vadd.f32 %v20, %v2933
  %v2938 = vadd.f32 %v21, %v2934
  %v2939 = vadd.f32 %v22, %v2935
  %v2940 = vadd.f32 %v23, %v2936
  %v2941 = vand.u32 2147483647, %v2937
  %vm2942 = vcmp.le.f32.partialorder %v2941, 0.7853982
  %vm2943 = vcmp.lt.s32.totalorder %v2937, 0
  %v2944 = vand.u32 %v2937, 2139095040
  %v2945 = vshrl.u32 %v2944, 23
  %v2946 = vsub.s32 %v2945, 127
  %v2947 = vand.u32 2147483647, %v2937
  %v2948 = vand.u32 %v2947, 8388607
  %v2949 = vor.u32 %v2948, 8388608
  %v2950 = vsub.s32 0, %v2949
  %v2951 = vadd.s32 %v2946, 1
  %vm2952 = vcmp.gt.s32.totalorder %v2951, 0
  %v2953 = vsel %vm2952, %v2951, 0
  %v2954 = vshrl.u32 %v2953, 5
  %v2955 = vand.u32 %v2953, 31
  %v2956 = vsub.s32 32, %v2955
  %v2957 = vshrl.u32 683565275, %v2956
  %v2958 = vshll.u32 683565275, %v2955
  %v2959 = vshrl.u32 2475754826, %v2956
  %v2960 = vor.u32 %v2958, %v2959
  %v2961 = vshll.u32 2475754826, %v2955
  %v2962 = vshrl.u32 2131351028, %v2956
  %v2963 = vor.u32 %v2961, %v2962
  %v2964 = vshll.u32 2131351028, %v2955
  %v2965 = vshrl.u32 2102212464, %v2956
  %v2966 = vor.u32 %v2964, %v2965
  %v2967 = vshll.u32 2102212464, %v2955
  %v2968 = vshrl.u32 920167782, %v2956
  %v2969 = vor.u32 %v2967, %v2968
  %v2970 = vshll.u32 920167782, %v2955
  %v2971 = vshrl.u32 1326507024, %v2956
  %v2972 = vor.u32 %v2970, %v2971
  %vm2973 = vcmp.lt.s32.totalorder %v2954, 1
  %vm2974 = vcmp.lt.s32.totalorder %v2954, 2
  %vm2975 = vcmp.lt.s32.totalorder %v2954, 3
  %vm2976 = vcmp.lt.s32.totalorder %v2954, 4
  %v2977 = vsel %vm2973, %v2957, %v2960
  %v2978 = vsel %vm2976, %v2966, 2102212464
  %v2979 = vsel %vm2975, %v2963, %v2978
  %v2980 = vsel %vm2974, %v2977, %v2979
  %v2981 = vsel %vm2973, %v2960, %v2963
  %v2982 = vsel %vm2976, %v2969, 920167782
  %v2983 = vsel %vm2975, %v2966, %v2982
  %v2984 = vsel %vm2974, %v2981, %v2983
  %v2985 = vsel %vm2973, %v2963, %v2966
  %v2986 = vsel %vm2976, %v2972, 1326507024
  %v2987 = vsel %vm2975, %v2969, %v2986
  %v2988 = vsel %vm2974, %v2985, %v2987
  %v2989 = vshll.u32 %v2949, 8
  %v2990 = vmul.u32.u64.compose %v2989, %v2988
  %v2991 = vextract.low.u32 %v2990
  %v2992 = vextract.high.u32 %v2990
  %v2993 = vmul.u32.u64.compose %v2989, %v2984
  %v2994 = vextract.low.u32 %v2993
  %v2995 = vextract.high.u32 %v2993
  %v2996 = vmul.u32 %v2989, %v2980
  %v2997 = vadd.s32 %v2992, %v2994
  %vm2998 = vc.u32 %v2992, %v2994
  %v2999 = vadd.s32 %v2995, 1
  %v3000 = vsel %vm2998, %v2999, %v2995
  %v3001 = vadd.s32 %v2996, %v3000
  %v3002 = vadd.s32 %v3001, 536870912
  %v3003 = vshrl.u32 %v3002, 30
  %v3004 = vshll.u32 %v3003, 30
  %v3005 = vsub.s32 %v3001, %v3004
  %vm3006 = vcmp.lt.s32.totalorder %v3005, 0
  %v3007 = vsub.s32 0, %v3005
  %v3008 = vsel %vm3006, %v3007, %v3005
  %v3009 = vclz %v3008
  %v3010 = vsub.s32 %v3009, 2
  %vm3011 = vcmp.gt.s32.totalorder 0, %v3010
  %v3012 = vsel %vm3011, 0, %v3010
  %v3013 = vsub.s32 32, %v3012
  %v3014 = vshll.u32 %v3005, %v3012
  %v3015 = vshrl.u32 %v2997, %v3013
  %v3016 = vor.u32 %v3014, %v3015
  %v3017 = vsub.s32 4294967266, %v3012
  %v3018 = vadd.s32 %v3017, 127
  %v3019 = vshll.u32 %v3018, 23
  %v3020 = vor.u32 4788187, %v3019
  %v3021 = vand.u32 2147483647, %v3020
  %v3023 = vcvt.s32.f32 %v3016
  %v3024 = vmul.f32 %v3023, %v3021
  %v3025 = vxor.u32 %v3024, 2147483648
  %v3026 = vsel %vm2943, %v3025, %v3024
  %v3027 = vsub.s32 4, %v3003
  %v3028 = vsel %vm2943, %v3027, %v3003
  %v3029 = vsel %vm2942, %v2937, %v3026
  %v3030 = vsel %vm2942, 0, %v3028
  %v3031 = vcosq.f32.pop %v3029
  %v3032 = vsinq.f32.pop %v3029
  %vm3033 = vweird.f32 %v2937
  %v3034 = vadd.s32 %v3030, 3
  %v3035 = vand.u32 %v3034, 3
  %vm3036 = vcmp.lt.s32.totalorder %v3035, 2
  %vm3037 = vcmp.eq.s32.totalorder %v3035, 0
  %v3038 = vxor.u32 %v3032, 2147483648
  %v3039 = vsel %vm3037, %v3031, %v3038
  %vm3040 = vcmp.eq.s32.totalorder %v3035, 2
  %v3041 = vxor.u32 %v3031, 2147483648
  %v3042 = vsel %vm3040, %v3041, %v3032
  %v3043 = vsel %vm3036, %v3039, %v3042
  %v3044 = vsel %vm3033, nan, %v3043
  %v3045 = vand.u32 2147483647, %v2938
  %vm3046 = vcmp.le.f32.partialorder %v3045, 0.7853982
  %vm3047 = vcmp.lt.s32.totalorder %v2938, 0
  %v3048 = vand.u32 %v2938, 2139095040
  %v3049 = vshrl.u32 %v3048, 23
  %v3050 = vsub.s32 %v3049, 127
  %v3051 = vand.u32 2147483647, %v2938
  %v3052 = vand.u32 %v3051, 8388607
  %v3053 = vor.u32 %v3052, 8388608
  %v3054 = vsub.s32 0, %v3053
  %v3055 = vadd.s32 %v3050, 1
  %vm3056 = vcmp.gt.s32.totalorder %v3055, 0
  %v3057 = vsel %vm3056, %v3055, 0
  %v3058 = vshrl.u32 %v3057, 5
  %v3059 = vand.u32 %v3057, 31
  %v3060 = vsub.s32 32, %v3059
  %v3061 = vshrl.u32 683565275, %v3060
  %v3062 = vshll.u32 683565275, %v3059
  %v3063 = vshrl.u32 2475754826, %v3060
  %v3064 = vor.u32 %v3062, %v3063
  %v3065 = vshll.u32 2475754826, %v3059
  %v3066 = vshrl.u32 2131351028, %v3060
  %v3067 = vor.u32 %v3065, %v3066
  %v3068 = vshll.u32 2131351028, %v3059
  %v3069 = vshrl.u32 2102212464, %v3060
  %v3070 = vor.u32 %v3068, %v3069
  %v3071 = vshll.u32 2102212464, %v3059
  %v3072 = vshrl.u32 920167782, %v3060
  %v3073 = vor.u32 %v3071, %v3072
  %v3074 = vshll.u32 920167782, %v3059
  %v3075 = vshrl.u32 1326507024, %v3060
  %v3076 = vor.u32 %v3074, %v3075
  %vm3077 = vcmp.lt.s32.totalorder %v3058, 1
  %vm3078 = vcmp.lt.s32.totalorder %v3058, 2
  %vm3079 = vcmp.lt.s32.totalorder %v3058, 3
  %vm3080 = vcmp.lt.s32.totalorder %v3058, 4
  %v3081 = vsel %vm3077, %v3061, %v3064
  %v3082 = vsel %vm3080, %v3070, 2102212464
  %v3083 = vsel %vm3079, %v3067, %v3082
  %v3084 = vsel %vm3078, %v3081, %v3083
  %v3085 = vsel %vm3077, %v3064, %v3067
  %v3086 = vsel %vm3080, %v3073, 920167782
  %v3087 = vsel %vm3079, %v3070, %v3086
  %v3088 = vsel %vm3078, %v3085, %v3087
  %v3089 = vsel %vm3077, %v3067, %v3070
  %v3090 = vsel %vm3080, %v3076, 1326507024
  %v3091 = vsel %vm3079, %v3073, %v3090
  %v3092 = vsel %vm3078, %v3089, %v3091
  %v3093 = vshll.u32 %v3053, 8
  %v3094 = vmul.u32.u64.compose %v3093, %v3092
  %v3095 = vextract.low.u32 %v3094
  %v3096 = vextract.high.u32 %v3094
  %v3097 = vmul.u32.u64.compose %v3093, %v3088
  %v3098 = vextract.low.u32 %v3097
  %v3099 = vextract.high.u32 %v3097
  %v3100 = vmul.u32 %v3093, %v3084
  %v3101 = vadd.s32 %v3096, %v3098
  %vm3102 = vc.u32 %v3096, %v3098
  %v3103 = vadd.s32 %v3099, 1
  %v3104 = vsel %vm3102, %v3103, %v3099
  %v3105 = vadd.s32 %v3100, %v3104
  %v3106 = vadd.s32 %v3105, 536870912
  %v3107 = vshrl.u32 %v3106, 30
  %v3108 = vshll.u32 %v3107, 30
  %v3109 = vsub.s32 %v3105, %v3108
  %vm3110 = vcmp.lt.s32.totalorder %v3109, 0
  %v3111 = vsub.s32 0, %v3109
  %v3112 = vsel %vm3110, %v3111, %v3109
  %v3113 = vclz %v3112
  %v3114 = vsub.s32 %v3113, 2
  %vm3115 = vcmp.gt.s32.totalorder 0, %v3114
  %v3116 = vsel %vm3115, 0, %v3114
  %v3117 = vsub.s32 32, %v3116
  %v3118 = vshll.u32 %v3109, %v3116
  %v3119 = vshrl.u32 %v3101, %v3117
  %v3120 = vor.u32 %v3118, %v3119
  %v3121 = vsub.s32 4294967266, %v3116
  %v3122 = vadd.s32 %v3121, 127
  %v3123 = vshll.u32 %v3122, 23
  %v3124 = vor.u32 4788187, %v3123
  %v3125 = vand.u32 2147483647, %v3124
  %v3127 = vcvt.s32.f32 %v3120
  %v3128 = vmul.f32 %v3127, %v3125
  %v3129 = vxor.u32 %v3128, 2147483648
  %v3130 = vsel %vm3047, %v3129, %v3128
  %v3131 = vsub.s32 4, %v3107
  %v3132 = vsel %vm3047, %v3131, %v3107
  %v3133 = vsel %vm3046, %v2938, %v3130
  %v3134 = vsel %vm3046, 0, %v3132
  %v3135 = vcosq.f32.pop %v3133
  %v3136 = vsinq.f32.pop %v3133
  %vm3137 = vweird.f32 %v2938
  %v3138 = vadd.s32 %v3134, 3
  %v3139 = vand.u32 %v3138, 3
  %vm3140 = vcmp.lt.s32.totalorder %v3139, 2
  %vm3141 = vcmp.eq.s32.totalorder %v3139, 0
  %v3142 = vxor.u32 %v3136, 2147483648
  %v3143 = vsel %vm3141, %v3135, %v3142
  %vm3144 = vcmp.eq.s32.totalorder %v3139, 2
  %v3145 = vxor.u32 %v3135, 2147483648
  %v3146 = vsel %vm3144, %v3145, %v3136
  %v3147 = vsel %vm3140, %v3143, %v3146
  %v3148 = vsel %vm3137, nan, %v3147
  %v3149 = vand.u32 2147483647, %v2939
  %vm3150 = vcmp.le.f32.partialorder %v3149, 0.7853982
  %vm3151 = vcmp.lt.s32.totalorder %v2939, 0
  %v3152 = vand.u32 %v2939, 2139095040
  %v3153 = vshrl.u32 %v3152, 23
  %v3154 = vsub.s32 %v3153, 127
  %v3155 = vand.u32 2147483647, %v2939
  %v3156 = vand.u32 %v3155, 8388607
  %v3157 = vor.u32 %v3156, 8388608
  %v3158 = vsub.s32 0, %v3157
  %v3159 = vadd.s32 %v3154, 1
  %vm3160 = vcmp.gt.s32.totalorder %v3159, 0
  %v3161 = vsel %vm3160, %v3159, 0
  %v3162 = vshrl.u32 %v3161, 5
  %v3163 = vand.u32 %v3161, 31
  %v3164 = vsub.s32 32, %v3163
  %v3165 = vshrl.u32 683565275, %v3164
  %v3166 = vshll.u32 683565275, %v3163
  %v3167 = vshrl.u32 2475754826, %v3164
  %v3168 = vor.u32 %v3166, %v3167
  %v3169 = vshll.u32 2475754826, %v3163
  %v3170 = vshrl.u32 2131351028, %v3164
  %v3171 = vor.u32 %v3169, %v3170
  %v3172 = vshll.u32 2131351028, %v3163
  %v3173 = vshrl.u32 2102212464, %v3164
  %v3174 = vor.u32 %v3172, %v3173
  %v3175 = vshll.u32 2102212464, %v3163
  %v3176 = vshrl.u32 920167782, %v3164
  %v3177 = vor.u32 %v3175, %v3176
  %v3178 = vshll.u32 920167782, %v3163
  %v3179 = vshrl.u32 1326507024, %v3164
  %v3180 = vor.u32 %v3178, %v3179
  %vm3181 = vcmp.lt.s32.totalorder %v3162, 1
  %vm3182 = vcmp.lt.s32.totalorder %v3162, 2
  %vm3183 = vcmp.lt.s32.totalorder %v3162, 3
  %vm3184 = vcmp.lt.s32.totalorder %v3162, 4
  %v3185 = vsel %vm3181, %v3165, %v3168
  %v3186 = vsel %vm3184, %v3174, 2102212464
  %v3187 = vsel %vm3183, %v3171, %v3186
  %v3188 = vsel %vm3182, %v3185, %v3187
  %v3189 = vsel %vm3181, %v3168, %v3171
  %v3190 = vsel %vm3184, %v3177, 920167782
  %v3191 = vsel %vm3183, %v3174, %v3190
  %v3192 = vsel %vm3182, %v3189, %v3191
  %v3193 = vsel %vm3181, %v3171, %v3174
  %v3194 = vsel %vm3184, %v3180, 1326507024
  %v3195 = vsel %vm3183, %v3177, %v3194
  %v3196 = vsel %vm3182, %v3193, %v3195
  %v3197 = vshll.u32 %v3157, 8
  %v3198 = vmul.u32.u64.compose %v3197, %v3196
  %v3199 = vextract.low.u32 %v3198
  %v3200 = vextract.high.u32 %v3198
  %v3201 = vmul.u32.u64.compose %v3197, %v3192
  %v3202 = vextract.low.u32 %v3201
  %v3203 = vextract.high.u32 %v3201
  %v3204 = vmul.u32 %v3197, %v3188
  %v3205 = vadd.s32 %v3200, %v3202
  %vm3206 = vc.u32 %v3200, %v3202
  %v3207 = vadd.s32 %v3203, 1
  %v3208 = vsel %vm3206, %v3207, %v3203
  %v3209 = vadd.s32 %v3204, %v3208
  %v3210 = vadd.s32 %v3209, 536870912
  %v3211 = vshrl.u32 %v3210, 30
  %v3212 = vshll.u32 %v3211, 30
  %v3213 = vsub.s32 %v3209, %v3212
  %vm3214 = vcmp.lt.s32.totalorder %v3213, 0
  %v3215 = vsub.s32 0, %v3213
  %v3216 = vsel %vm3214, %v3215, %v3213
  %v3217 = vclz %v3216
  %v3218 = vsub.s32 %v3217, 2
  %vm3219 = vcmp.gt.s32.totalorder 0, %v3218
  %v3220 = vsel %vm3219, 0, %v3218
  %v3221 = vsub.s32 32, %v3220
  %v3222 = vshll.u32 %v3213, %v3220
  %v3223 = vshrl.u32 %v3205, %v3221
  %v3224 = vor.u32 %v3222, %v3223
  %v3225 = vsub.s32 4294967266, %v3220
  %v3226 = vadd.s32 %v3225, 127
  %v3227 = vshll.u32 %v3226, 23
  %v3228 = vor.u32 4788187, %v3227
  %v3229 = vand.u32 2147483647, %v3228
  %v3231 = vcvt.s32.f32 %v3224
  %v3232 = vmul.f32 %v3231, %v3229
  %v3233 = vxor.u32 %v3232, 2147483648
  %v3234 = vsel %vm3151, %v3233, %v3232
  %v3235 = vsub.s32 4, %v3211
  %v3236 = vsel %vm3151, %v3235, %v3211
  %v3237 = vsel %vm3150, %v2939, %v3234
  %v3238 = vsel %vm3150, 0, %v3236
  %v3239 = vcosq.f32.pop %v3237
  %v3240 = vsinq.f32.pop %v3237
  %vm3241 = vweird.f32 %v2939
  %v3242 = vadd.s32 %v3238, 3
  %v3243 = vand.u32 %v3242, 3
  %vm3244 = vcmp.lt.s32.totalorder %v3243, 2
  %vm3245 = vcmp.eq.s32.totalorder %v3243, 0
  %v3246 = vxor.u32 %v3240, 2147483648
  %v3247 = vsel %vm3245, %v3239, %v3246
  %vm3248 = vcmp.eq.s32.totalorder %v3243, 2
  %v3249 = vxor.u32 %v3239, 2147483648
  %v3250 = vsel %vm3248, %v3249, %v3240
  %v3251 = vsel %vm3244, %v3247, %v3250
  %v3252 = vsel %vm3241, nan, %v3251
  %v3253 = vand.u32 2147483647, %v2940
  %vm3254 = vcmp.le.f32.partialorder %v3253, 0.7853982
  %vm3255 = vcmp.lt.s32.totalorder %v2940, 0
  %v3256 = vand.u32 %v2940, 2139095040
  %v3257 = vshrl.u32 %v3256, 23
  %v3258 = vsub.s32 %v3257, 127
  %v3259 = vand.u32 2147483647, %v2940
  %v3260 = vand.u32 %v3259, 8388607
  %v3261 = vor.u32 %v3260, 8388608
  %v3262 = vsub.s32 0, %v3261
  %v3263 = vadd.s32 %v3258, 1
  %vm3264 = vcmp.gt.s32.totalorder %v3263, 0
  %v3265 = vsel %vm3264, %v3263, 0
  %v3266 = vshrl.u32 %v3265, 5
  %v3267 = vand.u32 %v3265, 31
  %v3268 = vsub.s32 32, %v3267
  %v3269 = vshrl.u32 683565275, %v3268
  %v3270 = vshll.u32 683565275, %v3267
  %v3271 = vshrl.u32 2475754826, %v3268
  %v3272 = vor.u32 %v3270, %v3271
  %v3273 = vshll.u32 2475754826, %v3267
  %v3274 = vshrl.u32 2131351028, %v3268
  %v3275 = vor.u32 %v3273, %v3274
  %v3276 = vshll.u32 2131351028, %v3267
  %v3277 = vshrl.u32 2102212464, %v3268
  %v3278 = vor.u32 %v3276, %v3277
  %v3279 = vshll.u32 2102212464, %v3267
  %v3280 = vshrl.u32 920167782, %v3268
  %v3281 = vor.u32 %v3279, %v3280
  %v3282 = vshll.u32 920167782, %v3267
  %v3283 = vshrl.u32 1326507024, %v3268
  %v3284 = vor.u32 %v3282, %v3283
  %vm3285 = vcmp.lt.s32.totalorder %v3266, 1
  %vm3286 = vcmp.lt.s32.totalorder %v3266, 2
  %vm3287 = vcmp.lt.s32.totalorder %v3266, 3
  %vm3288 = vcmp.lt.s32.totalorder %v3266, 4
  %v3289 = vsel %vm3285, %v3269, %v3272
  %v3290 = vsel %vm3288, %v3278, 2102212464
  %v3291 = vsel %vm3287, %v3275, %v3290
  %v3292 = vsel %vm3286, %v3289, %v3291
  %v3293 = vsel %vm3285, %v3272, %v3275
  %v3294 = vsel %vm3288, %v3281, 920167782
  %v3295 = vsel %vm3287, %v3278, %v3294
  %v3296 = vsel %vm3286, %v3293, %v3295
  %v3297 = vsel %vm3285, %v3275, %v3278
  %v3298 = vsel %vm3288, %v3284, 1326507024
  %v3299 = vsel %vm3287, %v3281, %v3298
  %v3300 = vsel %vm3286, %v3297, %v3299
  %v3301 = vshll.u32 %v3261, 8
  %v3302 = vmul.u32.u64.compose %v3301, %v3300
  %v3303 = vextract.low.u32 %v3302
  %v3304 = vextract.high.u32 %v3302
  %v3305 = vmul.u32.u64.compose %v3301, %v3296
  %v3306 = vextract.low.u32 %v3305
  %v3307 = vextract.high.u32 %v3305
  %v3308 = vmul.u32 %v3301, %v3292
  %v3309 = vadd.s32 %v3304, %v3306
  %vm3310 = vc.u32 %v3304, %v3306
  %v3311 = vadd.s32 %v3307, 1
  %v3312 = vsel %vm3310, %v3311, %v3307
  %v3313 = vadd.s32 %v3308, %v3312
  %v3314 = vadd.s32 %v3313, 536870912
  %v3315 = vshrl.u32 %v3314, 30
  %v3316 = vshll.u32 %v3315, 30
  %v3317 = vsub.s32 %v3313, %v3316
  %vm3318 = vcmp.lt.s32.totalorder %v3317, 0
  %v3319 = vsub.s32 0, %v3317
  %v3320 = vsel %vm3318, %v3319, %v3317
  %v3321 = vclz %v3320
  %v3322 = vsub.s32 %v3321, 2
  %vm3323 = vcmp.gt.s32.totalorder 0, %v3322
  %v3324 = vsel %vm3323, 0, %v3322
  %v3325 = vsub.s32 32, %v3324
  %v3326 = vshll.u32 %v3317, %v3324
  %v3327 = vshrl.u32 %v3309, %v3325
  %v3328 = vor.u32 %v3326, %v3327
  %v3329 = vsub.s32 4294967266, %v3324
  %v3330 = vadd.s32 %v3329, 127
  %v3331 = vshll.u32 %v3330, 23
  %v3332 = vor.u32 4788187, %v3331
  %v3333 = vand.u32 2147483647, %v3332
  %v3335 = vcvt.s32.f32 %v3328
  %v3336 = vmul.f32 %v3335, %v3333
  %v3337 = vxor.u32 %v3336, 2147483648
  %v3338 = vsel %vm3255, %v3337, %v3336
  %v3339 = vsub.s32 4, %v3315
  %v3340 = vsel %vm3255, %v3339, %v3315
  %v3341 = vsel %vm3254, %v2940, %v3338
  %v3342 = vsel %vm3254, 0, %v3340
  %v3343 = vcosq.f32.pop %v3341
  %v3344 = vsinq.f32.pop %v3341
  %vm3345 = vweird.f32 %v2940
  %v3346 = vadd.s32 %v3342, 3
  %v3347 = vand.u32 %v3346, 3
  %vm3348 = vcmp.lt.s32.totalorder %v3347, 2
  %vm3349 = vcmp.eq.s32.totalorder %v3347, 0
  %v3350 = vxor.u32 %v3344, 2147483648
  %v3351 = vsel %vm3349, %v3343, %v3350
  %vm3352 = vcmp.eq.s32.totalorder %v3347, 2
  %v3353 = vxor.u32 %v3343, 2147483648
  %v3354 = vsel %vm3352, %v3353, %v3344
  %v3355 = vsel %vm3348, %v3351, %v3354
  %v3356 = vsel %vm3345, nan, %v3355
  %v3358 = vsel %vm479, %v3356, 0
  %3360 = vmatprep.subr.mxu0 0.0
  %3361 = vmatpush1.msra.mxu0 %v3044
  %3362 = vmatprep.subr.mxu0 0.0
  %3363 = vmatpush1.msra.mxu0 %v3148
  %3364 = vmatprep.subr.mxu0 0.0
  %3365 = vmatpush1.msra.mxu0 %v3252
  %3366 = vmatprep.subr.mxu0 0.0
  %3367 = vmatpush1.msra.mxu0 %v3358
  %3368 = vmatprep.subr.mxu0 0.0
  %3369 = vmatpush1.msra.mxu0 0.0
  %3370 = vmatprep.subr.mxu0 0.0
  %3371 = vmatpush1.msra.mxu0 0.0
  %3372 = vmatprep.subr.mxu0 0.0
  %3373 = vmatpush1.msra.mxu0 0.0
  %3374 = vmatprep.subr.mxu0 0.0
  %3375 = vmatpush1.msra.mxu0 0.0
  %3376 = vmatprep.subr.mxu0 0.0
  %3377 = vmatpush1.msra.mxu0 0.0
  %3378 = vmatprep.subr.mxu0 0.0
  %3379 = vmatpush1.msra.mxu0 0.0
  %3380 = vmatprep.subr.mxu0 0.0
  %3381 = vmatpush1.msra.mxu0 0.0
  %3382 = vmatprep.subr.mxu0 0.0
  %3383 = vmatpush1.msra.mxu0 0.0
  %3384 = vmatprep.subr.mxu0 0.0
  %3385 = vmatpush1.msra.mxu0 0.0
  %3386 = vmatprep.subr.mxu0 0.0
  %3387 = vmatpush1.msra.mxu0 0.0
  %3388 = vmatprep.subr.mxu0 0.0
  %3389 = vmatpush1.msra.mxu0 0.0
  %3390 = vmatprep.subr.mxu0 0.0
  %3391 = vmatpush1.msra.mxu0 0.0
  %3392 = vmatprep.subr.mxu0 0.0
  %3393 = vmatpush1.msra.mxu0 0.0
  %3394 = vmatprep.subr.mxu0 0.0
  %3395 = vmatpush1.msra.mxu0 0.0
  %3396 = vmatprep.subr.mxu0 0.0
  %3397 = vmatpush1.msra.mxu0 0.0
  %3398 = vmatprep.subr.mxu0 0.0
  %3399 = vmatpush1.msra.mxu0 0.0
  %3400 = vmatprep.subr.mxu0 0.0
  %3401 = vmatpush1.msra.mxu0 0.0
  %3402 = vmatprep.subr.mxu0 0.0
  %3403 = vmatpush1.msra.mxu0 0.0
  %3404 = vmatprep.subr.mxu0 0.0
  %3405 = vmatpush1.msra.mxu0 0.0
  %3406 = vmatprep.subr.mxu0 0.0
  %3407 = vmatpush1.msra.mxu0 0.0
  %3408 = vmatprep.subr.mxu0 0.0
  %3409 = vmatpush1.msra.mxu0 0.0
  %3410 = vmatprep.subr.mxu0 0.0
  %3411 = vmatpush1.msra.mxu0 0.0
  %3412 = vmatprep.subr.mxu0 0.0
  %3413 = vmatpush1.msra.mxu0 0.0
  %3414 = vmatprep.subr.mxu0 0.0
  %3415 = vmatpush1.msra.mxu0 0.0
  %3416 = vmatprep.subr.mxu0 0.0
  %3417 = vmatpush1.msra.mxu0 0.0
  %3418 = vmatprep.subr.mxu0 0.0
  %3419 = vmatpush1.msra.mxu0 0.0
  %3420 = vmatprep.subr.mxu0 0.0
  %3421 = vmatpush1.msra.mxu0 0.0
  %3422 = vmatprep.subr.mxu0 0.0
  %3423 = vmatpush1.msra.mxu0 0.0
  %3424 = vmatprep.mubr.f32.mxu0 0.0
  %3425 = vmatmul.mubr.f32.gmra.mrb[0].mxu0 %v465
  %v3426 = vpop.f32.mrb[0].mxu0
  %v3427 = vadd.f32 0.0, %v3426
  %v3428 = vpop.f32.mrb[0].mxu0
  %3429 = vmatprep.mubr.f32.mxu0 0.0
  %3430 = vmatmul.mubr.f32.gmra.mrb[0].mxu0 %v468
  %v3431 = vpop.f32.mrb[0].mxu0
  %v3432 = vadd.f32 0.0, %v3431
  %v3433 = vpop.f32.mrb[0].mxu0
  %3434 = vmatprep.mubr.f32.mxu0 0.0
  %3435 = vmatmul.mubr.f32.gmra.mrb[0].mxu0 %v471
  %v3436 = vpop.f32.mrb[0].mxu0
  %v3437 = vadd.f32 0.0, %v3436
  %v3438 = vpop.f32.mrb[0].mxu0
  %3439 = vmatprep.mubr.f32.mxu0 0.0
  %3440 = vmatmul.mubr.f32.gmra.mrb[0].mxu0 %v474
  %v3441 = vpop.f32.mrb[0].mxu0
  %v3442 = vadd.f32 0.0, %v3441
  %v3443 = vpop.f32.mrb[0].mxu0
  %3444 = vmatprep.mubr.f32.mxu0 0.0
  %3445 = vmatmul.mubr.f32.gmra.mrb[0].mxu0 %v477
  %v3446 = vpop.f32.mrb[0].mxu0
  %v3447 = vadd.f32 0.0, %v3446
  %v3448 = vpop.f32.mrb[0].mxu0
  %3449 = vdwg.mxu0
  %v3450 = vmax.f32 %v3427, 0.0
  %v3451 = vmax.f32 %v3432, 0.0
  %v3452 = vmax.f32 %v3437, 0.0
  %v3453 = vmax.f32 %v3442, 0.0
  %v3454 = vmax.f32 %v3447, 0.0
  %v3456 = vsel %vm479, %v3454, 0
  %3458 = vmatprep.subr.mxu0 0.0
  %3459 = vmatpush1.msra.mxu0 %v3450
  %3460 = vmatprep.subr.mxu0 0.0
  %3461 = vmatpush1.msra.mxu0 %v3451
  %3462 = vmatprep.subr.mxu0 0.0
  %3463 = vmatpush1.msra.mxu0 %v3452
  %3464 = vmatprep.subr.mxu0 0.0
  %3465 = vmatpush1.msra.mxu0 %v3453
  %3466 = vmatprep.subr.mxu0 0.0
  %3467 = vmatpush1.msra.mxu0 %v3456
  %3468 = vmatprep.subr.mxu0 0.0
  %3469 = vmatpush1.msra.mxu0 0.0
  %3470 = vmatprep.subr.mxu0 0.0
  %3471 = vmatpush1.msra.mxu0 0.0
  %3472 = vmatprep.subr.mxu0 0.0
  %3473 = vmatpush1.msra.mxu0 0.0
  %3474 = vmatprep.subr.mxu0 0.0
  %3475 = vmatpush1.msra.mxu0 0.0
  %3476 = vmatprep.subr.mxu0 0.0
  %3477 = vmatpush1.msra.mxu0 0.0
  %3478 = vmatprep.subr.mxu0 0.0
  %3479 = vmatpush1.msra.mxu0 0.0
  %3480 = vmatprep.subr.mxu0 0.0
  %3481 = vmatpush1.msra.mxu0 0.0
  %3482 = vmatprep.subr.mxu0 0.0
  %3483 = vmatpush1.msra.mxu0 0.0
  %3484 = vmatprep.subr.mxu0 0.0
  %3485 = vmatpush1.msra.mxu0 0.0
  %3486 = vmatprep.subr.mxu0 0.0
  %3487 = vmatpush1.msra.mxu0 0.0
  %3488 = vmatprep.subr.mxu0 0.0
  %3489 = vmatpush1.msra.mxu0 0.0
  %3490 = vmatprep.subr.mxu0 0.0
  %3491 = vmatpush1.msra.mxu0 0.0
  %3492 = vmatprep.subr.mxu0 0.0
  %3493 = vmatpush1.msra.mxu0 0.0
  %3494 = vmatprep.subr.mxu0 0.0
  %3495 = vmatpush1.msra.mxu0 0.0
  %3496 = vmatprep.subr.mxu0 0.0
  %3497 = vmatpush1.msra.mxu0 0.0
  %3498 = vmatprep.subr.mxu0 0.0
  %3499 = vmatpush1.msra.mxu0 0.0
  %3500 = vmatprep.subr.mxu0 0.0
  %3501 = vmatpush1.msra.mxu0 0.0
  %3502 = vmatprep.subr.mxu0 0.0
  %3503 = vmatpush1.msra.mxu0 0.0
  %3504 = vmatprep.subr.mxu0 0.0
  %3505 = vmatpush1.msra.mxu0 0.0
  %3506 = vmatprep.subr.mxu0 0.0
  %3507 = vmatpush1.msra.mxu0 0.0
  %3508 = vmatprep.subr.mxu0 0.0
  %3509 = vmatpush1.msra.mxu0 0.0
  %3510 = vmatprep.subr.mxu0 0.0
  %3511 = vmatpush1.msra.mxu0 0.0
  %3512 = vmatprep.subr.mxu0 0.0
  %3513 = vmatpush1.msra.mxu0 0.0
  %3514 = vmatprep.subr.mxu0 0.0
  %3515 = vmatpush1.msra.mxu0 0.0
  %3516 = vmatprep.subr.mxu0 0.0
  %3517 = vmatpush1.msra.mxu0 0.0
  %3518 = vmatprep.subr.mxu0 0.0
  %3519 = vmatpush1.msra.mxu0 0.0
  %3520 = vmatprep.subr.mxu0 0.0
  %3521 = vmatpush1.msra.mxu0 0.0
  %3522 = vmatprep.mubr.f32.mxu0 0.0
  %3523 = vmatmul.mubr.f32.gmra.mrb[0].mxu0 %v580
  %v3524 = vpop.f32.mrb[0].mxu0
  %v3525 = vadd.f32 0.0, %v3524
  %v3526 = vpop.f32.mrb[0].mxu0
  %3527 = vmatprep.mubr.f32.mxu0 0.0
  %3528 = vmatmul.mubr.f32.gmra.mrb[0].mxu0 %v583
  %v3529 = vpop.f32.mrb[0].mxu0
  %v3530 = vadd.f32 0.0, %v3529
  %v3531 = vpop.f32.mrb[0].mxu0
  %3532 = vmatprep.mubr.f32.mxu0 0.0
  %3533 = vmatmul.mubr.f32.gmra.mrb[0].mxu0 %v586
  %v3534 = vpop.f32.mrb[0].mxu0
  %v3535 = vadd.f32 0.0, %v3534
  %v3536 = vpop.f32.mrb[0].mxu0
  %3537 = vmatprep.mubr.f32.mxu0 0.0
  %3538 = vmatmul.mubr.f32.gmra.mrb[0].mxu0 %v589
  %v3539 = vpop.f32.mrb[0].mxu0
  %v3540 = vadd.f32 0.0, %v3539
  %v3541 = vpop.f32.mrb[0].mxu0
  %3542 = vmatprep.mubr.f32.mxu0 0.0
  %3543 = vmatmul.mubr.f32.gmra.mrb[0].mxu0 %v592
  %v3544 = vpop.f32.mrb[0].mxu0
  %v3545 = vadd.f32 0.0, %v3544
  %v3546 = vpop.f32.mrb[0].mxu0
  %3547 = vdwg.mxu0
  %v3548 = vmax.f32 %v3525, 0.0
  %v3549 = vmax.f32 %v3530, 0.0
  %v3550 = vmax.f32 %v3535, 0.0
  %v3551 = vmax.f32 %v3540, 0.0
  %v3552 = vmax.f32 %v3545, 0.0
  %v3554 = vsel %vm479, %v3552, 0
  %3556 = vmatprep.subr.mxu0 0.0
  %3557 = vmatpush1.msra.mxu0 %v3548
  %3558 = vmatprep.subr.mxu0 0.0
  %3559 = vmatpush1.msra.mxu0 %v3549
  %3560 = vmatprep.subr.mxu0 0.0
  %3561 = vmatpush1.msra.mxu0 %v3550
  %3562 = vmatprep.subr.mxu0 0.0
  %3563 = vmatpush1.msra.mxu0 %v3551
  %3564 = vmatprep.subr.mxu0 0.0
  %3565 = vmatpush1.msra.mxu0 %v3554
  %3566 = vmatprep.subr.mxu0 0.0
  %3567 = vmatpush1.msra.mxu0 0.0
  %3568 = vmatprep.subr.mxu0 0.0
  %3569 = vmatpush1.msra.mxu0 0.0
  %3570 = vmatprep.subr.mxu0 0.0
  %3571 = vmatpush1.msra.mxu0 0.0
  %3572 = vmatprep.subr.mxu0 0.0
  %3573 = vmatpush1.msra.mxu0 0.0
  %3574 = vmatprep.subr.mxu0 0.0
  %3575 = vmatpush1.msra.mxu0 0.0
  %3576 = vmatprep.subr.mxu0 0.0
  %3577 = vmatpush1.msra.mxu0 0.0
  %3578 = vmatprep.subr.mxu0 0.0
  %3579 = vmatpush1.msra.mxu0 0.0
  %3580 = vmatprep.subr.mxu0 0.0
  %3581 = vmatpush1.msra.mxu0 0.0
  %3582 = vmatprep.subr.mxu0 0.0
  %3583 = vmatpush1.msra.mxu0 0.0
  %3584 = vmatprep.subr.mxu0 0.0
  %3585 = vmatpush1.msra.mxu0 0.0
  %3586 = vmatprep.subr.mxu0 0.0
  %3587 = vmatpush1.msra.mxu0 0.0
  %3588 = vmatprep.subr.mxu0 0.0
  %3589 = vmatpush1.msra.mxu0 0.0
  %3590 = vmatprep.subr.mxu0 0.0
  %3591 = vmatpush1.msra.mxu0 0.0
  %3592 = vmatprep.subr.mxu0 0.0
  %3593 = vmatpush1.msra.mxu0 0.0
  %3594 = vmatprep.subr.mxu0 0.0
  %3595 = vmatpush1.msra.mxu0 0.0
  %3596 = vmatprep.subr.mxu0 0.0
  %3597 = vmatpush1.msra.mxu0 0.0
  %3598 = vmatprep.subr.mxu0 0.0
  %3599 = vmatpush1.msra.mxu0 0.0
  %3600 = vmatprep.subr.mxu0 0.0
  %3601 = vmatpush1.msra.mxu0 0.0
  %3602 = vmatprep.subr.mxu0 0.0
  %3603 = vmatpush1.msra.mxu0 0.0
  %3604 = vmatprep.subr.mxu0 0.0
  %3605 = vmatpush1.msra.mxu0 0.0
  %3606 = vmatprep.subr.mxu0 0.0
  %3607 = vmatpush1.msra.mxu0 0.0
  %3608 = vmatprep.subr.mxu0 0.0
  %3609 = vmatpush1.msra.mxu0 0.0
  %3610 = vmatprep.subr.mxu0 0.0
  %3611 = vmatpush1.msra.mxu0 0.0
  %3612 = vmatprep.subr.mxu0 0.0
  %3613 = vmatpush1.msra.mxu0 0.0
  %3614 = vmatprep.subr.mxu0 0.0
  %3615 = vmatpush1.msra.mxu0 0.0
  %3616 = vmatprep.subr.mxu0 0.0
  %3617 = vmatpush1.msra.mxu0 0.0
  %3618 = vmatprep.subr.mxu0 0.0
  %3619 = vmatpush1.msra.mxu0 0.0
  %3620 = vmatprep.mubr.f32.mxu0 0.0
  %3621 = vmatmul.mubr.f32.gmra.mrb[0].mxu0 %v693
  %v3622 = vpop.f32.mrb[0].mxu0
  %v3623 = vadd.f32 0.0, %v3622
  %v3624 = vpop.f32.mrb[0].mxu0
  %3625 = vdwg.mxu0
  %v3626 = vmax.f32 %v3623, 0.0
  %v3627 = vxor.u32 %v3623, 2147483648
  %v3628 = vmul.f32 %v3627, 1.442695
  %v3629 = vpow.pop %v3628
  %v3630 = vadd.f32 %v3629, 1.0
  %v3631 = vrcp.pop %v3630
  %v3632 = vmul.f32 1.0, %v3631
  %v3633 = vmul.f32 %v3626, 0.55714285
  %v3634 = vsub.f32 0.0, %v3633
  %v3635 = vmul.f32 %v3634, 1.442695
  %v3636 = vpow.pop %v3635
  %v3637 = vsub.f32 1.0, %v3636
  %v3638 = vmul.f32 %v2932, %v3637
  %v3639 = vlaneseq
  %v3640 = vshrl.u32 %v3639, 7
  %v3641 = vsub.s32 0, %v3640
  %v3642 = vrot.slane %v3638, %v3641
  %v3643 = vmul.f32 %v3642, %v3632
  %v3644 = vadd.f32 %v2929, %v3643
  %v3645 = vmul.f32 %v3638, 2.3285713
  %v3646 = vadd.f32 %v2931, %v3645
  %v3647 = vmul.f32 %v2932, %v3636
  %v3648 = vmul.f32 %v24, 2.8857143
  %v3649 = vmul.f32 %v25, 2.8857143
  %v3650 = vmul.f32 %v26, 2.8857143
  %v3651 = vmul.f32 %v27, 2.8857143
  %v3652 = vadd.f32 %v20, %v3648
  %v3653 = vadd.f32 %v21, %v3649
  %v3654 = vadd.f32 %v22, %v3650
  %v3655 = vadd.f32 %v23, %v3651
  %v3656 = vand.u32 2147483647, %v3652
  %vm3657 = vcmp.le.f32.partialorder %v3656, 0.7853982
  %vm3658 = vcmp.lt.s32.totalorder %v3652, 0
  %v3659 = vand.u32 %v3652, 2139095040
  %v3660 = vshrl.u32 %v3659, 23
  %v3661 = vsub.s32 %v3660, 127
  %v3662 = vand.u32 2147483647, %v3652
  %v3663 = vand.u32 %v3662, 8388607
  %v3664 = vor.u32 %v3663, 8388608
  %v3665 = vsub.s32 0, %v3664
  %v3666 = vadd.s32 %v3661, 1
  %vm3667 = vcmp.gt.s32.totalorder %v3666, 0
  %v3668 = vsel %vm3667, %v3666, 0
  %v3669 = vshrl.u32 %v3668, 5
  %v3670 = vand.u32 %v3668, 31
  %v3671 = vsub.s32 32, %v3670
  %v3672 = vshrl.u32 683565275, %v3671
  %v3673 = vshll.u32 683565275, %v3670
  %v3674 = vshrl.u32 2475754826, %v3671
  %v3675 = vor.u32 %v3673, %v3674
  %v3676 = vshll.u32 2475754826, %v3670
  %v3677 = vshrl.u32 2131351028, %v3671
  %v3678 = vor.u32 %v3676, %v3677
  %v3679 = vshll.u32 2131351028, %v3670
  %v3680 = vshrl.u32 2102212464, %v3671
  %v3681 = vor.u32 %v3679, %v3680
  %v3682 = vshll.u32 2102212464, %v3670
  %v3683 = vshrl.u32 920167782, %v3671
  %v3684 = vor.u32 %v3682, %v3683
  %v3685 = vshll.u32 920167782, %v3670
  %v3686 = vshrl.u32 1326507024, %v3671
  %v3687 = vor.u32 %v3685, %v3686
  %vm3688 = vcmp.lt.s32.totalorder %v3669, 1
  %vm3689 = vcmp.lt.s32.totalorder %v3669, 2
  %vm3690 = vcmp.lt.s32.totalorder %v3669, 3
  %vm3691 = vcmp.lt.s32.totalorder %v3669, 4
  %v3692 = vsel %vm3688, %v3672, %v3675
  %v3693 = vsel %vm3691, %v3681, 2102212464
  %v3694 = vsel %vm3690, %v3678, %v3693
  %v3695 = vsel %vm3689, %v3692, %v3694
  %v3696 = vsel %vm3688, %v3675, %v3678
  %v3697 = vsel %vm3691, %v3684, 920167782
  %v3698 = vsel %vm3690, %v3681, %v3697
  %v3699 = vsel %vm3689, %v3696, %v3698
  %v3700 = vsel %vm3688, %v3678, %v3681
  %v3701 = vsel %vm3691, %v3687, 1326507024
  %v3702 = vsel %vm3690, %v3684, %v3701
  %v3703 = vsel %vm3689, %v3700, %v3702
  %v3704 = vshll.u32 %v3664, 8
  %v3705 = vmul.u32.u64.compose %v3704, %v3703
  %v3706 = vextract.low.u32 %v3705
  %v3707 = vextract.high.u32 %v3705
  %v3708 = vmul.u32.u64.compose %v3704, %v3699
  %v3709 = vextract.low.u32 %v3708
  %v3710 = vextract.high.u32 %v3708
  %v3711 = vmul.u32 %v3704, %v3695
  %v3712 = vadd.s32 %v3707, %v3709
  %vm3713 = vc.u32 %v3707, %v3709
  %v3714 = vadd.s32 %v3710, 1
  %v3715 = vsel %vm3713, %v3714, %v3710
  %v3716 = vadd.s32 %v3711, %v3715
  %v3717 = vadd.s32 %v3716, 536870912
  %v3718 = vshrl.u32 %v3717, 30
  %v3719 = vshll.u32 %v3718, 30
  %v3720 = vsub.s32 %v3716, %v3719
  %vm3721 = vcmp.lt.s32.totalorder %v3720, 0
  %v3722 = vsub.s32 0, %v3720
  %v3723 = vsel %vm3721, %v3722, %v3720
  %v3724 = vclz %v3723
  %v3725 = vsub.s32 %v3724, 2
  %vm3726 = vcmp.gt.s32.totalorder 0, %v3725
  %v3727 = vsel %vm3726, 0, %v3725
  %v3728 = vsub.s32 32, %v3727
  %v3729 = vshll.u32 %v3720, %v3727
  %v3730 = vshrl.u32 %v3712, %v3728
  %v3731 = vor.u32 %v3729, %v3730
  %v3732 = vsub.s32 4294967266, %v3727
  %v3733 = vadd.s32 %v3732, 127
  %v3734 = vshll.u32 %v3733, 23
  %v3735 = vor.u32 4788187, %v3734
  %v3736 = vand.u32 2147483647, %v3735
  %v3738 = vcvt.s32.f32 %v3731
  %v3739 = vmul.f32 %v3738, %v3736
  %v3740 = vxor.u32 %v3739, 2147483648
  %v3741 = vsel %vm3658, %v3740, %v3739
  %v3742 = vsub.s32 4, %v3718
  %v3743 = vsel %vm3658, %v3742, %v3718
  %v3744 = vsel %vm3657, %v3652, %v3741
  %v3745 = vsel %vm3657, 0, %v3743
  %v3746 = vcosq.f32.pop %v3744
  %v3747 = vsinq.f32.pop %v3744
  %vm3748 = vweird.f32 %v3652
  %v3749 = vadd.s32 %v3745, 3
  %v3750 = vand.u32 %v3749, 3
  %vm3751 = vcmp.lt.s32.totalorder %v3750, 2
  %vm3752 = vcmp.eq.s32.totalorder %v3750, 0
  %v3753 = vxor.u32 %v3747, 2147483648
  %v3754 = vsel %vm3752, %v3746, %v3753
  %vm3755 = vcmp.eq.s32.totalorder %v3750, 2
  %v3756 = vxor.u32 %v3746, 2147483648
  %v3757 = vsel %vm3755, %v3756, %v3747
  %v3758 = vsel %vm3751, %v3754, %v3757
  %v3759 = vsel %vm3748, nan, %v3758
  %v3760 = vand.u32 2147483647, %v3653
  %vm3761 = vcmp.le.f32.partialorder %v3760, 0.7853982
  %vm3762 = vcmp.lt.s32.totalorder %v3653, 0
  %v3763 = vand.u32 %v3653, 2139095040
  %v3764 = vshrl.u32 %v3763, 23
  %v3765 = vsub.s32 %v3764, 127
  %v3766 = vand.u32 2147483647, %v3653
  %v3767 = vand.u32 %v3766, 8388607
  %v3768 = vor.u32 %v3767, 8388608
  %v3769 = vsub.s32 0, %v3768
  %v3770 = vadd.s32 %v3765, 1
  %vm3771 = vcmp.gt.s32.totalorder %v3770, 0
  %v3772 = vsel %vm3771, %v3770, 0
  %v3773 = vshrl.u32 %v3772, 5
  %v3774 = vand.u32 %v3772, 31
  %v3775 = vsub.s32 32, %v3774
  %v3776 = vshrl.u32 683565275, %v3775
  %v3777 = vshll.u32 683565275, %v3774
  %v3778 = vshrl.u32 2475754826, %v3775
  %v3779 = vor.u32 %v3777, %v3778
  %v3780 = vshll.u32 2475754826, %v3774
  %v3781 = vshrl.u32 2131351028, %v3775
  %v3782 = vor.u32 %v3780, %v3781
  %v3783 = vshll.u32 2131351028, %v3774
  %v3784 = vshrl.u32 2102212464, %v3775
  %v3785 = vor.u32 %v3783, %v3784
  %v3786 = vshll.u32 2102212464, %v3774
  %v3787 = vshrl.u32 920167782, %v3775
  %v3788 = vor.u32 %v3786, %v3787
  %v3789 = vshll.u32 920167782, %v3774
  %v3790 = vshrl.u32 1326507024, %v3775
  %v3791 = vor.u32 %v3789, %v3790
  %vm3792 = vcmp.lt.s32.totalorder %v3773, 1
  %vm3793 = vcmp.lt.s32.totalorder %v3773, 2
  %vm3794 = vcmp.lt.s32.totalorder %v3773, 3
  %vm3795 = vcmp.lt.s32.totalorder %v3773, 4
  %v3796 = vsel %vm3792, %v3776, %v3779
  %v3797 = vsel %vm3795, %v3785, 2102212464
  %v3798 = vsel %vm3794, %v3782, %v3797
  %v3799 = vsel %vm3793, %v3796, %v3798
  %v3800 = vsel %vm3792, %v3779, %v3782
  %v3801 = vsel %vm3795, %v3788, 920167782
  %v3802 = vsel %vm3794, %v3785, %v3801
  %v3803 = vsel %vm3793, %v3800, %v3802
  %v3804 = vsel %vm3792, %v3782, %v3785
  %v3805 = vsel %vm3795, %v3791, 1326507024
  %v3806 = vsel %vm3794, %v3788, %v3805
  %v3807 = vsel %vm3793, %v3804, %v3806
  %v3808 = vshll.u32 %v3768, 8
  %v3809 = vmul.u32.u64.compose %v3808, %v3807
  %v3810 = vextract.low.u32 %v3809
  %v3811 = vextract.high.u32 %v3809
  %v3812 = vmul.u32.u64.compose %v3808, %v3803
  %v3813 = vextract.low.u32 %v3812
  %v3814 = vextract.high.u32 %v3812
  %v3815 = vmul.u32 %v3808, %v3799
  %v3816 = vadd.s32 %v3811, %v3813
  %vm3817 = vc.u32 %v3811, %v3813
  %v3818 = vadd.s32 %v3814, 1
  %v3819 = vsel %vm3817, %v3818, %v3814
  %v3820 = vadd.s32 %v3815, %v3819
  %v3821 = vadd.s32 %v3820, 536870912
  %v3822 = vshrl.u32 %v3821, 30
  %v3823 = vshll.u32 %v3822, 30
  %v3824 = vsub.s32 %v3820, %v3823
  %vm3825 = vcmp.lt.s32.totalorder %v3824, 0
  %v3826 = vsub.s32 0, %v3824
  %v3827 = vsel %vm3825, %v3826, %v3824
  %v3828 = vclz %v3827
  %v3829 = vsub.s32 %v3828, 2
  %vm3830 = vcmp.gt.s32.totalorder 0, %v3829
  %v3831 = vsel %vm3830, 0, %v3829
  %v3832 = vsub.s32 32, %v3831
  %v3833 = vshll.u32 %v3824, %v3831
  %v3834 = vshrl.u32 %v3816, %v3832
  %v3835 = vor.u32 %v3833, %v3834
  %v3836 = vsub.s32 4294967266, %v3831
  %v3837 = vadd.s32 %v3836, 127
  %v3838 = vshll.u32 %v3837, 23
  %v3839 = vor.u32 4788187, %v3838
  %v3840 = vand.u32 2147483647, %v3839
  %v3842 = vcvt.s32.f32 %v3835
  %v3843 = vmul.f32 %v3842, %v3840
  %v3844 = vxor.u32 %v3843, 2147483648
  %v3845 = vsel %vm3762, %v3844, %v3843
  %v3846 = vsub.s32 4, %v3822
  %v3847 = vsel %vm3762, %v3846, %v3822
  %v3848 = vsel %vm3761, %v3653, %v3845
  %v3849 = vsel %vm3761, 0, %v3847
  %v3850 = vcosq.f32.pop %v3848
  %v3851 = vsinq.f32.pop %v3848
  %vm3852 = vweird.f32 %v3653
  %v3853 = vadd.s32 %v3849, 3
  %v3854 = vand.u32 %v3853, 3
  %vm3855 = vcmp.lt.s32.totalorder %v3854, 2
  %vm3856 = vcmp.eq.s32.totalorder %v3854, 0
  %v3857 = vxor.u32 %v3851, 2147483648
  %v3858 = vsel %vm3856, %v3850, %v3857
  %vm3859 = vcmp.eq.s32.totalorder %v3854, 2
  %v3860 = vxor.u32 %v3850, 2147483648
  %v3861 = vsel %vm3859, %v3860, %v3851
  %v3862 = vsel %vm3855, %v3858, %v3861
  %v3863 = vsel %vm3852, nan, %v3862
  %v3864 = vand.u32 2147483647, %v3654
  %vm3865 = vcmp.le.f32.partialorder %v3864, 0.7853982
  %vm3866 = vcmp.lt.s32.totalorder %v3654, 0
  %v3867 = vand.u32 %v3654, 2139095040
  %v3868 = vshrl.u32 %v3867, 23
  %v3869 = vsub.s32 %v3868, 127
  %v3870 = vand.u32 2147483647, %v3654
  %v3871 = vand.u32 %v3870, 8388607
  %v3872 = vor.u32 %v3871, 8388608
  %v3873 = vsub.s32 0, %v3872
  %v3874 = vadd.s32 %v3869, 1
  %vm3875 = vcmp.gt.s32.totalorder %v3874, 0
  %v3876 = vsel %vm3875, %v3874, 0
  %v3877 = vshrl.u32 %v3876, 5
  %v3878 = vand.u32 %v3876, 31
  %v3879 = vsub.s32 32, %v3878
  %v3880 = vshrl.u32 683565275, %v3879
  %v3881 = vshll.u32 683565275, %v3878
  %v3882 = vshrl.u32 2475754826, %v3879
  %v3883 = vor.u32 %v3881, %v3882
  %v3884 = vshll.u32 2475754826, %v3878
  %v3885 = vshrl.u32 2131351028, %v3879
  %v3886 = vor.u32 %v3884, %v3885
  %v3887 = vshll.u32 2131351028, %v3878
  %v3888 = vshrl.u32 2102212464, %v3879
  %v3889 = vor.u32 %v3887, %v3888
  %v3890 = vshll.u32 2102212464, %v3878
  %v3891 = vshrl.u32 920167782, %v3879
  %v3892 = vor.u32 %v3890, %v3891
  %v3893 = vshll.u32 920167782, %v3878
  %v3894 = vshrl.u32 1326507024, %v3879
  %v3895 = vor.u32 %v3893, %v3894
  %vm3896 = vcmp.lt.s32.totalorder %v3877, 1
  %vm3897 = vcmp.lt.s32.totalorder %v3877, 2
  %vm3898 = vcmp.lt.s32.totalorder %v3877, 3
  %vm3899 = vcmp.lt.s32.totalorder %v3877, 4
  %v3900 = vsel %vm3896, %v3880, %v3883
  %v3901 = vsel %vm3899, %v3889, 2102212464
  %v3902 = vsel %vm3898, %v3886, %v3901
  %v3903 = vsel %vm3897, %v3900, %v3902
  %v3904 = vsel %vm3896, %v3883, %v3886
  %v3905 = vsel %vm3899, %v3892, 920167782
  %v3906 = vsel %vm3898, %v3889, %v3905
  %v3907 = vsel %vm3897, %v3904, %v3906
  %v3908 = vsel %vm3896, %v3886, %v3889
  %v3909 = vsel %vm3899, %v3895, 1326507024
  %v3910 = vsel %vm3898, %v3892, %v3909
  %v3911 = vsel %vm3897, %v3908, %v3910
  %v3912 = vshll.u32 %v3872, 8
  %v3913 = vmul.u32.u64.compose %v3912, %v3911
  %v3914 = vextract.low.u32 %v3913
  %v3915 = vextract.high.u32 %v3913
  %v3916 = vmul.u32.u64.compose %v3912, %v3907
  %v3917 = vextract.low.u32 %v3916
  %v3918 = vextract.high.u32 %v3916
  %v3919 = vmul.u32 %v3912, %v3903
  %v3920 = vadd.s32 %v3915, %v3917
  %vm3921 = vc.u32 %v3915, %v3917
  %v3922 = vadd.s32 %v3918, 1
  %v3923 = vsel %vm3921, %v3922, %v3918
  %v3924 = vadd.s32 %v3919, %v3923
  %v3925 = vadd.s32 %v3924, 536870912
  %v3926 = vshrl.u32 %v3925, 30
  %v3927 = vshll.u32 %v3926, 30
  %v3928 = vsub.s32 %v3924, %v3927
  %vm3929 = vcmp.lt.s32.totalorder %v3928, 0
  %v3930 = vsub.s32 0, %v3928
  %v3931 = vsel %vm3929, %v3930, %v3928
  %v3932 = vclz %v3931
  %v3933 = vsub.s32 %v3932, 2
  %vm3934 = vcmp.gt.s32.totalorder 0, %v3933
  %v3935 = vsel %vm3934, 0, %v3933
  %v3936 = vsub.s32 32, %v3935
  %v3937 = vshll.u32 %v3928, %v3935
  %v3938 = vshrl.u32 %v3920, %v3936
  %v3939 = vor.u32 %v3937, %v3938
  %v3940 = vsub.s32 4294967266, %v3935
  %v3941 = vadd.s32 %v3940, 127
  %v3942 = vshll.u32 %v3941, 23
  %v3943 = vor.u32 4788187, %v3942
  %v3944 = vand.u32 2147483647, %v3943
  %v3946 = vcvt.s32.f32 %v3939
  %v3947 = vmul.f32 %v3946, %v3944
  %v3948 = vxor.u32 %v3947, 2147483648
  %v3949 = vsel %vm3866, %v3948, %v3947
  %v3950 = vsub.s32 4, %v3926
  %v3951 = vsel %vm3866, %v3950, %v3926
  %v3952 = vsel %vm3865, %v3654, %v3949
  %v3953 = vsel %vm3865, 0, %v3951
  %v3954 = vcosq.f32.pop %v3952
  %v3955 = vsinq.f32.pop %v3952
  %vm3956 = vweird.f32 %v3654
  %v3957 = vadd.s32 %v3953, 3
  %v3958 = vand.u32 %v3957, 3
  %vm3959 = vcmp.lt.s32.totalorder %v3958, 2
  %vm3960 = vcmp.eq.s32.totalorder %v3958, 0
  %v3961 = vxor.u32 %v3955, 2147483648
  %v3962 = vsel %vm3960, %v3954, %v3961
  %vm3963 = vcmp.eq.s32.totalorder %v3958, 2
  %v3964 = vxor.u32 %v3954, 2147483648
  %v3965 = vsel %vm3963, %v3964, %v3955
  %v3966 = vsel %vm3959, %v3962, %v3965
  %v3967 = vsel %vm3956, nan, %v3966
  %v3968 = vand.u32 2147483647, %v3655
  %vm3969 = vcmp.le.f32.partialorder %v3968, 0.7853982
  %vm3970 = vcmp.lt.s32.totalorder %v3655, 0
  %v3971 = vand.u32 %v3655, 2139095040
  %v3972 = vshrl.u32 %v3971, 23
  %v3973 = vsub.s32 %v3972, 127
  %v3974 = vand.u32 2147483647, %v3655
  %v3975 = vand.u32 %v3974, 8388607
  %v3976 = vor.u32 %v3975, 8388608
  %v3977 = vsub.s32 0, %v3976
  %v3978 = vadd.s32 %v3973, 1
  %vm3979 = vcmp.gt.s32.totalorder %v3978, 0
  %v3980 = vsel %vm3979, %v3978, 0
  %v3981 = vshrl.u32 %v3980, 5
  %v3982 = vand.u32 %v3980, 31
  %v3983 = vsub.s32 32, %v3982
  %v3984 = vshrl.u32 683565275, %v3983
  %v3985 = vshll.u32 683565275, %v3982
  %v3986 = vshrl.u32 2475754826, %v3983
  %v3987 = vor.u32 %v3985, %v3986
  %v3988 = vshll.u32 2475754826, %v3982
  %v3989 = vshrl.u32 2131351028, %v3983
  %v3990 = vor.u32 %v3988, %v3989
  %v3991 = vshll.u32 2131351028, %v3982
  %v3992 = vshrl.u32 2102212464, %v3983
  %v3993 = vor.u32 %v3991, %v3992
  %v3994 = vshll.u32 2102212464, %v3982
  %v3995 = vshrl.u32 920167782, %v3983
  %v3996 = vor.u32 %v3994, %v3995
  %v3997 = vshll.u32 920167782, %v3982
  %v3998 = vshrl.u32 1326507024, %v3983
  %v3999 = vor.u32 %v3997, %v3998
  %vm4000 = vcmp.lt.s32.totalorder %v3981, 1
  %vm4001 = vcmp.lt.s32.totalorder %v3981, 2
  %vm4002 = vcmp.lt.s32.totalorder %v3981, 3
  %vm4003 = vcmp.lt.s32.totalorder %v3981, 4
  %v4004 = vsel %vm4000, %v3984, %v3987
  %v4005 = vsel %vm4003, %v3993, 2102212464
  %v4006 = vsel %vm4002, %v3990, %v4005
  %v4007 = vsel %vm4001, %v4004, %v4006
  %v4008 = vsel %vm4000, %v3987, %v3990
  %v4009 = vsel %vm4003, %v3996, 920167782
  %v4010 = vsel %vm4002, %v3993, %v4009
  %v4011 = vsel %vm4001, %v4008, %v4010
  %v4012 = vsel %vm4000, %v3990, %v3993
  %v4013 = vsel %vm4003, %v3999, 1326507024
  %v4014 = vsel %vm4002, %v3996, %v4013
  %v4015 = vsel %vm4001, %v4012, %v4014
  %v4016 = vshll.u32 %v3976, 8
  %v4017 = vmul.u32.u64.compose %v4016, %v4015
  %v4018 = vextract.low.u32 %v4017
  %v4019 = vextract.high.u32 %v4017
  %v4020 = vmul.u32.u64.compose %v4016, %v4011
  %v4021 = vextract.low.u32 %v4020
  %v4022 = vextract.high.u32 %v4020
  %v4023 = vmul.u32 %v4016, %v4007
  %v4024 = vadd.s32 %v4019, %v4021
  %vm4025 = vc.u32 %v4019, %v4021
  %v4026 = vadd.s32 %v4022, 1
  %v4027 = vsel %vm4025, %v4026, %v4022
  %v4028 = vadd.s32 %v4023, %v4027
  %v4029 = vadd.s32 %v4028, 536870912
  %v4030 = vshrl.u32 %v4029, 30
  %v4031 = vshll.u32 %v4030, 30
  %v4032 = vsub.s32 %v4028, %v4031
  %vm4033 = vcmp.lt.s32.totalorder %v4032, 0
  %v4034 = vsub.s32 0, %v4032
  %v4035 = vsel %vm4033, %v4034, %v4032
  %v4036 = vclz %v4035
  %v4037 = vsub.s32 %v4036, 2
  %vm4038 = vcmp.gt.s32.totalorder 0, %v4037
  %v4039 = vsel %vm4038, 0, %v4037
  %v4040 = vsub.s32 32, %v4039
  %v4041 = vshll.u32 %v4032, %v4039
  %v4042 = vshrl.u32 %v4024, %v4040
  %v4043 = vor.u32 %v4041, %v4042
  %v4044 = vsub.s32 4294967266, %v4039
  %v4045 = vadd.s32 %v4044, 127
  %v4046 = vshll.u32 %v4045, 23
  %v4047 = vor.u32 4788187, %v4046
  %v4048 = vand.u32 2147483647, %v4047
  %v4050 = vcvt.s32.f32 %v4043
  %v4051 = vmul.f32 %v4050, %v4048
  %v4052 = vxor.u32 %v4051, 2147483648
  %v4053 = vsel %vm3970, %v4052, %v4051
  %v4054 = vsub.s32 4, %v4030
  %v4055 = vsel %vm3970, %v4054, %v4030
  %v4056 = vsel %vm3969, %v3655, %v4053
  %v4057 = vsel %vm3969, 0, %v4055
  %v4058 = vcosq.f32.pop %v4056
  %v4059 = vsinq.f32.pop %v4056
  %vm4060 = vweird.f32 %v3655
  %v4061 = vadd.s32 %v4057, 3
  %v4062 = vand.u32 %v4061, 3
  %vm4063 = vcmp.lt.s32.totalorder %v4062, 2
  %vm4064 = vcmp.eq.s32.totalorder %v4062, 0
  %v4065 = vxor.u32 %v4059, 2147483648
  %v4066 = vsel %vm4064, %v4058, %v4065
  %vm4067 = vcmp.eq.s32.totalorder %v4062, 2
  %v4068 = vxor.u32 %v4058, 2147483648
  %v4069 = vsel %vm4067, %v4068, %v4059
  %v4070 = vsel %vm4063, %v4066, %v4069
  %v4071 = vsel %vm4060, nan, %v4070
  %v4073 = vsel %vm479, %v4071, 0
  %4075 = vmatprep.subr.mxu0 0.0
  %4076 = vmatpush1.msra.mxu0 %v3759
  %4077 = vmatprep.subr.mxu0 0.0
  %4078 = vmatpush1.msra.mxu0 %v3863
  %4079 = vmatprep.subr.mxu0 0.0
  %4080 = vmatpush1.msra.mxu0 %v3967
  %4081 = vmatprep.subr.mxu0 0.0
  %4082 = vmatpush1.msra.mxu0 %v4073
  %4083 = vmatprep.subr.mxu0 0.0
  %4084 = vmatpush1.msra.mxu0 0.0
  %4085 = vmatprep.subr.mxu0 0.0
  %4086 = vmatpush1.msra.mxu0 0.0
  %4087 = vmatprep.subr.mxu0 0.0
  %4088 = vmatpush1.msra.mxu0 0.0
  %4089 = vmatprep.subr.mxu0 0.0
  %4090 = vmatpush1.msra.mxu0 0.0
  %4091 = vmatprep.subr.mxu0 0.0
  %4092 = vmatpush1.msra.mxu0 0.0
  %4093 = vmatprep.subr.mxu0 0.0
  %4094 = vmatpush1.msra.mxu0 0.0
  %4095 = vmatprep.subr.mxu0 0.0
  %4096 = vmatpush1.msra.mxu0 0.0
  %4097 = vmatprep.subr.mxu0 0.0
  %4098 = vmatpush1.msra.mxu0 0.0
  %4099 = vmatprep.subr.mxu0 0.0
  %4100 = vmatpush1.msra.mxu0 0.0
  %4101 = vmatprep.subr.mxu0 0.0
  %4102 = vmatpush1.msra.mxu0 0.0
  %4103 = vmatprep.subr.mxu0 0.0
  %4104 = vmatpush1.msra.mxu0 0.0
  %4105 = vmatprep.subr.mxu0 0.0
  %4106 = vmatpush1.msra.mxu0 0.0
  %4107 = vmatprep.subr.mxu0 0.0
  %4108 = vmatpush1.msra.mxu0 0.0
  %4109 = vmatprep.subr.mxu0 0.0
  %4110 = vmatpush1.msra.mxu0 0.0
  %4111 = vmatprep.subr.mxu0 0.0
  %4112 = vmatpush1.msra.mxu0 0.0
  %4113 = vmatprep.subr.mxu0 0.0
  %4114 = vmatpush1.msra.mxu0 0.0
  %4115 = vmatprep.subr.mxu0 0.0
  %4116 = vmatpush1.msra.mxu0 0.0
  %4117 = vmatprep.subr.mxu0 0.0
  %4118 = vmatpush1.msra.mxu0 0.0
  %4119 = vmatprep.subr.mxu0 0.0
  %4120 = vmatpush1.msra.mxu0 0.0
  %4121 = vmatprep.subr.mxu0 0.0
  %4122 = vmatpush1.msra.mxu0 0.0
  %4123 = vmatprep.subr.mxu0 0.0
  %4124 = vmatpush1.msra.mxu0 0.0
  %4125 = vmatprep.subr.mxu0 0.0
  %4126 = vmatpush1.msra.mxu0 0.0
  %4127 = vmatprep.subr.mxu0 0.0
  %4128 = vmatpush1.msra.mxu0 0.0
  %4129 = vmatprep.subr.mxu0 0.0
  %4130 = vmatpush1.msra.mxu0 0.0
  %4131 = vmatprep.subr.mxu0 0.0
  %4132 = vmatpush1.msra.mxu0 0.0
  %4133 = vmatprep.subr.mxu0 0.0
  %4134 = vmatpush1.msra.mxu0 0.0
  %4135 = vmatprep.subr.mxu0 0.0
  %4136 = vmatpush1.msra.mxu0 0.0
  %4137 = vmatprep.subr.mxu0 0.0
  %4138 = vmatpush1.msra.mxu0 0.0
  %4139 = vmatprep.mubr.f32.mxu0 0.0
  %4140 = vmatmul.mubr.f32.gmra.mrb[0].mxu0 %v465
  %v4141 = vpop.f32.mrb[0].mxu0
  %v4142 = vadd.f32 0.0, %v4141
  %v4143 = vpop.f32.mrb[0].mxu0
  %4144 = vmatprep.mubr.f32.mxu0 0.0
  %4145 = vmatmul.mubr.f32.gmra.mrb[0].mxu0 %v468
  %v4146 = vpop.f32.mrb[0].mxu0
  %v4147 = vadd.f32 0.0, %v4146
  %v4148 = vpop.f32.mrb[0].mxu0
  %4149 = vmatprep.mubr.f32.mxu0 0.0
  %4150 = vmatmul.mubr.f32.gmra.mrb[0].mxu0 %v471
  %v4151 = vpop.f32.mrb[0].mxu0
  %v4152 = vadd.f32 0.0, %v4151
  %v4153 = vpop.f32.mrb[0].mxu0
  %4154 = vmatprep.mubr.f32.mxu0 0.0
  %4155 = vmatmul.mubr.f32.gmra.mrb[0].mxu0 %v474
  %v4156 = vpop.f32.mrb[0].mxu0
  %v4157 = vadd.f32 0.0, %v4156
  %v4158 = vpop.f32.mrb[0].mxu0
  %4159 = vmatprep.mubr.f32.mxu0 0.0
  %4160 = vmatmul.mubr.f32.gmra.mrb[0].mxu0 %v477
  %v4161 = vpop.f32.mrb[0].mxu0
  %v4162 = vadd.f32 0.0, %v4161
  %v4163 = vpop.f32.mrb[0].mxu0
  %4164 = vdwg.mxu0
  %v4165 = vmax.f32 %v4142, 0.0
  %v4166 = vmax.f32 %v4147, 0.0
  %v4167 = vmax.f32 %v4152, 0.0
  %v4168 = vmax.f32 %v4157, 0.0
  %v4169 = vmax.f32 %v4162, 0.0
  %v4171 = vsel %vm479, %v4169, 0
  %4173 = vmatprep.subr.mxu0 0.0
  %4174 = vmatpush1.msra.mxu0 %v4165
  %4175 = vmatprep.subr.mxu0 0.0
  %4176 = vmatpush1.msra.mxu0 %v4166
  %4177 = vmatprep.subr.mxu0 0.0
  %4178 = vmatpush1.msra.mxu0 %v4167
  %4179 = vmatprep.subr.mxu0 0.0
  %4180 = vmatpush1.msra.mxu0 %v4168
  %4181 = vmatprep.subr.mxu0 0.0
  %4182 = vmatpush1.msra.mxu0 %v4171
  %4183 = vmatprep.subr.mxu0 0.0
  %4184 = vmatpush1.msra.mxu0 0.0
  %4185 = vmatprep.subr.mxu0 0.0
  %4186 = vmatpush1.msra.mxu0 0.0
  %4187 = vmatprep.subr.mxu0 0.0
  %4188 = vmatpush1.msra.mxu0 0.0
  %4189 = vmatprep.subr.mxu0 0.0
  %4190 = vmatpush1.msra.mxu0 0.0
  %4191 = vmatprep.subr.mxu0 0.0
  %4192 = vmatpush1.msra.mxu0 0.0
  %4193 = vmatprep.subr.mxu0 0.0
  %4194 = vmatpush1.msra.mxu0 0.0
  %4195 = vmatprep.subr.mxu0 0.0
  %4196 = vmatpush1.msra.mxu0 0.0
  %4197 = vmatprep.subr.mxu0 0.0
  %4198 = vmatpush1.msra.mxu0 0.0
  %4199 = vmatprep.subr.mxu0 0.0
  %4200 = vmatpush1.msra.mxu0 0.0
  %4201 = vmatprep.subr.mxu0 0.0
  %4202 = vmatpush1.msra.mxu0 0.0
  %4203 = vmatprep.subr.mxu0 0.0
  %4204 = vmatpush1.msra.mxu0 0.0
  %4205 = vmatprep.subr.mxu0 0.0
  %4206 = vmatpush1.msra.mxu0 0.0
  %4207 = vmatprep.subr.mxu0 0.0
  %4208 = vmatpush1.msra.mxu0 0.0
  %4209 = vmatprep.subr.mxu0 0.0
  %4210 = vmatpush1.msra.mxu0 0.0
  %4211 = vmatprep.subr.mxu0 0.0
  %4212 = vmatpush1.msra.mxu0 0.0
  %4213 = vmatprep.subr.mxu0 0.0
  %4214 = vmatpush1.msra.mxu0 0.0
  %4215 = vmatprep.subr.mxu0 0.0
  %4216 = vmatpush1.msra.mxu0 0.0
  %4217 = vmatprep.subr.mxu0 0.0
  %4218 = vmatpush1.msra.mxu0 0.0
  %4219 = vmatprep.subr.mxu0 0.0
  %4220 = vmatpush1.msra.mxu0 0.0
  %4221 = vmatprep.subr.mxu0 0.0
  %4222 = vmatpush1.msra.mxu0 0.0
  %4223 = vmatprep.subr.mxu0 0.0
  %4224 = vmatpush1.msra.mxu0 0.0
  %4225 = vmatprep.subr.mxu0 0.0
  %4226 = vmatpush1.msra.mxu0 0.0
  %4227 = vmatprep.subr.mxu0 0.0
  %4228 = vmatpush1.msra.mxu0 0.0
  %4229 = vmatprep.subr.mxu0 0.0
  %4230 = vmatpush1.msra.mxu0 0.0
  %4231 = vmatprep.subr.mxu0 0.0
  %4232 = vmatpush1.msra.mxu0 0.0
  %4233 = vmatprep.subr.mxu0 0.0
  %4234 = vmatpush1.msra.mxu0 0.0
  %4235 = vmatprep.subr.mxu0 0.0
  %4236 = vmatpush1.msra.mxu0 0.0
  %4237 = vmatprep.mubr.f32.mxu0 0.0
  %4238 = vmatmul.mubr.f32.gmra.mrb[0].mxu0 %v580
  %v4239 = vpop.f32.mrb[0].mxu0
  %v4240 = vadd.f32 0.0, %v4239
  %v4241 = vpop.f32.mrb[0].mxu0
  %4242 = vmatprep.mubr.f32.mxu0 0.0
  %4243 = vmatmul.mubr.f32.gmra.mrb[0].mxu0 %v583
  %v4244 = vpop.f32.mrb[0].mxu0
  %v4245 = vadd.f32 0.0, %v4244
  %v4246 = vpop.f32.mrb[0].mxu0
  %4247 = vmatprep.mubr.f32.mxu0 0.0
  %4248 = vmatmul.mubr.f32.gmra.mrb[0].mxu0 %v586
  %v4249 = vpop.f32.mrb[0].mxu0
  %v4250 = vadd.f32 0.0, %v4249
  %v4251 = vpop.f32.mrb[0].mxu0
  %4252 = vmatprep.mubr.f32.mxu0 0.0
  %4253 = vmatmul.mubr.f32.gmra.mrb[0].mxu0 %v589
  %v4254 = vpop.f32.mrb[0].mxu0
  %v4255 = vadd.f32 0.0, %v4254
  %v4256 = vpop.f32.mrb[0].mxu0
  %4257 = vmatprep.mubr.f32.mxu0 0.0
  %4258 = vmatmul.mubr.f32.gmra.mrb[0].mxu0 %v592
  %v4259 = vpop.f32.mrb[0].mxu0
  %v4260 = vadd.f32 0.0, %v4259
  %v4261 = vpop.f32.mrb[0].mxu0
  %4262 = vdwg.mxu0
  %v4263 = vmax.f32 %v4240, 0.0
  %v4264 = vmax.f32 %v4245, 0.0
  %v4265 = vmax.f32 %v4250, 0.0
  %v4266 = vmax.f32 %v4255, 0.0
  %v4267 = vmax.f32 %v4260, 0.0
  %v4269 = vsel %vm479, %v4267, 0
  %4271 = vmatprep.subr.mxu0 0.0
  %4272 = vmatpush1.msra.mxu0 %v4263
  %4273 = vmatprep.subr.mxu0 0.0
  %4274 = vmatpush1.msra.mxu0 %v4264
  %4275 = vmatprep.subr.mxu0 0.0
  %4276 = vmatpush1.msra.mxu0 %v4265
  %4277 = vmatprep.subr.mxu0 0.0
  %4278 = vmatpush1.msra.mxu0 %v4266
  %4279 = vmatprep.subr.mxu0 0.0
  %4280 = vmatpush1.msra.mxu0 %v4269
  %4281 = vmatprep.subr.mxu0 0.0
  %4282 = vmatpush1.msra.mxu0 0.0
  %4283 = vmatprep.subr.mxu0 0.0
  %4284 = vmatpush1.msra.mxu0 0.0
  %4285 = vmatprep.subr.mxu0 0.0
  %4286 = vmatpush1.msra.mxu0 0.0
  %4287 = vmatprep.subr.mxu0 0.0
  %4288 = vmatpush1.msra.mxu0 0.0
  %4289 = vmatprep.subr.mxu0 0.0
  %4290 = vmatpush1.msra.mxu0 0.0
  %4291 = vmatprep.subr.mxu0 0.0
  %4292 = vmatpush1.msra.mxu0 0.0
  %4293 = vmatprep.subr.mxu0 0.0
  %4294 = vmatpush1.msra.mxu0 0.0
  %4295 = vmatprep.subr.mxu0 0.0
  %4296 = vmatpush1.msra.mxu0 0.0
  %4297 = vmatprep.subr.mxu0 0.0
  %4298 = vmatpush1.msra.mxu0 0.0
  %4299 = vmatprep.subr.mxu0 0.0
  %4300 = vmatpush1.msra.mxu0 0.0
  %4301 = vmatprep.subr.mxu0 0.0
  %4302 = vmatpush1.msra.mxu0 0.0
  %4303 = vmatprep.subr.mxu0 0.0
  %4304 = vmatpush1.msra.mxu0 0.0
  %4305 = vmatprep.subr.mxu0 0.0
  %4306 = vmatpush1.msra.mxu0 0.0
  %4307 = vmatprep.subr.mxu0 0.0
  %4308 = vmatpush1.msra.mxu0 0.0
  %4309 = vmatprep.subr.mxu0 0.0
  %4310 = vmatpush1.msra.mxu0 0.0
  %4311 = vmatprep.subr.mxu0 0.0
  %4312 = vmatpush1.msra.mxu0 0.0
  %4313 = vmatprep.subr.mxu0 0.0
  %4314 = vmatpush1.msra.mxu0 0.0
  %4315 = vmatprep.subr.mxu0 0.0
  %4316 = vmatpush1.msra.mxu0 0.0
  %4317 = vmatprep.subr.mxu0 0.0
  %4318 = vmatpush1.msra.mxu0 0.0
  %4319 = vmatprep.subr.mxu0 0.0
  %4320 = vmatpush1.msra.mxu0 0.0
  %4321 = vmatprep.subr.mxu0 0.0
  %4322 = vmatpush1.msra.mxu0 0.0
  %4323 = vmatprep.subr.mxu0 0.0
  %4324 = vmatpush1.msra.mxu0 0.0
  %4325 = vmatprep.subr.mxu0 0.0
  %4326 = vmatpush1.msra.mxu0 0.0
  %4327 = vmatprep.subr.mxu0 0.0
  %4328 = vmatpush1.msra.mxu0 0.0
  %4329 = vmatprep.subr.mxu0 0.0
  %4330 = vmatpush1.msra.mxu0 0.0
  %4331 = vmatprep.subr.mxu0 0.0
  %4332 = vmatpush1.msra.mxu0 0.0
  %4333 = vmatprep.subr.mxu0 0.0
  %4334 = vmatpush1.msra.mxu0 0.0
  %4335 = vmatprep.mubr.f32.mxu0 0.0
  %4336 = vmatmul.mubr.f32.gmra.mrb[0].mxu0 %v693
  %v4337 = vpop.f32.mrb[0].mxu0
  %v4338 = vadd.f32 0.0, %v4337
  %v4339 = vpop.f32.mrb[0].mxu0
  %4340 = vdwg.mxu0
  %v4341 = vmax.f32 %v4338, 0.0
  %v4342 = vxor.u32 %v4338, 2147483648
  %v4343 = vmul.f32 %v4342, 1.442695
  %v4344 = vpow.pop %v4343
  %v4345 = vadd.f32 %v4344, 1.0
  %v4346 = vrcp.pop %v4345
  %v4347 = vmul.f32 1.0, %v4346
  %v4348 = vmul.f32 %v4341, 0.55714285
  %v4349 = vsub.f32 0.0, %v4348
  %v4350 = vmul.f32 %v4349, 1.442695
  %v4351 = vpow.pop %v4350
  %v4352 = vsub.f32 1.0, %v4351
  %v4353 = vmul.f32 %v3647, %v4352
  %v4354 = vlaneseq
  %v4355 = vshrl.u32 %v4354, 7
  %v4356 = vsub.s32 0, %v4355
  %v4357 = vrot.slane %v4353, %v4356
  %v4358 = vmul.f32 %v4357, %v4347
  %v4359 = vadd.f32 %v3644, %v4358
  %v4360 = vmul.f32 %v4353, 2.8857143
  %v4361 = vadd.f32 %v3646, %v4360
  %v4362 = vmul.f32 %v3647, %v4351
  %v4363 = vmul.f32 %v24, 3.442857
  %v4364 = vmul.f32 %v25, 3.442857
  %v4365 = vmul.f32 %v26, 3.442857
  %v4366 = vmul.f32 %v27, 3.442857
  %v4367 = vadd.f32 %v20, %v4363
  %v4368 = vadd.f32 %v21, %v4364
  %v4369 = vadd.f32 %v22, %v4365
  %v4370 = vadd.f32 %v23, %v4366
  %v4371 = vand.u32 2147483647, %v4367
  %vm4372 = vcmp.le.f32.partialorder %v4371, 0.7853982
  %vm4373 = vcmp.lt.s32.totalorder %v4367, 0
  %v4374 = vand.u32 %v4367, 2139095040
  %v4375 = vshrl.u32 %v4374, 23
  %v4376 = vsub.s32 %v4375, 127
  %v4377 = vand.u32 2147483647, %v4367
  %v4378 = vand.u32 %v4377, 8388607
  %v4379 = vor.u32 %v4378, 8388608
  %v4380 = vsub.s32 0, %v4379
  %v4381 = vadd.s32 %v4376, 1
  %vm4382 = vcmp.gt.s32.totalorder %v4381, 0
  %v4383 = vsel %vm4382, %v4381, 0
  %v4384 = vshrl.u32 %v4383, 5
  %v4385 = vand.u32 %v4383, 31
  %v4386 = vsub.s32 32, %v4385
  %v4387 = vshrl.u32 683565275, %v4386
  %v4388 = vshll.u32 683565275, %v4385
  %v4389 = vshrl.u32 2475754826, %v4386
  %v4390 = vor.u32 %v4388, %v4389
  %v4391 = vshll.u32 2475754826, %v4385
  %v4392 = vshrl.u32 2131351028, %v4386
  %v4393 = vor.u32 %v4391, %v4392
  %v4394 = vshll.u32 2131351028, %v4385
  %v4395 = vshrl.u32 2102212464, %v4386
  %v4396 = vor.u32 %v4394, %v4395
  %v4397 = vshll.u32 2102212464, %v4385
  %v4398 = vshrl.u32 920167782, %v4386
  %v4399 = vor.u32 %v4397, %v4398
  %v4400 = vshll.u32 920167782, %v4385
  %v4401 = vshrl.u32 1326507024, %v4386
  %v4402 = vor.u32 %v4400, %v4401
  %vm4403 = vcmp.lt.s32.totalorder %v4384, 1
  %vm4404 = vcmp.lt.s32.totalorder %v4384, 2
  %vm4405 = vcmp.lt.s32.totalorder %v4384, 3
  %vm4406 = vcmp.lt.s32.totalorder %v4384, 4
  %v4407 = vsel %vm4403, %v4387, %v4390
  %v4408 = vsel %vm4406, %v4396, 2102212464
  %v4409 = vsel %vm4405, %v4393, %v4408
  %v4410 = vsel %vm4404, %v4407, %v4409
  %v4411 = vsel %vm4403, %v4390, %v4393
  %v4412 = vsel %vm4406, %v4399, 920167782
  %v4413 = vsel %vm4405, %v4396, %v4412
  %v4414 = vsel %vm4404, %v4411, %v4413
  %v4415 = vsel %vm4403, %v4393, %v4396
  %v4416 = vsel %vm4406, %v4402, 1326507024
  %v4417 = vsel %vm4405, %v4399, %v4416
  %v4418 = vsel %vm4404, %v4415, %v4417
  %v4419 = vshll.u32 %v4379, 8
  %v4420 = vmul.u32.u64.compose %v4419, %v4418
  %v4421 = vextract.low.u32 %v4420
  %v4422 = vextract.high.u32 %v4420
  %v4423 = vmul.u32.u64.compose %v4419, %v4414
  %v4424 = vextract.low.u32 %v4423
  %v4425 = vextract.high.u32 %v4423
  %v4426 = vmul.u32 %v4419, %v4410
  %v4427 = vadd.s32 %v4422, %v4424
  %vm4428 = vc.u32 %v4422, %v4424
  %v4429 = vadd.s32 %v4425, 1
  %v4430 = vsel %vm4428, %v4429, %v4425
  %v4431 = vadd.s32 %v4426, %v4430
  %v4432 = vadd.s32 %v4431, 536870912
  %v4433 = vshrl.u32 %v4432, 30
  %v4434 = vshll.u32 %v4433, 30
  %v4435 = vsub.s32 %v4431, %v4434
  %vm4436 = vcmp.lt.s32.totalorder %v4435, 0
  %v4437 = vsub.s32 0, %v4435
  %v4438 = vsel %vm4436, %v4437, %v4435
  %v4439 = vclz %v4438
  %v4440 = vsub.s32 %v4439, 2
  %vm4441 = vcmp.gt.s32.totalorder 0, %v4440
  %v4442 = vsel %vm4441, 0, %v4440
  %v4443 = vsub.s32 32, %v4442
  %v4444 = vshll.u32 %v4435, %v4442
  %v4445 = vshrl.u32 %v4427, %v4443
  %v4446 = vor.u32 %v4444, %v4445
  %v4447 = vsub.s32 4294967266, %v4442
  %v4448 = vadd.s32 %v4447, 127
  %v4449 = vshll.u32 %v4448, 23
  %v4450 = vor.u32 4788187, %v4449
  %v4451 = vand.u32 2147483647, %v4450
  %v4453 = vcvt.s32.f32 %v4446
  %v4454 = vmul.f32 %v4453, %v4451
  %v4455 = vxor.u32 %v4454, 2147483648
  %v4456 = vsel %vm4373, %v4455, %v4454
  %v4457 = vsub.s32 4, %v4433
  %v4458 = vsel %vm4373, %v4457, %v4433
  %v4459 = vsel %vm4372, %v4367, %v4456
  %v4460 = vsel %vm4372, 0, %v4458
  %v4461 = vcosq.f32.pop %v4459
  %v4462 = vsinq.f32.pop %v4459
  %vm4463 = vweird.f32 %v4367
  %v4464 = vadd.s32 %v4460, 3
  %v4465 = vand.u32 %v4464, 3
  %vm4466 = vcmp.lt.s32.totalorder %v4465, 2
  %vm4467 = vcmp.eq.s32.totalorder %v4465, 0
  %v4468 = vxor.u32 %v4462, 2147483648
  %v4469 = vsel %vm4467, %v4461, %v4468
  %vm4470 = vcmp.eq.s32.totalorder %v4465, 2
  %v4471 = vxor.u32 %v4461, 2147483648
  %v4472 = vsel %vm4470, %v4471, %v4462
  %v4473 = vsel %vm4466, %v4469, %v4472
  %v4474 = vsel %vm4463, nan, %v4473
  %v4475 = vand.u32 2147483647, %v4368
  %vm4476 = vcmp.le.f32.partialorder %v4475, 0.7853982
  %vm4477 = vcmp.lt.s32.totalorder %v4368, 0
  %v4478 = vand.u32 %v4368, 2139095040
  %v4479 = vshrl.u32 %v4478, 23
  %v4480 = vsub.s32 %v4479, 127
  %v4481 = vand.u32 2147483647, %v4368
  %v4482 = vand.u32 %v4481, 8388607
  %v4483 = vor.u32 %v4482, 8388608
  %v4484 = vsub.s32 0, %v4483
  %v4485 = vadd.s32 %v4480, 1
  %vm4486 = vcmp.gt.s32.totalorder %v4485, 0
  %v4487 = vsel %vm4486, %v4485, 0
  %v4488 = vshrl.u32 %v4487, 5
  %v4489 = vand.u32 %v4487, 31
  %v4490 = vsub.s32 32, %v4489
  %v4491 = vshrl.u32 683565275, %v4490
  %v4492 = vshll.u32 683565275, %v4489
  %v4493 = vshrl.u32 2475754826, %v4490
  %v4494 = vor.u32 %v4492, %v4493
  %v4495 = vshll.u32 2475754826, %v4489
  %v4496 = vshrl.u32 2131351028, %v4490
  %v4497 = vor.u32 %v4495, %v4496
  %v4498 = vshll.u32 2131351028, %v4489
  %v4499 = vshrl.u32 2102212464, %v4490
  %v4500 = vor.u32 %v4498, %v4499
  %v4501 = vshll.u32 2102212464, %v4489
  %v4502 = vshrl.u32 920167782, %v4490
  %v4503 = vor.u32 %v4501, %v4502
  %v4504 = vshll.u32 920167782, %v4489
  %v4505 = vshrl.u32 1326507024, %v4490
  %v4506 = vor.u32 %v4504, %v4505
  %vm4507 = vcmp.lt.s32.totalorder %v4488, 1
  %vm4508 = vcmp.lt.s32.totalorder %v4488, 2
  %vm4509 = vcmp.lt.s32.totalorder %v4488, 3
  %vm4510 = vcmp.lt.s32.totalorder %v4488, 4
  %v4511 = vsel %vm4507, %v4491, %v4494
  %v4512 = vsel %vm4510, %v4500, 2102212464
  %v4513 = vsel %vm4509, %v4497, %v4512
  %v4514 = vsel %vm4508, %v4511, %v4513
  %v4515 = vsel %vm4507, %v4494, %v4497
  %v4516 = vsel %vm4510, %v4503, 920167782
  %v4517 = vsel %vm4509, %v4500, %v4516
  %v4518 = vsel %vm4508, %v4515, %v4517
  %v4519 = vsel %vm4507, %v4497, %v4500
  %v4520 = vsel %vm4510, %v4506, 1326507024
  %v4521 = vsel %vm4509, %v4503, %v4520
  %v4522 = vsel %vm4508, %v4519, %v4521
  %v4523 = vshll.u32 %v4483, 8
  %v4524 = vmul.u32.u64.compose %v4523, %v4522
  %v4525 = vextract.low.u32 %v4524
  %v4526 = vextract.high.u32 %v4524
  %v4527 = vmul.u32.u64.compose %v4523, %v4518
  %v4528 = vextract.low.u32 %v4527
  %v4529 = vextract.high.u32 %v4527
  %v4530 = vmul.u32 %v4523, %v4514
  %v4531 = vadd.s32 %v4526, %v4528
  %vm4532 = vc.u32 %v4526, %v4528
  %v4533 = vadd.s32 %v4529, 1
  %v4534 = vsel %vm4532, %v4533, %v4529
  %v4535 = vadd.s32 %v4530, %v4534
  %v4536 = vadd.s32 %v4535, 536870912
  %v4537 = vshrl.u32 %v4536, 30
  %v4538 = vshll.u32 %v4537, 30
  %v4539 = vsub.s32 %v4535, %v4538
  %vm4540 = vcmp.lt.s32.totalorder %v4539, 0
  %v4541 = vsub.s32 0, %v4539
  %v4542 = vsel %vm4540, %v4541, %v4539
  %v4543 = vclz %v4542
  %v4544 = vsub.s32 %v4543, 2
  %vm4545 = vcmp.gt.s32.totalorder 0, %v4544
  %v4546 = vsel %vm4545, 0, %v4544
  %v4547 = vsub.s32 32, %v4546
  %v4548 = vshll.u32 %v4539, %v4546
  %v4549 = vshrl.u32 %v4531, %v4547
  %v4550 = vor.u32 %v4548, %v4549
  %v4551 = vsub.s32 4294967266, %v4546
  %v4552 = vadd.s32 %v4551, 127
  %v4553 = vshll.u32 %v4552, 23
  %v4554 = vor.u32 4788187, %v4553
  %v4555 = vand.u32 2147483647, %v4554
  %v4557 = vcvt.s32.f32 %v4550
  %v4558 = vmul.f32 %v4557, %v4555
  %v4559 = vxor.u32 %v4558, 2147483648
  %v4560 = vsel %vm4477, %v4559, %v4558
  %v4561 = vsub.s32 4, %v4537
  %v4562 = vsel %vm4477, %v4561, %v4537
  %v4563 = vsel %vm4476, %v4368, %v4560
  %v4564 = vsel %vm4476, 0, %v4562
  %v4565 = vcosq.f32.pop %v4563
  %v4566 = vsinq.f32.pop %v4563
  %vm4567 = vweird.f32 %v4368
  %v4568 = vadd.s32 %v4564, 3
  %v4569 = vand.u32 %v4568, 3
  %vm4570 = vcmp.lt.s32.totalorder %v4569, 2
  %vm4571 = vcmp.eq.s32.totalorder %v4569, 0
  %v4572 = vxor.u32 %v4566, 2147483648
  %v4573 = vsel %vm4571, %v4565, %v4572
  %vm4574 = vcmp.eq.s32.totalorder %v4569, 2
  %v4575 = vxor.u32 %v4565, 2147483648
  %v4576 = vsel %vm4574, %v4575, %v4566
  %v4577 = vsel %vm4570, %v4573, %v4576
  %v4578 = vsel %vm4567, nan, %v4577
  %v4579 = vand.u32 2147483647, %v4369
  %vm4580 = vcmp.le.f32.partialorder %v4579, 0.7853982
  %vm4581 = vcmp.lt.s32.totalorder %v4369, 0
  %v4582 = vand.u32 %v4369, 2139095040
  %v4583 = vshrl.u32 %v4582, 23
  %v4584 = vsub.s32 %v4583, 127
  %v4585 = vand.u32 2147483647, %v4369
  %v4586 = vand.u32 %v4585, 8388607
  %v4587 = vor.u32 %v4586, 8388608
  %v4588 = vsub.s32 0, %v4587
  %v4589 = vadd.s32 %v4584, 1
  %vm4590 = vcmp.gt.s32.totalorder %v4589, 0
  %v4591 = vsel %vm4590, %v4589, 0
  %v4592 = vshrl.u32 %v4591, 5
  %v4593 = vand.u32 %v4591, 31
  %v4594 = vsub.s32 32, %v4593
  %v4595 = vshrl.u32 683565275, %v4594
  %v4596 = vshll.u32 683565275, %v4593
  %v4597 = vshrl.u32 2475754826, %v4594
  %v4598 = vor.u32 %v4596, %v4597
  %v4599 = vshll.u32 2475754826, %v4593
  %v4600 = vshrl.u32 2131351028, %v4594
  %v4601 = vor.u32 %v4599, %v4600
  %v4602 = vshll.u32 2131351028, %v4593
  %v4603 = vshrl.u32 2102212464, %v4594
  %v4604 = vor.u32 %v4602, %v4603
  %v4605 = vshll.u32 2102212464, %v4593
  %v4606 = vshrl.u32 920167782, %v4594
  %v4607 = vor.u32 %v4605, %v4606
  %v4608 = vshll.u32 920167782, %v4593
  %v4609 = vshrl.u32 1326507024, %v4594
  %v4610 = vor.u32 %v4608, %v4609
  %vm4611 = vcmp.lt.s32.totalorder %v4592, 1
  %vm4612 = vcmp.lt.s32.totalorder %v4592, 2
  %vm4613 = vcmp.lt.s32.totalorder %v4592, 3
  %vm4614 = vcmp.lt.s32.totalorder %v4592, 4
  %v4615 = vsel %vm4611, %v4595, %v4598
  %v4616 = vsel %vm4614, %v4604, 2102212464
  %v4617 = vsel %vm4613, %v4601, %v4616
  %v4618 = vsel %vm4612, %v4615, %v4617
  %v4619 = vsel %vm4611, %v4598, %v4601
  %v4620 = vsel %vm4614, %v4607, 920167782
  %v4621 = vsel %vm4613, %v4604, %v4620
  %v4622 = vsel %vm4612, %v4619, %v4621
  %v4623 = vsel %vm4611, %v4601, %v4604
  %v4624 = vsel %vm4614, %v4610, 1326507024
  %v4625 = vsel %vm4613, %v4607, %v4624
  %v4626 = vsel %vm4612, %v4623, %v4625
  %v4627 = vshll.u32 %v4587, 8
  %v4628 = vmul.u32.u64.compose %v4627, %v4626
  %v4629 = vextract.low.u32 %v4628
  %v4630 = vextract.high.u32 %v4628
  %v4631 = vmul.u32.u64.compose %v4627, %v4622
  %v4632 = vextract.low.u32 %v4631
  %v4633 = vextract.high.u32 %v4631
  %v4634 = vmul.u32 %v4627, %v4618
  %v4635 = vadd.s32 %v4630, %v4632
  %vm4636 = vc.u32 %v4630, %v4632
  %v4637 = vadd.s32 %v4633, 1
  %v4638 = vsel %vm4636, %v4637, %v4633
  %v4639 = vadd.s32 %v4634, %v4638
  %v4640 = vadd.s32 %v4639, 536870912
  %v4641 = vshrl.u32 %v4640, 30
  %v4642 = vshll.u32 %v4641, 30
  %v4643 = vsub.s32 %v4639, %v4642
  %vm4644 = vcmp.lt.s32.totalorder %v4643, 0
  %v4645 = vsub.s32 0, %v4643
  %v4646 = vsel %vm4644, %v4645, %v4643
  %v4647 = vclz %v4646
  %v4648 = vsub.s32 %v4647, 2
  %vm4649 = vcmp.gt.s32.totalorder 0, %v4648
  %v4650 = vsel %vm4649, 0, %v4648
  %v4651 = vsub.s32 32, %v4650
  %v4652 = vshll.u32 %v4643, %v4650
  %v4653 = vshrl.u32 %v4635, %v4651
  %v4654 = vor.u32 %v4652, %v4653
  %v4655 = vsub.s32 4294967266, %v4650
  %v4656 = vadd.s32 %v4655, 127
  %v4657 = vshll.u32 %v4656, 23
  %v4658 = vor.u32 4788187, %v4657
  %v4659 = vand.u32 2147483647, %v4658
  %v4661 = vcvt.s32.f32 %v4654
  %v4662 = vmul.f32 %v4661, %v4659
  %v4663 = vxor.u32 %v4662, 2147483648
  %v4664 = vsel %vm4581, %v4663, %v4662
  %v4665 = vsub.s32 4, %v4641
  %v4666 = vsel %vm4581, %v4665, %v4641
  %v4667 = vsel %vm4580, %v4369, %v4664
  %v4668 = vsel %vm4580, 0, %v4666
  %v4669 = vcosq.f32.pop %v4667
  %v4670 = vsinq.f32.pop %v4667
  %vm4671 = vweird.f32 %v4369
  %v4672 = vadd.s32 %v4668, 3
  %v4673 = vand.u32 %v4672, 3
  %vm4674 = vcmp.lt.s32.totalorder %v4673, 2
  %vm4675 = vcmp.eq.s32.totalorder %v4673, 0
  %v4676 = vxor.u32 %v4670, 2147483648
  %v4677 = vsel %vm4675, %v4669, %v4676
  %vm4678 = vcmp.eq.s32.totalorder %v4673, 2
  %v4679 = vxor.u32 %v4669, 2147483648
  %v4680 = vsel %vm4678, %v4679, %v4670
  %v4681 = vsel %vm4674, %v4677, %v4680
  %v4682 = vsel %vm4671, nan, %v4681
  %v4683 = vand.u32 2147483647, %v4370
  %vm4684 = vcmp.le.f32.partialorder %v4683, 0.7853982
  %vm4685 = vcmp.lt.s32.totalorder %v4370, 0
  %v4686 = vand.u32 %v4370, 2139095040
  %v4687 = vshrl.u32 %v4686, 23
  %v4688 = vsub.s32 %v4687, 127
  %v4689 = vand.u32 2147483647, %v4370
  %v4690 = vand.u32 %v4689, 8388607
  %v4691 = vor.u32 %v4690, 8388608
  %v4692 = vsub.s32 0, %v4691
  %v4693 = vadd.s32 %v4688, 1
  %vm4694 = vcmp.gt.s32.totalorder %v4693, 0
  %v4695 = vsel %vm4694, %v4693, 0
  %v4696 = vshrl.u32 %v4695, 5
  %v4697 = vand.u32 %v4695, 31
  %v4698 = vsub.s32 32, %v4697
  %v4699 = vshrl.u32 683565275, %v4698
  %v4700 = vshll.u32 683565275, %v4697
  %v4701 = vshrl.u32 2475754826, %v4698
  %v4702 = vor.u32 %v4700, %v4701
  %v4703 = vshll.u32 2475754826, %v4697
  %v4704 = vshrl.u32 2131351028, %v4698
  %v4705 = vor.u32 %v4703, %v4704
  %v4706 = vshll.u32 2131351028, %v4697
  %v4707 = vshrl.u32 2102212464, %v4698
  %v4708 = vor.u32 %v4706, %v4707
  %v4709 = vshll.u32 2102212464, %v4697
  %v4710 = vshrl.u32 920167782, %v4698
  %v4711 = vor.u32 %v4709, %v4710
  %v4712 = vshll.u32 920167782, %v4697
  %v4713 = vshrl.u32 1326507024, %v4698
  %v4714 = vor.u32 %v4712, %v4713
  %vm4715 = vcmp.lt.s32.totalorder %v4696, 1
  %vm4716 = vcmp.lt.s32.totalorder %v4696, 2
  %vm4717 = vcmp.lt.s32.totalorder %v4696, 3
  %vm4718 = vcmp.lt.s32.totalorder %v4696, 4
  %v4719 = vsel %vm4715, %v4699, %v4702
  %v4720 = vsel %vm4718, %v4708, 2102212464
  %v4721 = vsel %vm4717, %v4705, %v4720
  %v4722 = vsel %vm4716, %v4719, %v4721
  %v4723 = vsel %vm4715, %v4702, %v4705
  %v4724 = vsel %vm4718, %v4711, 920167782
  %v4725 = vsel %vm4717, %v4708, %v4724
  %v4726 = vsel %vm4716, %v4723, %v4725
  %v4727 = vsel %vm4715, %v4705, %v4708
  %v4728 = vsel %vm4718, %v4714, 1326507024
  %v4729 = vsel %vm4717, %v4711, %v4728
  %v4730 = vsel %vm4716, %v4727, %v4729
  %v4731 = vshll.u32 %v4691, 8
  %v4732 = vmul.u32.u64.compose %v4731, %v4730
  %v4733 = vextract.low.u32 %v4732
  %v4734 = vextract.high.u32 %v4732
  %v4735 = vmul.u32.u64.compose %v4731, %v4726
  %v4736 = vextract.low.u32 %v4735
  %v4737 = vextract.high.u32 %v4735
  %v4738 = vmul.u32 %v4731, %v4722
  %v4739 = vadd.s32 %v4734, %v4736
  %vm4740 = vc.u32 %v4734, %v4736
  %v4741 = vadd.s32 %v4737, 1
  %v4742 = vsel %vm4740, %v4741, %v4737
  %v4743 = vadd.s32 %v4738, %v4742
  %v4744 = vadd.s32 %v4743, 536870912
  %v4745 = vshrl.u32 %v4744, 30
  %v4746 = vshll.u32 %v4745, 30
  %v4747 = vsub.s32 %v4743, %v4746
  %vm4748 = vcmp.lt.s32.totalorder %v4747, 0
  %v4749 = vsub.s32 0, %v4747
  %v4750 = vsel %vm4748, %v4749, %v4747
  %v4751 = vclz %v4750
  %v4752 = vsub.s32 %v4751, 2
  %vm4753 = vcmp.gt.s32.totalorder 0, %v4752
  %v4754 = vsel %vm4753, 0, %v4752
  %v4755 = vsub.s32 32, %v4754
  %v4756 = vshll.u32 %v4747, %v4754
  %v4757 = vshrl.u32 %v4739, %v4755
  %v4758 = vor.u32 %v4756, %v4757
  %v4759 = vsub.s32 4294967266, %v4754
  %v4760 = vadd.s32 %v4759, 127
  %v4761 = vshll.u32 %v4760, 23
  %v4762 = vor.u32 4788187, %v4761
  %v4763 = vand.u32 2147483647, %v4762
  %v4765 = vcvt.s32.f32 %v4758
  %v4766 = vmul.f32 %v4765, %v4763
  %v4767 = vxor.u32 %v4766, 2147483648
  %v4768 = vsel %vm4685, %v4767, %v4766
  %v4769 = vsub.s32 4, %v4745
  %v4770 = vsel %vm4685, %v4769, %v4745
  %v4771 = vsel %vm4684, %v4370, %v4768
  %v4772 = vsel %vm4684, 0, %v4770
  %v4773 = vcosq.f32.pop %v4771
  %v4774 = vsinq.f32.pop %v4771
  %vm4775 = vweird.f32 %v4370
  %v4776 = vadd.s32 %v4772, 3
  %v4777 = vand.u32 %v4776, 3
  %vm4778 = vcmp.lt.s32.totalorder %v4777, 2
  %vm4779 = vcmp.eq.s32.totalorder %v4777, 0
  %v4780 = vxor.u32 %v4774, 2147483648
  %v4781 = vsel %vm4779, %v4773, %v4780
  %vm4782 = vcmp.eq.s32.totalorder %v4777, 2
  %v4783 = vxor.u32 %v4773, 2147483648
  %v4784 = vsel %vm4782, %v4783, %v4774
  %v4785 = vsel %vm4778, %v4781, %v4784
  %v4786 = vsel %vm4775, nan, %v4785
  %v4788 = vsel %vm479, %v4786, 0
  %4790 = vmatprep.subr.mxu0 0.0
  %4791 = vmatpush1.msra.mxu0 %v4474
  %4792 = vmatprep.subr.mxu0 0.0
  %4793 = vmatpush1.msra.mxu0 %v4578
  %4794 = vmatprep.subr.mxu0 0.0
  %4795 = vmatpush1.msra.mxu0 %v4682
  %4796 = vmatprep.subr.mxu0 0.0
  %4797 = vmatpush1.msra.mxu0 %v4788
  %4798 = vmatprep.subr.mxu0 0.0
  %4799 = vmatpush1.msra.mxu0 0.0
  %4800 = vmatprep.subr.mxu0 0.0
  %4801 = vmatpush1.msra.mxu0 0.0
  %4802 = vmatprep.subr.mxu0 0.0
  %4803 = vmatpush1.msra.mxu0 0.0
  %4804 = vmatprep.subr.mxu0 0.0
  %4805 = vmatpush1.msra.mxu0 0.0
  %4806 = vmatprep.subr.mxu0 0.0
  %4807 = vmatpush1.msra.mxu0 0.0
  %4808 = vmatprep.subr.mxu0 0.0
  %4809 = vmatpush1.msra.mxu0 0.0
  %4810 = vmatprep.subr.mxu0 0.0
  %4811 = vmatpush1.msra.mxu0 0.0
  %4812 = vmatprep.subr.mxu0 0.0
  %4813 = vmatpush1.msra.mxu0 0.0
  %4814 = vmatprep.subr.mxu0 0.0
  %4815 = vmatpush1.msra.mxu0 0.0
  %4816 = vmatprep.subr.mxu0 0.0
  %4817 = vmatpush1.msra.mxu0 0.0
  %4818 = vmatprep.subr.mxu0 0.0
  %4819 = vmatpush1.msra.mxu0 0.0
  %4820 = vmatprep.subr.mxu0 0.0
  %4821 = vmatpush1.msra.mxu0 0.0
  %4822 = vmatprep.subr.mxu0 0.0
  %4823 = vmatpush1.msra.mxu0 0.0
  %4824 = vmatprep.subr.mxu0 0.0
  %4825 = vmatpush1.msra.mxu0 0.0
  %4826 = vmatprep.subr.mxu0 0.0
  %4827 = vmatpush1.msra.mxu0 0.0
  %4828 = vmatprep.subr.mxu0 0.0
  %4829 = vmatpush1.msra.mxu0 0.0
  %4830 = vmatprep.subr.mxu0 0.0
  %4831 = vmatpush1.msra.mxu0 0.0
  %4832 = vmatprep.subr.mxu0 0.0
  %4833 = vmatpush1.msra.mxu0 0.0
  %4834 = vmatprep.subr.mxu0 0.0
  %4835 = vmatpush1.msra.mxu0 0.0
  %4836 = vmatprep.subr.mxu0 0.0
  %4837 = vmatpush1.msra.mxu0 0.0
  %4838 = vmatprep.subr.mxu0 0.0
  %4839 = vmatpush1.msra.mxu0 0.0
  %4840 = vmatprep.subr.mxu0 0.0
  %4841 = vmatpush1.msra.mxu0 0.0
  %4842 = vmatprep.subr.mxu0 0.0
  %4843 = vmatpush1.msra.mxu0 0.0
  %4844 = vmatprep.subr.mxu0 0.0
  %4845 = vmatpush1.msra.mxu0 0.0
  %4846 = vmatprep.subr.mxu0 0.0
  %4847 = vmatpush1.msra.mxu0 0.0
  %4848 = vmatprep.subr.mxu0 0.0
  %4849 = vmatpush1.msra.mxu0 0.0
  %4850 = vmatprep.subr.mxu0 0.0
  %4851 = vmatpush1.msra.mxu0 0.0
  %4852 = vmatprep.subr.mxu0 0.0
  %4853 = vmatpush1.msra.mxu0 0.0
  %4854 = vmatprep.mubr.f32.mxu0 0.0
  %4855 = vmatmul.mubr.f32.gmra.mrb[0].mxu0 %v465
  %v4856 = vpop.f32.mrb[0].mxu0
  %v4857 = vadd.f32 0.0, %v4856
  %v4858 = vpop.f32.mrb[0].mxu0
  %4859 = vmatprep.mubr.f32.mxu0 0.0
  %4860 = vmatmul.mubr.f32.gmra.mrb[0].mxu0 %v468
  %v4861 = vpop.f32.mrb[0].mxu0
  %v4862 = vadd.f32 0.0, %v4861
  %v4863 = vpop.f32.mrb[0].mxu0
  %4864 = vmatprep.mubr.f32.mxu0 0.0
  %4865 = vmatmul.mubr.f32.gmra.mrb[0].mxu0 %v471
  %v4866 = vpop.f32.mrb[0].mxu0
  %v4867 = vadd.f32 0.0, %v4866
  %v4868 = vpop.f32.mrb[0].mxu0
  %4869 = vmatprep.mubr.f32.mxu0 0.0
  %4870 = vmatmul.mubr.f32.gmra.mrb[0].mxu0 %v474
  %v4871 = vpop.f32.mrb[0].mxu0
  %v4872 = vadd.f32 0.0, %v4871
  %v4873 = vpop.f32.mrb[0].mxu0
  %4874 = vmatprep.mubr.f32.mxu0 0.0
  %4875 = vmatmul.mubr.f32.gmra.mrb[0].mxu0 %v477
  %v4876 = vpop.f32.mrb[0].mxu0
  %v4877 = vadd.f32 0.0, %v4876
  %v4878 = vpop.f32.mrb[0].mxu0
  %4879 = vdwg.mxu0
  %v4880 = vmax.f32 %v4857, 0.0
  %v4881 = vmax.f32 %v4862, 0.0
  %v4882 = vmax.f32 %v4867, 0.0
  %v4883 = vmax.f32 %v4872, 0.0
  %v4884 = vmax.f32 %v4877, 0.0
  %v4886 = vsel %vm479, %v4884, 0
  %4888 = vmatprep.subr.mxu0 0.0
  %4889 = vmatpush1.msra.mxu0 %v4880
  %4890 = vmatprep.subr.mxu0 0.0
  %4891 = vmatpush1.msra.mxu0 %v4881
  %4892 = vmatprep.subr.mxu0 0.0
  %4893 = vmatpush1.msra.mxu0 %v4882
  %4894 = vmatprep.subr.mxu0 0.0
  %4895 = vmatpush1.msra.mxu0 %v4883
  %4896 = vmatprep.subr.mxu0 0.0
  %4897 = vmatpush1.msra.mxu0 %v4886
  %4898 = vmatprep.subr.mxu0 0.0
  %4899 = vmatpush1.msra.mxu0 0.0
  %4900 = vmatprep.subr.mxu0 0.0
  %4901 = vmatpush1.msra.mxu0 0.0
  %4902 = vmatprep.subr.mxu0 0.0
  %4903 = vmatpush1.msra.mxu0 0.0
  %4904 = vmatprep.subr.mxu0 0.0
  %4905 = vmatpush1.msra.mxu0 0.0
  %4906 = vmatprep.subr.mxu0 0.0
  %4907 = vmatpush1.msra.mxu0 0.0
  %4908 = vmatprep.subr.mxu0 0.0
  %4909 = vmatpush1.msra.mxu0 0.0
  %4910 = vmatprep.subr.mxu0 0.0
  %4911 = vmatpush1.msra.mxu0 0.0
  %4912 = vmatprep.subr.mxu0 0.0
  %4913 = vmatpush1.msra.mxu0 0.0
  %4914 = vmatprep.subr.mxu0 0.0
  %4915 = vmatpush1.msra.mxu0 0.0
  %4916 = vmatprep.subr.mxu0 0.0
  %4917 = vmatpush1.msra.mxu0 0.0
  %4918 = vmatprep.subr.mxu0 0.0
  %4919 = vmatpush1.msra.mxu0 0.0
  %4920 = vmatprep.subr.mxu0 0.0
  %4921 = vmatpush1.msra.mxu0 0.0
  %4922 = vmatprep.subr.mxu0 0.0
  %4923 = vmatpush1.msra.mxu0 0.0
  %4924 = vmatprep.subr.mxu0 0.0
  %4925 = vmatpush1.msra.mxu0 0.0
  %4926 = vmatprep.subr.mxu0 0.0
  %4927 = vmatpush1.msra.mxu0 0.0
  %4928 = vmatprep.subr.mxu0 0.0
  %4929 = vmatpush1.msra.mxu0 0.0
  %4930 = vmatprep.subr.mxu0 0.0
  %4931 = vmatpush1.msra.mxu0 0.0
  %4932 = vmatprep.subr.mxu0 0.0
  %4933 = vmatpush1.msra.mxu0 0.0
  %4934 = vmatprep.subr.mxu0 0.0
  %4935 = vmatpush1.msra.mxu0 0.0
  %4936 = vmatprep.subr.mxu0 0.0
  %4937 = vmatpush1.msra.mxu0 0.0
  %4938 = vmatprep.subr.mxu0 0.0
  %4939 = vmatpush1.msra.mxu0 0.0
  %4940 = vmatprep.subr.mxu0 0.0
  %4941 = vmatpush1.msra.mxu0 0.0
  %4942 = vmatprep.subr.mxu0 0.0
  %4943 = vmatpush1.msra.mxu0 0.0
  %4944 = vmatprep.subr.mxu0 0.0
  %4945 = vmatpush1.msra.mxu0 0.0
  %4946 = vmatprep.subr.mxu0 0.0
  %4947 = vmatpush1.msra.mxu0 0.0
  %4948 = vmatprep.subr.mxu0 0.0
  %4949 = vmatpush1.msra.mxu0 0.0
  %4950 = vmatprep.subr.mxu0 0.0
  %4951 = vmatpush1.msra.mxu0 0.0
  %4952 = vmatprep.mubr.f32.mxu0 0.0
  %4953 = vmatmul.mubr.f32.gmra.mrb[0].mxu0 %v580
  %v4954 = vpop.f32.mrb[0].mxu0
  %v4955 = vadd.f32 0.0, %v4954
  %v4956 = vpop.f32.mrb[0].mxu0
  %4957 = vmatprep.mubr.f32.mxu0 0.0
  %4958 = vmatmul.mubr.f32.gmra.mrb[0].mxu0 %v583
  %v4959 = vpop.f32.mrb[0].mxu0
  %v4960 = vadd.f32 0.0, %v4959
  %v4961 = vpop.f32.mrb[0].mxu0
  %4962 = vmatprep.mubr.f32.mxu0 0.0
  %4963 = vmatmul.mubr.f32.gmra.mrb[0].mxu0 %v586
  %v4964 = vpop.f32.mrb[0].mxu0
  %v4965 = vadd.f32 0.0, %v4964
  %v4966 = vpop.f32.mrb[0].mxu0
  %4967 = vmatprep.mubr.f32.mxu0 0.0
  %4968 = vmatmul.mubr.f32.gmra.mrb[0].mxu0 %v589
  %v4969 = vpop.f32.mrb[0].mxu0
  %v4970 = vadd.f32 0.0, %v4969
  %v4971 = vpop.f32.mrb[0].mxu0
  %4972 = vmatprep.mubr.f32.mxu0 0.0
  %4973 = vmatmul.mubr.f32.gmra.mrb[0].mxu0 %v592
  %v4974 = vpop.f32.mrb[0].mxu0
  %v4975 = vadd.f32 0.0, %v4974
  %v4976 = vpop.f32.mrb[0].mxu0
  %4977 = vdwg.mxu0
  %v4978 = vmax.f32 %v4955, 0.0
  %v4979 = vmax.f32 %v4960, 0.0
  %v4980 = vmax.f32 %v4965, 0.0
  %v4981 = vmax.f32 %v4970, 0.0
  %v4982 = vmax.f32 %v4975, 0.0
  %v4984 = vsel %vm479, %v4982, 0
  %4986 = vmatprep.subr.mxu0 0.0
  %4987 = vmatpush1.msra.mxu0 %v4978
  %4988 = vmatprep.subr.mxu0 0.0
  %4989 = vmatpush1.msra.mxu0 %v4979
  %4990 = vmatprep.subr.mxu0 0.0
  %4991 = vmatpush1.msra.mxu0 %v4980
  %4992 = vmatprep.subr.mxu0 0.0
  %4993 = vmatpush1.msra.mxu0 %v4981
  %4994 = vmatprep.subr.mxu0 0.0
  %4995 = vmatpush1.msra.mxu0 %v4984
  %4996 = vmatprep.subr.mxu0 0.0
  %4997 = vmatpush1.msra.mxu0 0.0
  %4998 = vmatprep.subr.mxu0 0.0
  %4999 = vmatpush1.msra.mxu0 0.0
  %5000 = vmatprep.subr.mxu0 0.0
  %5001 = vmatpush1.msra.mxu0 0.0
  %5002 = vmatprep.subr.mxu0 0.0
  %5003 = vmatpush1.msra.mxu0 0.0
  %5004 = vmatprep.subr.mxu0 0.0
  %5005 = vmatpush1.msra.mxu0 0.0
  %5006 = vmatprep.subr.mxu0 0.0
  %5007 = vmatpush1.msra.mxu0 0.0
  %5008 = vmatprep.subr.mxu0 0.0
  %5009 = vmatpush1.msra.mxu0 0.0
  %5010 = vmatprep.subr.mxu0 0.0
  %5011 = vmatpush1.msra.mxu0 0.0
  %5012 = vmatprep.subr.mxu0 0.0
  %5013 = vmatpush1.msra.mxu0 0.0
  %5014 = vmatprep.subr.mxu0 0.0
  %5015 = vmatpush1.msra.mxu0 0.0
  %5016 = vmatprep.subr.mxu0 0.0
  %5017 = vmatpush1.msra.mxu0 0.0
  %5018 = vmatprep.subr.mxu0 0.0
  %5019 = vmatpush1.msra.mxu0 0.0
  %5020 = vmatprep.subr.mxu0 0.0
  %5021 = vmatpush1.msra.mxu0 0.0
  %5022 = vmatprep.subr.mxu0 0.0
  %5023 = vmatpush1.msra.mxu0 0.0
  %5024 = vmatprep.subr.mxu0 0.0
  %5025 = vmatpush1.msra.mxu0 0.0
  %5026 = vmatprep.subr.mxu0 0.0
  %5027 = vmatpush1.msra.mxu0 0.0
  %5028 = vmatprep.subr.mxu0 0.0
  %5029 = vmatpush1.msra.mxu0 0.0
  %5030 = vmatprep.subr.mxu0 0.0
  %5031 = vmatpush1.msra.mxu0 0.0
  %5032 = vmatprep.subr.mxu0 0.0
  %5033 = vmatpush1.msra.mxu0 0.0
  %5034 = vmatprep.subr.mxu0 0.0
  %5035 = vmatpush1.msra.mxu0 0.0
  %5036 = vmatprep.subr.mxu0 0.0
  %5037 = vmatpush1.msra.mxu0 0.0
  %5038 = vmatprep.subr.mxu0 0.0
  %5039 = vmatpush1.msra.mxu0 0.0
  %5040 = vmatprep.subr.mxu0 0.0
  %5041 = vmatpush1.msra.mxu0 0.0
  %5042 = vmatprep.subr.mxu0 0.0
  %5043 = vmatpush1.msra.mxu0 0.0
  %5044 = vmatprep.subr.mxu0 0.0
  %5045 = vmatpush1.msra.mxu0 0.0
  %5046 = vmatprep.subr.mxu0 0.0
  %5047 = vmatpush1.msra.mxu0 0.0
  %5048 = vmatprep.subr.mxu0 0.0
  %5049 = vmatpush1.msra.mxu0 0.0
  %5050 = vmatprep.mubr.f32.mxu0 0.0
  %5051 = vmatmul.mubr.f32.gmra.mrb[0].mxu0 %v693
  %v5052 = vpop.f32.mrb[0].mxu0
  %v5053 = vadd.f32 0.0, %v5052
  %v5054 = vpop.f32.mrb[0].mxu0
  %5055 = vdwg.mxu0
  %v5056 = vmax.f32 %v5053, 0.0
  %v5057 = vxor.u32 %v5053, 2147483648
  %v5058 = vmul.f32 %v5057, 1.442695
  %v5059 = vpow.pop %v5058
  %v5060 = vadd.f32 %v5059, 1.0
  %v5061 = vrcp.pop %v5060
  %v5062 = vmul.f32 1.0, %v5061
  %v5063 = vmul.f32 %v5056, 0.55714285
  %v5064 = vsub.f32 0.0, %v5063
  %v5065 = vmul.f32 %v5064, 1.442695
  %v5066 = vpow.pop %v5065
  %v5067 = vsub.f32 1.0, %v5066
  %v5068 = vmul.f32 %v4362, %v5067
  %v5069 = vlaneseq
  %v5070 = vshrl.u32 %v5069, 7
  %v5071 = vsub.s32 0, %v5070
  %v5072 = vrot.slane %v5068, %v5071
  %v5073 = vmul.f32 %v5072, %v5062
  %v5074 = vadd.f32 %v4359, %v5073
  %v5075 = vmul.f32 %v5068, 3.442857
  %v5076 = vadd.f32 %v4361, %v5075
  %v5077 = vmul.f32 %v4362, %v5066
  %v5078 = vmul.f32 %v24, 4.0
  %v5079 = vmul.f32 %v25, 4.0
  %v5080 = vmul.f32 %v26, 4.0
  %v5081 = vmul.f32 %v27, 4.0
  %v5082 = vadd.f32 %v20, %v5078
  %v5083 = vadd.f32 %v21, %v5079
  %v5084 = vadd.f32 %v22, %v5080
  %v5085 = vadd.f32 %v23, %v5081
  %v5086 = vand.u32 2147483647, %v5082
  %vm5087 = vcmp.le.f32.partialorder %v5086, 0.7853982
  %vm5088 = vcmp.lt.s32.totalorder %v5082, 0
  %v5089 = vand.u32 %v5082, 2139095040
  %v5090 = vshrl.u32 %v5089, 23
  %v5091 = vsub.s32 %v5090, 127
  %v5092 = vand.u32 2147483647, %v5082
  %v5093 = vand.u32 %v5092, 8388607
  %v5094 = vor.u32 %v5093, 8388608
  %v5095 = vsub.s32 0, %v5094
  %v5096 = vadd.s32 %v5091, 1
  %vm5097 = vcmp.gt.s32.totalorder %v5096, 0
  %v5098 = vsel %vm5097, %v5096, 0
  %v5099 = vshrl.u32 %v5098, 5
  %v5100 = vand.u32 %v5098, 31
  %v5101 = vsub.s32 32, %v5100
  %v5102 = vshrl.u32 683565275, %v5101
  %v5103 = vshll.u32 683565275, %v5100
  %v5104 = vshrl.u32 2475754826, %v5101
  %v5105 = vor.u32 %v5103, %v5104
  %v5106 = vshll.u32 2475754826, %v5100
  %v5107 = vshrl.u32 2131351028, %v5101
  %v5108 = vor.u32 %v5106, %v5107
  %v5109 = vshll.u32 2131351028, %v5100
  %v5110 = vshrl.u32 2102212464, %v5101
  %v5111 = vor.u32 %v5109, %v5110
  %v5112 = vshll.u32 2102212464, %v5100
  %v5113 = vshrl.u32 920167782, %v5101
  %v5114 = vor.u32 %v5112, %v5113
  %v5115 = vshll.u32 920167782, %v5100
  %v5116 = vshrl.u32 1326507024, %v5101
  %v5117 = vor.u32 %v5115, %v5116
  %vm5118 = vcmp.lt.s32.totalorder %v5099, 1
  %vm5119 = vcmp.lt.s32.totalorder %v5099, 2
  %vm5120 = vcmp.lt.s32.totalorder %v5099, 3
  %vm5121 = vcmp.lt.s32.totalorder %v5099, 4
  %v5122 = vsel %vm5118, %v5102, %v5105
  %v5123 = vsel %vm5121, %v5111, 2102212464
  %v5124 = vsel %vm5120, %v5108, %v5123
  %v5125 = vsel %vm5119, %v5122, %v5124
  %v5126 = vsel %vm5118, %v5105, %v5108
  %v5127 = vsel %vm5121, %v5114, 920167782
  %v5128 = vsel %vm5120, %v5111, %v5127
  %v5129 = vsel %vm5119, %v5126, %v5128
  %v5130 = vsel %vm5118, %v5108, %v5111
  %v5131 = vsel %vm5121, %v5117, 1326507024
  %v5132 = vsel %vm5120, %v5114, %v5131
  %v5133 = vsel %vm5119, %v5130, %v5132
  %v5134 = vshll.u32 %v5094, 8
  %v5135 = vmul.u32.u64.compose %v5134, %v5133
  %v5136 = vextract.low.u32 %v5135
  %v5137 = vextract.high.u32 %v5135
  %v5138 = vmul.u32.u64.compose %v5134, %v5129
  %v5139 = vextract.low.u32 %v5138
  %v5140 = vextract.high.u32 %v5138
  %v5141 = vmul.u32 %v5134, %v5125
  %v5142 = vadd.s32 %v5137, %v5139
  %vm5143 = vc.u32 %v5137, %v5139
  %v5144 = vadd.s32 %v5140, 1
  %v5145 = vsel %vm5143, %v5144, %v5140
  %v5146 = vadd.s32 %v5141, %v5145
  %v5147 = vadd.s32 %v5146, 536870912
  %v5148 = vshrl.u32 %v5147, 30
  %v5149 = vshll.u32 %v5148, 30
  %v5150 = vsub.s32 %v5146, %v5149
  %vm5151 = vcmp.lt.s32.totalorder %v5150, 0
  %v5152 = vsub.s32 0, %v5150
  %v5153 = vsel %vm5151, %v5152, %v5150
  %v5154 = vclz %v5153
  %v5155 = vsub.s32 %v5154, 2
  %vm5156 = vcmp.gt.s32.totalorder 0, %v5155
  %v5157 = vsel %vm5156, 0, %v5155
  %v5158 = vsub.s32 32, %v5157
  %v5159 = vshll.u32 %v5150, %v5157
  %v5160 = vshrl.u32 %v5142, %v5158
  %v5161 = vor.u32 %v5159, %v5160
  %v5162 = vsub.s32 4294967266, %v5157
  %v5163 = vadd.s32 %v5162, 127
  %v5164 = vshll.u32 %v5163, 23
  %v5165 = vor.u32 4788187, %v5164
  %v5166 = vand.u32 2147483647, %v5165
  %v5168 = vcvt.s32.f32 %v5161
  %v5169 = vmul.f32 %v5168, %v5166
  %v5170 = vxor.u32 %v5169, 2147483648
  %v5171 = vsel %vm5088, %v5170, %v5169
  %v5172 = vsub.s32 4, %v5148
  %v5173 = vsel %vm5088, %v5172, %v5148
  %v5174 = vsel %vm5087, %v5082, %v5171
  %v5175 = vsel %vm5087, 0, %v5173
  %v5176 = vcosq.f32.pop %v5174
  %v5177 = vsinq.f32.pop %v5174
  %vm5178 = vweird.f32 %v5082
  %v5179 = vadd.s32 %v5175, 3
  %v5180 = vand.u32 %v5179, 3
  %vm5181 = vcmp.lt.s32.totalorder %v5180, 2
  %vm5182 = vcmp.eq.s32.totalorder %v5180, 0
  %v5183 = vxor.u32 %v5177, 2147483648
  %v5184 = vsel %vm5182, %v5176, %v5183
  %vm5185 = vcmp.eq.s32.totalorder %v5180, 2
  %v5186 = vxor.u32 %v5176, 2147483648
  %v5187 = vsel %vm5185, %v5186, %v5177
  %v5188 = vsel %vm5181, %v5184, %v5187
  %v5189 = vsel %vm5178, nan, %v5188
  %v5190 = vand.u32 2147483647, %v5083
  %vm5191 = vcmp.le.f32.partialorder %v5190, 0.7853982
  %vm5192 = vcmp.lt.s32.totalorder %v5083, 0
  %v5193 = vand.u32 %v5083, 2139095040
  %v5194 = vshrl.u32 %v5193, 23
  %v5195 = vsub.s32 %v5194, 127
  %v5196 = vand.u32 2147483647, %v5083
  %v5197 = vand.u32 %v5196, 8388607
  %v5198 = vor.u32 %v5197, 8388608
  %v5199 = vsub.s32 0, %v5198
  %v5200 = vadd.s32 %v5195, 1
  %vm5201 = vcmp.gt.s32.totalorder %v5200, 0
  %v5202 = vsel %vm5201, %v5200, 0
  %v5203 = vshrl.u32 %v5202, 5
  %v5204 = vand.u32 %v5202, 31
  %v5205 = vsub.s32 32, %v5204
  %v5206 = vshrl.u32 683565275, %v5205
  %v5207 = vshll.u32 683565275, %v5204
  %v5208 = vshrl.u32 2475754826, %v5205
  %v5209 = vor.u32 %v5207, %v5208
  %v5210 = vshll.u32 2475754826, %v5204
  %v5211 = vshrl.u32 2131351028, %v5205
  %v5212 = vor.u32 %v5210, %v5211
  %v5213 = vshll.u32 2131351028, %v5204
  %v5214 = vshrl.u32 2102212464, %v5205
  %v5215 = vor.u32 %v5213, %v5214
  %v5216 = vshll.u32 2102212464, %v5204
  %v5217 = vshrl.u32 920167782, %v5205
  %v5218 = vor.u32 %v5216, %v5217
  %v5219 = vshll.u32 920167782, %v5204
  %v5220 = vshrl.u32 1326507024, %v5205
  %v5221 = vor.u32 %v5219, %v5220
  %vm5222 = vcmp.lt.s32.totalorder %v5203, 1
  %vm5223 = vcmp.lt.s32.totalorder %v5203, 2
  %vm5224 = vcmp.lt.s32.totalorder %v5203, 3
  %vm5225 = vcmp.lt.s32.totalorder %v5203, 4
  %v5226 = vsel %vm5222, %v5206, %v5209
  %v5227 = vsel %vm5225, %v5215, 2102212464
  %v5228 = vsel %vm5224, %v5212, %v5227
  %v5229 = vsel %vm5223, %v5226, %v5228
  %v5230 = vsel %vm5222, %v5209, %v5212
  %v5231 = vsel %vm5225, %v5218, 920167782
  %v5232 = vsel %vm5224, %v5215, %v5231
  %v5233 = vsel %vm5223, %v5230, %v5232
  %v5234 = vsel %vm5222, %v5212, %v5215
  %v5235 = vsel %vm5225, %v5221, 1326507024
  %v5236 = vsel %vm5224, %v5218, %v5235
  %v5237 = vsel %vm5223, %v5234, %v5236
  %v5238 = vshll.u32 %v5198, 8
  %v5239 = vmul.u32.u64.compose %v5238, %v5237
  %v5240 = vextract.low.u32 %v5239
  %v5241 = vextract.high.u32 %v5239
  %v5242 = vmul.u32.u64.compose %v5238, %v5233
  %v5243 = vextract.low.u32 %v5242
  %v5244 = vextract.high.u32 %v5242
  %v5245 = vmul.u32 %v5238, %v5229
  %v5246 = vadd.s32 %v5241, %v5243
  %vm5247 = vc.u32 %v5241, %v5243
  %v5248 = vadd.s32 %v5244, 1
  %v5249 = vsel %vm5247, %v5248, %v5244
  %v5250 = vadd.s32 %v5245, %v5249
  %v5251 = vadd.s32 %v5250, 536870912
  %v5252 = vshrl.u32 %v5251, 30
  %v5253 = vshll.u32 %v5252, 30
  %v5254 = vsub.s32 %v5250, %v5253
  %vm5255 = vcmp.lt.s32.totalorder %v5254, 0
  %v5256 = vsub.s32 0, %v5254
  %v5257 = vsel %vm5255, %v5256, %v5254
  %v5258 = vclz %v5257
  %v5259 = vsub.s32 %v5258, 2
  %vm5260 = vcmp.gt.s32.totalorder 0, %v5259
  %v5261 = vsel %vm5260, 0, %v5259
  %v5262 = vsub.s32 32, %v5261
  %v5263 = vshll.u32 %v5254, %v5261
  %v5264 = vshrl.u32 %v5246, %v5262
  %v5265 = vor.u32 %v5263, %v5264
  %v5266 = vsub.s32 4294967266, %v5261
  %v5267 = vadd.s32 %v5266, 127
  %v5268 = vshll.u32 %v5267, 23
  %v5269 = vor.u32 4788187, %v5268
  %v5270 = vand.u32 2147483647, %v5269
  %v5272 = vcvt.s32.f32 %v5265
  %v5273 = vmul.f32 %v5272, %v5270
  %v5274 = vxor.u32 %v5273, 2147483648
  %v5275 = vsel %vm5192, %v5274, %v5273
  %v5276 = vsub.s32 4, %v5252
  %v5277 = vsel %vm5192, %v5276, %v5252
  %v5278 = vsel %vm5191, %v5083, %v5275
  %v5279 = vsel %vm5191, 0, %v5277
  %v5280 = vcosq.f32.pop %v5278
  %v5281 = vsinq.f32.pop %v5278
  %vm5282 = vweird.f32 %v5083
  %v5283 = vadd.s32 %v5279, 3
  %v5284 = vand.u32 %v5283, 3
  %vm5285 = vcmp.lt.s32.totalorder %v5284, 2
  %vm5286 = vcmp.eq.s32.totalorder %v5284, 0
  %v5287 = vxor.u32 %v5281, 2147483648
  %v5288 = vsel %vm5286, %v5280, %v5287
  %vm5289 = vcmp.eq.s32.totalorder %v5284, 2
  %v5290 = vxor.u32 %v5280, 2147483648
  %v5291 = vsel %vm5289, %v5290, %v5281
  %v5292 = vsel %vm5285, %v5288, %v5291
  %v5293 = vsel %vm5282, nan, %v5292
  %v5294 = vand.u32 2147483647, %v5084
  %vm5295 = vcmp.le.f32.partialorder %v5294, 0.7853982
  %vm5296 = vcmp.lt.s32.totalorder %v5084, 0
  %v5297 = vand.u32 %v5084, 2139095040
  %v5298 = vshrl.u32 %v5297, 23
  %v5299 = vsub.s32 %v5298, 127
  %v5300 = vand.u32 2147483647, %v5084
  %v5301 = vand.u32 %v5300, 8388607
  %v5302 = vor.u32 %v5301, 8388608
  %v5303 = vsub.s32 0, %v5302
  %v5304 = vadd.s32 %v5299, 1
  %vm5305 = vcmp.gt.s32.totalorder %v5304, 0
  %v5306 = vsel %vm5305, %v5304, 0
  %v5307 = vshrl.u32 %v5306, 5
  %v5308 = vand.u32 %v5306, 31
  %v5309 = vsub.s32 32, %v5308
  %v5310 = vshrl.u32 683565275, %v5309
  %v5311 = vshll.u32 683565275, %v5308
  %v5312 = vshrl.u32 2475754826, %v5309
  %v5313 = vor.u32 %v5311, %v5312
  %v5314 = vshll.u32 2475754826, %v5308
  %v5315 = vshrl.u32 2131351028, %v5309
  %v5316 = vor.u32 %v5314, %v5315
  %v5317 = vshll.u32 2131351028, %v5308
  %v5318 = vshrl.u32 2102212464, %v5309
  %v5319 = vor.u32 %v5317, %v5318
  %v5320 = vshll.u32 2102212464, %v5308
  %v5321 = vshrl.u32 920167782, %v5309
  %v5322 = vor.u32 %v5320, %v5321
  %v5323 = vshll.u32 920167782, %v5308
  %v5324 = vshrl.u32 1326507024, %v5309
  %v5325 = vor.u32 %v5323, %v5324
  %vm5326 = vcmp.lt.s32.totalorder %v5307, 1
  %vm5327 = vcmp.lt.s32.totalorder %v5307, 2
  %vm5328 = vcmp.lt.s32.totalorder %v5307, 3
  %vm5329 = vcmp.lt.s32.totalorder %v5307, 4
  %v5330 = vsel %vm5326, %v5310, %v5313
  %v5331 = vsel %vm5329, %v5319, 2102212464
  %v5332 = vsel %vm5328, %v5316, %v5331
  %v5333 = vsel %vm5327, %v5330, %v5332
  %v5334 = vsel %vm5326, %v5313, %v5316
  %v5335 = vsel %vm5329, %v5322, 920167782
  %v5336 = vsel %vm5328, %v5319, %v5335
  %v5337 = vsel %vm5327, %v5334, %v5336
  %v5338 = vsel %vm5326, %v5316, %v5319
  %v5339 = vsel %vm5329, %v5325, 1326507024
  %v5340 = vsel %vm5328, %v5322, %v5339
  %v5341 = vsel %vm5327, %v5338, %v5340
  %v5342 = vshll.u32 %v5302, 8
  %v5343 = vmul.u32.u64.compose %v5342, %v5341
  %v5344 = vextract.low.u32 %v5343
  %v5345 = vextract.high.u32 %v5343
  %v5346 = vmul.u32.u64.compose %v5342, %v5337
  %v5347 = vextract.low.u32 %v5346
  %v5348 = vextract.high.u32 %v5346
  %v5349 = vmul.u32 %v5342, %v5333
  %v5350 = vadd.s32 %v5345, %v5347
  %vm5351 = vc.u32 %v5345, %v5347
  %v5352 = vadd.s32 %v5348, 1
  %v5353 = vsel %vm5351, %v5352, %v5348
  %v5354 = vadd.s32 %v5349, %v5353
  %v5355 = vadd.s32 %v5354, 536870912
  %v5356 = vshrl.u32 %v5355, 30
  %v5357 = vshll.u32 %v5356, 30
  %v5358 = vsub.s32 %v5354, %v5357
  %vm5359 = vcmp.lt.s32.totalorder %v5358, 0
  %v5360 = vsub.s32 0, %v5358
  %v5361 = vsel %vm5359, %v5360, %v5358
  %v5362 = vclz %v5361
  %v5363 = vsub.s32 %v5362, 2
  %vm5364 = vcmp.gt.s32.totalorder 0, %v5363
  %v5365 = vsel %vm5364, 0, %v5363
  %v5366 = vsub.s32 32, %v5365
  %v5367 = vshll.u32 %v5358, %v5365
  %v5368 = vshrl.u32 %v5350, %v5366
  %v5369 = vor.u32 %v5367, %v5368
  %v5370 = vsub.s32 4294967266, %v5365
  %v5371 = vadd.s32 %v5370, 127
  %v5372 = vshll.u32 %v5371, 23
  %v5373 = vor.u32 4788187, %v5372
  %v5374 = vand.u32 2147483647, %v5373
  %v5376 = vcvt.s32.f32 %v5369
  %v5377 = vmul.f32 %v5376, %v5374
  %v5378 = vxor.u32 %v5377, 2147483648
  %v5379 = vsel %vm5296, %v5378, %v5377
  %v5380 = vsub.s32 4, %v5356
  %v5381 = vsel %vm5296, %v5380, %v5356
  %v5382 = vsel %vm5295, %v5084, %v5379
  %v5383 = vsel %vm5295, 0, %v5381
  %v5384 = vcosq.f32.pop %v5382
  %v5385 = vsinq.f32.pop %v5382
  %vm5386 = vweird.f32 %v5084
  %v5387 = vadd.s32 %v5383, 3
  %v5388 = vand.u32 %v5387, 3
  %vm5389 = vcmp.lt.s32.totalorder %v5388, 2
  %vm5390 = vcmp.eq.s32.totalorder %v5388, 0
  %v5391 = vxor.u32 %v5385, 2147483648
  %v5392 = vsel %vm5390, %v5384, %v5391
  %vm5393 = vcmp.eq.s32.totalorder %v5388, 2
  %v5394 = vxor.u32 %v5384, 2147483648
  %v5395 = vsel %vm5393, %v5394, %v5385
  %v5396 = vsel %vm5389, %v5392, %v5395
  %v5397 = vsel %vm5386, nan, %v5396
  %v5398 = vand.u32 2147483647, %v5085
  %vm5399 = vcmp.le.f32.partialorder %v5398, 0.7853982
  %vm5400 = vcmp.lt.s32.totalorder %v5085, 0
  %v5401 = vand.u32 %v5085, 2139095040
  %v5402 = vshrl.u32 %v5401, 23
  %v5403 = vsub.s32 %v5402, 127
  %v5404 = vand.u32 2147483647, %v5085
  %v5405 = vand.u32 %v5404, 8388607
  %v5406 = vor.u32 %v5405, 8388608
  %v5407 = vsub.s32 0, %v5406
  %v5408 = vadd.s32 %v5403, 1
  %vm5409 = vcmp.gt.s32.totalorder %v5408, 0
  %v5410 = vsel %vm5409, %v5408, 0
  %v5411 = vshrl.u32 %v5410, 5
  %v5412 = vand.u32 %v5410, 31
  %v5413 = vsub.s32 32, %v5412
  %v5414 = vshrl.u32 683565275, %v5413
  %v5415 = vshll.u32 683565275, %v5412
  %v5416 = vshrl.u32 2475754826, %v5413
  %v5417 = vor.u32 %v5415, %v5416
  %v5418 = vshll.u32 2475754826, %v5412
  %v5419 = vshrl.u32 2131351028, %v5413
  %v5420 = vor.u32 %v5418, %v5419
  %v5421 = vshll.u32 2131351028, %v5412
  %v5422 = vshrl.u32 2102212464, %v5413
  %v5423 = vor.u32 %v5421, %v5422
  %v5424 = vshll.u32 2102212464, %v5412
  %v5425 = vshrl.u32 920167782, %v5413
  %v5426 = vor.u32 %v5424, %v5425
  %v5427 = vshll.u32 920167782, %v5412
  %v5428 = vshrl.u32 1326507024, %v5413
  %v5429 = vor.u32 %v5427, %v5428
  %vm5430 = vcmp.lt.s32.totalorder %v5411, 1
  %vm5431 = vcmp.lt.s32.totalorder %v5411, 2
  %vm5432 = vcmp.lt.s32.totalorder %v5411, 3
  %vm5433 = vcmp.lt.s32.totalorder %v5411, 4
  %v5434 = vsel %vm5430, %v5414, %v5417
  %v5435 = vsel %vm5433, %v5423, 2102212464
  %v5436 = vsel %vm5432, %v5420, %v5435
  %v5437 = vsel %vm5431, %v5434, %v5436
  %v5438 = vsel %vm5430, %v5417, %v5420
  %v5439 = vsel %vm5433, %v5426, 920167782
  %v5440 = vsel %vm5432, %v5423, %v5439
  %v5441 = vsel %vm5431, %v5438, %v5440
  %v5442 = vsel %vm5430, %v5420, %v5423
  %v5443 = vsel %vm5433, %v5429, 1326507024
  %v5444 = vsel %vm5432, %v5426, %v5443
  %v5445 = vsel %vm5431, %v5442, %v5444
  %v5446 = vshll.u32 %v5406, 8
  %v5447 = vmul.u32.u64.compose %v5446, %v5445
  %v5448 = vextract.low.u32 %v5447
  %v5449 = vextract.high.u32 %v5447
  %v5450 = vmul.u32.u64.compose %v5446, %v5441
  %v5451 = vextract.low.u32 %v5450
  %v5452 = vextract.high.u32 %v5450
  %v5453 = vmul.u32 %v5446, %v5437
  %v5454 = vadd.s32 %v5449, %v5451
  %vm5455 = vc.u32 %v5449, %v5451
  %v5456 = vadd.s32 %v5452, 1
  %v5457 = vsel %vm5455, %v5456, %v5452
  %v5458 = vadd.s32 %v5453, %v5457
  %v5459 = vadd.s32 %v5458, 536870912
  %v5460 = vshrl.u32 %v5459, 30
  %v5461 = vshll.u32 %v5460, 30
  %v5462 = vsub.s32 %v5458, %v5461
  %vm5463 = vcmp.lt.s32.totalorder %v5462, 0
  %v5464 = vsub.s32 0, %v5462
  %v5465 = vsel %vm5463, %v5464, %v5462
  %v5466 = vclz %v5465
  %v5467 = vsub.s32 %v5466, 2
  %vm5468 = vcmp.gt.s32.totalorder 0, %v5467
  %v5469 = vsel %vm5468, 0, %v5467
  %v5470 = vsub.s32 32, %v5469
  %v5471 = vshll.u32 %v5462, %v5469
  %v5472 = vshrl.u32 %v5454, %v5470
  %v5473 = vor.u32 %v5471, %v5472
  %v5474 = vsub.s32 4294967266, %v5469
  %v5475 = vadd.s32 %v5474, 127
  %v5476 = vshll.u32 %v5475, 23
  %v5477 = vor.u32 4788187, %v5476
  %v5478 = vand.u32 2147483647, %v5477
  %v5480 = vcvt.s32.f32 %v5473
  %v5481 = vmul.f32 %v5480, %v5478
  %v5482 = vxor.u32 %v5481, 2147483648
  %v5483 = vsel %vm5400, %v5482, %v5481
  %v5484 = vsub.s32 4, %v5460
  %v5485 = vsel %vm5400, %v5484, %v5460
  %v5486 = vsel %vm5399, %v5085, %v5483
  %v5487 = vsel %vm5399, 0, %v5485
  %v5488 = vcosq.f32.pop %v5486
  %v5489 = vsinq.f32.pop %v5486
  %vm5490 = vweird.f32 %v5085
  %v5491 = vadd.s32 %v5487, 3
  %v5492 = vand.u32 %v5491, 3
  %vm5493 = vcmp.lt.s32.totalorder %v5492, 2
  %vm5494 = vcmp.eq.s32.totalorder %v5492, 0
  %v5495 = vxor.u32 %v5489, 2147483648
  %v5496 = vsel %vm5494, %v5488, %v5495
  %vm5497 = vcmp.eq.s32.totalorder %v5492, 2
  %v5498 = vxor.u32 %v5488, 2147483648
  %v5499 = vsel %vm5497, %v5498, %v5489
  %v5500 = vsel %vm5493, %v5496, %v5499
  %v5501 = vsel %vm5490, nan, %v5500
  %v5503 = vsel %vm479, %v5501, 0
  %5505 = vmatprep.subr.mxu0 0.0
  %5506 = vmatpush1.msra.mxu0 %v5189
  %5507 = vmatprep.subr.mxu0 0.0
  %5508 = vmatpush1.msra.mxu0 %v5293
  %5509 = vmatprep.subr.mxu0 0.0
  %5510 = vmatpush1.msra.mxu0 %v5397
  %5511 = vmatprep.subr.mxu0 0.0
  %5512 = vmatpush1.msra.mxu0 %v5503
  %5513 = vmatprep.subr.mxu0 0.0
  %5514 = vmatpush1.msra.mxu0 0.0
  %5515 = vmatprep.subr.mxu0 0.0
  %5516 = vmatpush1.msra.mxu0 0.0
  %5517 = vmatprep.subr.mxu0 0.0
  %5518 = vmatpush1.msra.mxu0 0.0
  %5519 = vmatprep.subr.mxu0 0.0
  %5520 = vmatpush1.msra.mxu0 0.0
  %5521 = vmatprep.subr.mxu0 0.0
  %5522 = vmatpush1.msra.mxu0 0.0
  %5523 = vmatprep.subr.mxu0 0.0
  %5524 = vmatpush1.msra.mxu0 0.0
  %5525 = vmatprep.subr.mxu0 0.0
  %5526 = vmatpush1.msra.mxu0 0.0
  %5527 = vmatprep.subr.mxu0 0.0
  %5528 = vmatpush1.msra.mxu0 0.0
  %5529 = vmatprep.subr.mxu0 0.0
  %5530 = vmatpush1.msra.mxu0 0.0
  %5531 = vmatprep.subr.mxu0 0.0
  %5532 = vmatpush1.msra.mxu0 0.0
  %5533 = vmatprep.subr.mxu0 0.0
  %5534 = vmatpush1.msra.mxu0 0.0
  %5535 = vmatprep.subr.mxu0 0.0
  %5536 = vmatpush1.msra.mxu0 0.0
  %5537 = vmatprep.subr.mxu0 0.0
  %5538 = vmatpush1.msra.mxu0 0.0
  %5539 = vmatprep.subr.mxu0 0.0
  %5540 = vmatpush1.msra.mxu0 0.0
  %5541 = vmatprep.subr.mxu0 0.0
  %5542 = vmatpush1.msra.mxu0 0.0
  %5543 = vmatprep.subr.mxu0 0.0
  %5544 = vmatpush1.msra.mxu0 0.0
  %5545 = vmatprep.subr.mxu0 0.0
  %5546 = vmatpush1.msra.mxu0 0.0
  %5547 = vmatprep.subr.mxu0 0.0
  %5548 = vmatpush1.msra.mxu0 0.0
  %5549 = vmatprep.subr.mxu0 0.0
  %5550 = vmatpush1.msra.mxu0 0.0
  %5551 = vmatprep.subr.mxu0 0.0
  %5552 = vmatpush1.msra.mxu0 0.0
  %5553 = vmatprep.subr.mxu0 0.0
  %5554 = vmatpush1.msra.mxu0 0.0
  %5555 = vmatprep.subr.mxu0 0.0
  %5556 = vmatpush1.msra.mxu0 0.0
  %5557 = vmatprep.subr.mxu0 0.0
  %5558 = vmatpush1.msra.mxu0 0.0
  %5559 = vmatprep.subr.mxu0 0.0
  %5560 = vmatpush1.msra.mxu0 0.0
  %5561 = vmatprep.subr.mxu0 0.0
  %5562 = vmatpush1.msra.mxu0 0.0
  %5563 = vmatprep.subr.mxu0 0.0
  %5564 = vmatpush1.msra.mxu0 0.0
  %5565 = vmatprep.subr.mxu0 0.0
  %5566 = vmatpush1.msra.mxu0 0.0
  %5567 = vmatprep.subr.mxu0 0.0
  %5568 = vmatpush1.msra.mxu0 0.0
  %5569 = vmatprep.mubr.f32.mxu0 0.0
  %5570 = vmatmul.mubr.f32.gmra.mrb[0].mxu0 %v465
  %v5571 = vpop.f32.mrb[0].mxu0
  %v5572 = vadd.f32 0.0, %v5571
  %v5573 = vpop.f32.mrb[0].mxu0
  %5574 = vmatprep.mubr.f32.mxu0 0.0
  %5575 = vmatmul.mubr.f32.gmra.mrb[0].mxu0 %v468
  %v5576 = vpop.f32.mrb[0].mxu0
  %v5577 = vadd.f32 0.0, %v5576
  %v5578 = vpop.f32.mrb[0].mxu0
  %5579 = vmatprep.mubr.f32.mxu0 0.0
  %5580 = vmatmul.mubr.f32.gmra.mrb[0].mxu0 %v471
  %v5581 = vpop.f32.mrb[0].mxu0
  %v5582 = vadd.f32 0.0, %v5581
  %v5583 = vpop.f32.mrb[0].mxu0
  %5584 = vmatprep.mubr.f32.mxu0 0.0
  %5585 = vmatmul.mubr.f32.gmra.mrb[0].mxu0 %v474
  %v5586 = vpop.f32.mrb[0].mxu0
  %v5587 = vadd.f32 0.0, %v5586
  %v5588 = vpop.f32.mrb[0].mxu0
  %5589 = vmatprep.mubr.f32.mxu0 0.0
  %5590 = vmatmul.mubr.f32.gmra.mrb[0].mxu0 %v477
  %v5591 = vpop.f32.mrb[0].mxu0
  %v5592 = vadd.f32 0.0, %v5591
  %v5593 = vpop.f32.mrb[0].mxu0
  %5594 = vdwg.mxu0
  %v5595 = vmax.f32 %v5572, 0.0
  %v5596 = vmax.f32 %v5577, 0.0
  %v5597 = vmax.f32 %v5582, 0.0
  %v5598 = vmax.f32 %v5587, 0.0
  %v5599 = vmax.f32 %v5592, 0.0
  %v5601 = vsel %vm479, %v5599, 0
  %5603 = vmatprep.subr.mxu0 0.0
  %5604 = vmatpush1.msra.mxu0 %v5595
  %5605 = vmatprep.subr.mxu0 0.0
  %5606 = vmatpush1.msra.mxu0 %v5596
  %5607 = vmatprep.subr.mxu0 0.0
  %5608 = vmatpush1.msra.mxu0 %v5597
  %5609 = vmatprep.subr.mxu0 0.0
  %5610 = vmatpush1.msra.mxu0 %v5598
  %5611 = vmatprep.subr.mxu0 0.0
  %5612 = vmatpush1.msra.mxu0 %v5601
  %5613 = vmatprep.subr.mxu0 0.0
  %5614 = vmatpush1.msra.mxu0 0.0
  %5615 = vmatprep.subr.mxu0 0.0
  %5616 = vmatpush1.msra.mxu0 0.0
  %5617 = vmatprep.subr.mxu0 0.0
  %5618 = vmatpush1.msra.mxu0 0.0
  %5619 = vmatprep.subr.mxu0 0.0
  %5620 = vmatpush1.msra.mxu0 0.0
  %5621 = vmatprep.subr.mxu0 0.0
  %5622 = vmatpush1.msra.mxu0 0.0
  %5623 = vmatprep.subr.mxu0 0.0
  %5624 = vmatpush1.msra.mxu0 0.0
  %5625 = vmatprep.subr.mxu0 0.0
  %5626 = vmatpush1.msra.mxu0 0.0
  %5627 = vmatprep.subr.mxu0 0.0
  %5628 = vmatpush1.msra.mxu0 0.0
  %5629 = vmatprep.subr.mxu0 0.0
  %5630 = vmatpush1.msra.mxu0 0.0
  %5631 = vmatprep.subr.mxu0 0.0
  %5632 = vmatpush1.msra.mxu0 0.0
  %5633 = vmatprep.subr.mxu0 0.0
  %5634 = vmatpush1.msra.mxu0 0.0
  %5635 = vmatprep.subr.mxu0 0.0
  %5636 = vmatpush1.msra.mxu0 0.0
  %5637 = vmatprep.subr.mxu0 0.0
  %5638 = vmatpush1.msra.mxu0 0.0
  %5639 = vmatprep.subr.mxu0 0.0
  %5640 = vmatpush1.msra.mxu0 0.0
  %5641 = vmatprep.subr.mxu0 0.0
  %5642 = vmatpush1.msra.mxu0 0.0
  %5643 = vmatprep.subr.mxu0 0.0
  %5644 = vmatpush1.msra.mxu0 0.0
  %5645 = vmatprep.subr.mxu0 0.0
  %5646 = vmatpush1.msra.mxu0 0.0
  %5647 = vmatprep.subr.mxu0 0.0
  %5648 = vmatpush1.msra.mxu0 0.0
  %5649 = vmatprep.subr.mxu0 0.0
  %5650 = vmatpush1.msra.mxu0 0.0
  %5651 = vmatprep.subr.mxu0 0.0
  %5652 = vmatpush1.msra.mxu0 0.0
  %5653 = vmatprep.subr.mxu0 0.0
  %5654 = vmatpush1.msra.mxu0 0.0
  %5655 = vmatprep.subr.mxu0 0.0
  %5656 = vmatpush1.msra.mxu0 0.0
  %5657 = vmatprep.subr.mxu0 0.0
  %5658 = vmatpush1.msra.mxu0 0.0
  %5659 = vmatprep.subr.mxu0 0.0
  %5660 = vmatpush1.msra.mxu0 0.0
  %5661 = vmatprep.subr.mxu0 0.0
  %5662 = vmatpush1.msra.mxu0 0.0
  %5663 = vmatprep.subr.mxu0 0.0
  %5664 = vmatpush1.msra.mxu0 0.0
  %5665 = vmatprep.subr.mxu0 0.0
  %5666 = vmatpush1.msra.mxu0 0.0
  %5667 = vmatprep.mubr.f32.mxu0 0.0
  %5668 = vmatmul.mubr.f32.gmra.mrb[0].mxu0 %v580
  %v5669 = vpop.f32.mrb[0].mxu0
  %v5670 = vadd.f32 0.0, %v5669
  %v5671 = vpop.f32.mrb[0].mxu0
  %5672 = vmatprep.mubr.f32.mxu0 0.0
  %5673 = vmatmul.mubr.f32.gmra.mrb[0].mxu0 %v583
  %v5674 = vpop.f32.mrb[0].mxu0
  %v5675 = vadd.f32 0.0, %v5674
  %v5676 = vpop.f32.mrb[0].mxu0
  %5677 = vmatprep.mubr.f32.mxu0 0.0
  %5678 = vmatmul.mubr.f32.gmra.mrb[0].mxu0 %v586
  %v5679 = vpop.f32.mrb[0].mxu0
  %v5680 = vadd.f32 0.0, %v5679
  %v5681 = vpop.f32.mrb[0].mxu0
  %5682 = vmatprep.mubr.f32.mxu0 0.0
  %5683 = vmatmul.mubr.f32.gmra.mrb[0].mxu0 %v589
  %v5684 = vpop.f32.mrb[0].mxu0
  %v5685 = vadd.f32 0.0, %v5684
  %v5686 = vpop.f32.mrb[0].mxu0
  %5687 = vmatprep.mubr.f32.mxu0 0.0
  %5688 = vmatmul.mubr.f32.gmra.mrb[0].mxu0 %v592
  %v5689 = vpop.f32.mrb[0].mxu0
  %v5690 = vadd.f32 0.0, %v5689
  %v5691 = vpop.f32.mrb[0].mxu0
  %5692 = vdwg.mxu0
  %v5693 = vmax.f32 %v5670, 0.0
  %v5694 = vmax.f32 %v5675, 0.0
  %v5695 = vmax.f32 %v5680, 0.0
  %v5696 = vmax.f32 %v5685, 0.0
  %v5697 = vmax.f32 %v5690, 0.0
  %v5699 = vsel %vm479, %v5697, 0
  %5701 = vmatprep.subr.mxu0 0.0
  %5702 = vmatpush1.msra.mxu0 %v5693
  %5703 = vmatprep.subr.mxu0 0.0
  %5704 = vmatpush1.msra.mxu0 %v5694
  %5705 = vmatprep.subr.mxu0 0.0
  %5706 = vmatpush1.msra.mxu0 %v5695
  %5707 = vmatprep.subr.mxu0 0.0
  %5708 = vmatpush1.msra.mxu0 %v5696
  %5709 = vmatprep.subr.mxu0 0.0
  %5710 = vmatpush1.msra.mxu0 %v5699
  %5711 = vmatprep.subr.mxu0 0.0
  %5712 = vmatpush1.msra.mxu0 0.0
  %5713 = vmatprep.subr.mxu0 0.0
  %5714 = vmatpush1.msra.mxu0 0.0
  %5715 = vmatprep.subr.mxu0 0.0
  %5716 = vmatpush1.msra.mxu0 0.0
  %5717 = vmatprep.subr.mxu0 0.0
  %5718 = vmatpush1.msra.mxu0 0.0
  %5719 = vmatprep.subr.mxu0 0.0
  %5720 = vmatpush1.msra.mxu0 0.0
  %5721 = vmatprep.subr.mxu0 0.0
  %5722 = vmatpush1.msra.mxu0 0.0
  %5723 = vmatprep.subr.mxu0 0.0
  %5724 = vmatpush1.msra.mxu0 0.0
  %5725 = vmatprep.subr.mxu0 0.0
  %5726 = vmatpush1.msra.mxu0 0.0
  %5727 = vmatprep.subr.mxu0 0.0
  %5728 = vmatpush1.msra.mxu0 0.0
  %5729 = vmatprep.subr.mxu0 0.0
  %5730 = vmatpush1.msra.mxu0 0.0
  %5731 = vmatprep.subr.mxu0 0.0
  %5732 = vmatpush1.msra.mxu0 0.0
  %5733 = vmatprep.subr.mxu0 0.0
  %5734 = vmatpush1.msra.mxu0 0.0
  %5735 = vmatprep.subr.mxu0 0.0
  %5736 = vmatpush1.msra.mxu0 0.0
  %5737 = vmatprep.subr.mxu0 0.0
  %5738 = vmatpush1.msra.mxu0 0.0
  %5739 = vmatprep.subr.mxu0 0.0
  %5740 = vmatpush1.msra.mxu0 0.0
  %5741 = vmatprep.subr.mxu0 0.0
  %5742 = vmatpush1.msra.mxu0 0.0
  %5743 = vmatprep.subr.mxu0 0.0
  %5744 = vmatpush1.msra.mxu0 0.0
  %5745 = vmatprep.subr.mxu0 0.0
  %5746 = vmatpush1.msra.mxu0 0.0
  %5747 = vmatprep.subr.mxu0 0.0
  %5748 = vmatpush1.msra.mxu0 0.0
  %5749 = vmatprep.subr.mxu0 0.0
  %5750 = vmatpush1.msra.mxu0 0.0
  %5751 = vmatprep.subr.mxu0 0.0
  %5752 = vmatpush1.msra.mxu0 0.0
  %5753 = vmatprep.subr.mxu0 0.0
  %5754 = vmatpush1.msra.mxu0 0.0
  %5755 = vmatprep.subr.mxu0 0.0
  %5756 = vmatpush1.msra.mxu0 0.0
  %5757 = vmatprep.subr.mxu0 0.0
  %5758 = vmatpush1.msra.mxu0 0.0
  %5759 = vmatprep.subr.mxu0 0.0
  %5760 = vmatpush1.msra.mxu0 0.0
  %5761 = vmatprep.subr.mxu0 0.0
  %5762 = vmatpush1.msra.mxu0 0.0
  %5763 = vmatprep.subr.mxu0 0.0
  %5764 = vmatpush1.msra.mxu0 0.0
  %5765 = vmatprep.mubr.f32.mxu0 0.0
  %5766 = vmatmul.mubr.f32.gmra.mrb[0].mxu0 %v693
  %v5767 = vpop.f32.mrb[0].mxu0
  %v5768 = vadd.f32 0.0, %v5767
  %v5769 = vpop.f32.mrb[0].mxu0
  %5770 = vdwg.mxu0
  %v5771 = vmax.f32 %v5768, 0.0
  %v5772 = vxor.u32 %v5768, 2147483648
  %v5773 = vmul.f32 %v5772, 1.442695
  %v5774 = vpow.pop %v5773
  %v5775 = vadd.f32 %v5774, 1.0
  %v5776 = vrcp.pop %v5775
  %v5777 = vmul.f32 1.0, %v5776
  %v5778 = vmul.f32 %v5771, 1e+10
  %v5779 = vsub.f32 0.0, %v5778
  %v5780 = vmul.f32 %v5779, 1.442695
  %v5781 = vpow.pop %v5780
  %v5782 = vsub.f32 1.0, %v5781
  %v5783 = vmul.f32 %v5077, %v5782
  %v5784 = vlaneseq
  %v5785 = vshrl.u32 %v5784, 7
  %v5786 = vsub.s32 0, %v5785
  %v5787 = vrot.slane %v5783, %v5786
  %v5788 = vmul.f32 %v5787, %v5777
  %v5789 = vadd.f32 %v5074, %v5788
  %v5790 = vmul.f32 %v5783, 4.0
  %v5791 = vadd.f32 %v5076, %v5790
  %5792 = vst [vmem:[%s5 - $0x1] sm:$0xe] %v5789
  %5793 = vst [vmem:[%s5 + $0x3] sm:$0x1] %v5791
  // Predicated region
  $region22: #{nerf_forward.1} parent=0 // pred_check
    _
  $region23: #{nerf_forward.1} parent=0 // pred_check_branch
    %5795 = sbr.rel (0) target = $region25
  $region24: #{nerf_forward.1} parent=0 // pred_region
    _
  $region25: #{nerf_forward.1} parent=0 // pred_fallthru
    _
  // Predicated region
  $region26: #{nerf_forward.1} parent=0 // pred_check
    _
  $region27: #{nerf_forward.1} parent=0 // pred_check_branch
    %5797 = sbr.rel (0) target = $region29
  $region28: #{nerf_forward.1} parent=0 // pred_region
    _
  $region29: #{nerf_forward.1} parent=0 // pred_fallthru
    _

</llo_original>
